<compile_context>
chip_gen: v6e
topology: v6e:2x2x1
jax: 0.10.0
libtpu: 0.0.40
codegen_flags: <defaults>
</compile_context>

<pallas_src>
import functools

import jax
import jax.numpy as jnp
from jax import lax
from jax.experimental import pallas as pl
from jax.experimental.pallas import tpu as pltpu

EPS = 1e-5


# ----------------------------------------------------------------------------
# helpers
# ----------------------------------------------------------------------------
def _perm_ifog(w):
    """Reorder last axis from PyTorch LSTM gate order (i,f,g,o) to (i,f,o,g)."""
    Hh = w.shape[-1] // 4
    return jnp.concatenate(
        [w[..., :2 * Hh], w[..., 3 * Hh:], w[..., 2 * Hh:3 * Hh]], axis=-1)


def _ln_ref(x, g, b):
    m = jnp.mean(x, -1, keepdims=True)
    xc = x - m
    v = jnp.mean(xc * xc, -1, keepdims=True)
    return xc * lax.rsqrt(v + EPS) * g + b


# ----------------------------------------------------------------------------
# Kernel A: Conv1d(patch-matmul) + PReLU + LayerNorm(Ck) + intra-LSTM input
#           projection (fwd|rev concatenated)  ->  [rows, 8H] (lane dense)
# ----------------------------------------------------------------------------
def _conv_ln_proj_kernel(x_ref, wc_ref, bc_ref, a_ref, g_ref, b_ref,
                         wp_ref, bp_ref, o_ref):
    y = jnp.dot(x_ref[...], wc_ref[...],
                preferred_element_type=jnp.float32) + bc_ref[...]
    y = jnp.where(y >= 0.0, y, a_ref[...] * y)                      # PReLU
    mu = jnp.mean(y, axis=-1, keepdims=True)
    yc = y - mu
    var = jnp.mean(yc * yc, axis=-1, keepdims=True)
    ln = yc * lax.rsqrt(var + EPS) * g_ref[...] + b_ref[...]
    o_ref[...] = (jnp.dot(ln, wp_ref[...], preferred_element_type=jnp.float32)
                  + bp_ref[...]).astype(o_ref.dtype)


def conv_ln_proj_pallas(x, wc, bc, alpha, gamma, beta, wp, bp, block_m=512):
    M, KC = x.shape
    Ck = wc.shape[1]
    G = wp.shape[1]
    bm = min(block_m, M)
    return pl.pallas_call(
        _conv_ln_proj_kernel,
        out_shape=jax.ShapeDtypeStruct((M, G), jnp.float32),
        grid=(pl.cdiv(M, bm),),
        in_specs=[
            pl.BlockSpec((bm, KC), lambda i: (i, 0)),
            pl.BlockSpec((KC, Ck), lambda i: (0, 0)),
            pl.BlockSpec((1, Ck), lambda i: (0, 0)),
            pl.BlockSpec((1, Ck), lambda i: (0, 0)),
            pl.BlockSpec((1, Ck), lambda i: (0, 0)),
            pl.BlockSpec((1, Ck), lambda i: (0, 0)),
            pl.BlockSpec((Ck, G), lambda i: (0, 0)),
            pl.BlockSpec((1, G), lambda i: (0, 0)),
        ],
        out_specs=pl.BlockSpec((bm, G), lambda i: (i, 0)),
        compiler_params=pltpu.CompilerParams(
            dimension_semantics=("parallel",)),
    )(x, wc, bc, alpha, gamma, beta, wp, bp)


# ----------------------------------------------------------------------------
# Kernel B: fused bidirectional LSTM (input projection precomputed).
#   gx: [L, N, 8H]  (cols = [fwd i,f,o,g | rev i,f,o,g]), whh: block-diag [2H, 8H]
# ----------------------------------------------------------------------------
def _bilstm_kernel(gx_ref, whh_ref, yf_ref, yr_ref, h_scr, c_scr):
    L, _, G8 = gx_ref.shape
    Hh = G8 // 8
    G4 = 4 * Hh
    h_scr[...] = jnp.zeros_like(h_scr)
    c_scr[...] = jnp.zeros_like(c_scr)
    whh = whh_ref[...]                      # hoisted: loaded once

    def do_step(s):
        s_rev = L - 1 - s
        gx_f = gx_ref[s]                    # [N, 8H]
        gx_r = gx_ref[s_rev]
        h = h_scr[...]                      # [N, 2H] = [fwd | rev]
        c = c_scr[...]
        rec = jnp.dot(h, whh, preferred_element_type=jnp.float32)   # [N, 8H]
        g_f = gx_f[:, :G4] + rec[:, :G4]
        g_r = gx_r[:, G4:] + rec[:, G4:]
        # gate layout per direction: [i | f | o | g]
        sg_f = jax.nn.sigmoid(g_f[:, :3 * Hh])
        tg_f = jnp.tanh(g_f[:, 3 * Hh:])
        c_f = sg_f[:, Hh:2 * Hh] * c[:, :Hh] + sg_f[:, :Hh] * tg_f
        h_f = sg_f[:, 2 * Hh:] * jnp.tanh(c_f)
        sg_r = jax.nn.sigmoid(g_r[:, :3 * Hh])
        tg_r = jnp.tanh(g_r[:, 3 * Hh:])
        c_r = sg_r[:, Hh:2 * Hh] * c[:, Hh:] + sg_r[:, :Hh] * tg_r
        h_r = sg_r[:, 2 * Hh:] * jnp.tanh(c_r)
        h_scr[...] = jnp.concatenate([h_f, h_r], axis=-1)
        c_scr[...] = jnp.concatenate([c_f, c_r], axis=-1)
        yf_ref[s] = h_f
        yr_ref[s_rev] = h_r

    def step2(i, carry):                    # manual 2x unroll
        do_step(2 * i)
        do_step(2 * i + 1)
        return carry

    lax.fori_loop(0, L // 2, step2, 0)
    if L % 2:
        do_step(L - 1)


def bilstm_pallas(gx_seq, whh_blk, hidden):
    L, N, G8 = gx_seq.shape
    vspec = pl.BlockSpec(memory_space=pltpu.MemorySpace.VMEM)
    need = 4 * (gx_seq.size + whh_blk.size + 2 * L * N * hidden + 4 * N * hidden)
    limit = int(min(100 * 2**20, 16 * 2**20 + 2 * need))
    return pl.pallas_call(
        _bilstm_kernel,
        out_shape=(jax.ShapeDtypeStruct((L, N, hidden), jnp.float32),
                   jax.ShapeDtypeStruct((L, N, hidden), jnp.float32)),
        in_specs=[vspec, vspec],
        out_specs=(vspec, vspec),
        scratch_shapes=[pltpu.VMEM((N, 2 * hidden), jnp.float32),
                        pltpu.VMEM((N, 2 * hidden), jnp.float32)],
        compiler_params=pltpu.CompilerParams(vmem_limit_bytes=limit),
    )(gx_seq, whh_blk)


# ----------------------------------------------------------------------------
# Kernel C: ConvTranspose1d (as matmul) + residual(x) + inter LayerNorm(C)
#           + inter-LSTM input projection.  Outputs intra rows and gate rows.
# ----------------------------------------------------------------------------
def _deconv_res_ln_proj_kernel(yf_ref, yr_ref, x_ref, wdf_ref, wdr_ref, bd_ref,
                               ing_ref, inb_ref, wp_ref, bp_ref,
                               intra_ref, gates_ref):
    d = (jnp.dot(yf_ref[...], wdf_ref[...], preferred_element_type=jnp.float32)
         + jnp.dot(yr_ref[...], wdr_ref[...], preferred_element_type=jnp.float32)
         + bd_ref[...])
    intra = d + x_ref[...]
    intra_ref[...] = intra.astype(intra_ref.dtype)

    C = ing_ref.shape[-1]
    k = x_ref.shape[-1] // C
    G4 = wp_ref.shape[-1]
    gam = ing_ref[...]
    bet = inb_ref[...]
    wp = wp_ref[...]
    bp = bp_ref[...]
    for j in range(k):                      # static unroll over the k freq bins
        seg = intra[:, j * C:(j + 1) * C]
        mu = jnp.mean(seg, axis=-1, keepdims=True)
        sc = seg - mu
        var = jnp.mean(sc * sc, axis=-1, keepdims=True)
        ln = sc * lax.rsqrt(var + EPS) * gam + bet
        gates_ref[:, j * G4:(j + 1) * G4] = (
            jnp.dot(ln, wp, preferred_element_type=jnp.float32) + bp
        ).astype(gates_ref.dtype)


def deconv_res_ln_proj_pallas(yf, yr, x_rows, wdf, wdr, bd,
                              ing, inb, wp, bp, block_m=512):
    M, Hh = yf.shape
    KC = x_rows.shape[1]
    C = ing.shape[1]
    k = KC // C
    G4 = wp.shape[1]
    bm = min(block_m, M)
    return pl.pallas_call(
        _deconv_res_ln_proj_kernel,
        out_shape=(jax.ShapeDtypeStruct((M, KC), jnp.float32),
                   jax.ShapeDtypeStruct((M, k * G4), jnp.float32)),
        grid=(pl.cdiv(M, bm),),
        in_specs=[
            pl.BlockSpec((bm, Hh), lambda i: (i, 0)),
            pl.BlockSpec((bm, Hh), lambda i: (i, 0)),
            pl.BlockSpec((bm, KC), lambda i: (i, 0)),
            pl.BlockSpec((Hh, KC), lambda i: (0, 0)),
            pl.BlockSpec((Hh, KC), lambda i: (0, 0)),
            pl.BlockSpec((1, KC), lambda i: (0, 0)),
            pl.BlockSpec((1, C), lambda i: (0, 0)),
            pl.BlockSpec((1, C), lambda i: (0, 0)),
            pl.BlockSpec((C, G4), lambda i: (0, 0)),
            pl.BlockSpec((1, G4), lambda i: (0, 0)),
        ],
        out_specs=(pl.BlockSpec((bm, KC), lambda i: (i, 0)),
                   pl.BlockSpec((bm, k * G4), lambda i: (i, 0))),
        compiler_params=pltpu.CompilerParams(
            dimension_semantics=("parallel",)),
    )(yf, yr, x_rows, wdf, wdr, bd, ing, inb, wp, bp)


# ----------------------------------------------------------------------------
# Kernel D: unidirectional inter LSTM with state (input projection precomputed)
# ----------------------------------------------------------------------------
def _lstm_kernel(gx_ref, whh_ref, h0_ref, c0_ref,
                 y_ref, hT_ref, cT_ref, h_scr, c_scr):
    L, _, G4 = gx_ref.shape
    Hh = G4 // 4
    h_scr[...] = h0_ref[...]
    c_scr[...] = c0_ref[...]
    whh = whh_ref[...]                      # hoisted out of the loop

    def do_step(t):
        h = h_scr[...]
        c = c_scr[...]
        g = gx_ref[t] + jnp.dot(h, whh, preferred_element_type=jnp.float32)
        sg = jax.nn.sigmoid(g[:, :3 * Hh])          # [i | f | o]
        tg = jnp.tanh(g[:, 3 * Hh:])                # [g]
        c_new = sg[:, Hh:2 * Hh] * c + sg[:, :Hh] * tg
        h_new = sg[:, 2 * Hh:] * jnp.tanh(c_new)
        h_scr[...] = h_new
        c_scr[...] = c_new
        y_ref[t] = h_new

    def step2(i, carry):                    # manual 2x unroll
        do_step(2 * i)
        do_step(2 * i + 1)
        return carry

    lax.fori_loop(0, L // 2, step2, 0)
    if L % 2:
        do_step(L - 1)
    hT_ref[...] = h_scr[...]
    cT_ref[...] = c_scr[...]


def lstm_pallas(gx_seq, whh, h0, c0):
    L, N, _ = gx_seq.shape
    Hh = h0.shape[-1]
    vspec = pl.BlockSpec(memory_space=pltpu.MemorySpace.VMEM)
    need = 4 * (gx_seq.size + whh.size + L * N * Hh + 6 * N * Hh)
    limit = int(min(100 * 2**20, 16 * 2**20 + 2 * need))
    return pl.pallas_call(
        _lstm_kernel,
        out_shape=(jax.ShapeDtypeStruct((L, N, Hh), jnp.float32),
                   jax.ShapeDtypeStruct((N, Hh), jnp.float32),
                   jax.ShapeDtypeStruct((N, Hh), jnp.float32)),
        in_specs=[vspec] * 4,
        out_specs=(vspec, vspec, vspec),
        scratch_shapes=[pltpu.VMEM((N, Hh), jnp.float32),
                        pltpu.VMEM((N, Hh), jnp.float32)],
        compiler_params=pltpu.CompilerParams(vmem_limit_bytes=limit),
    )(gx_seq, whh, h0, c0)


# ----------------------------------------------------------------------------
# Kernel E: inter Linear(H->C) + residual add with intra (no output transpose)
# ----------------------------------------------------------------------------
def _linear_residual_kernel(y_ref, r_ref, w_ref, b_ref, o_ref):
    # y: [T, 1, Q, H]   r/o: [1, T, Q, C]
    T = y_ref.shape[0]
    w = w_ref[...]
    b = b_ref[...]
    for t in range(T):                      # static unroll (small T per block)
        yt = y_ref[t, 0]                    # [Q, H]
        lin = jnp.dot(yt, w, preferred_element_type=jnp.float32) + b
        o_ref[0, t] = (lin + r_ref[0, t]).astype(o_ref.dtype)


def linear_residual_pallas(y4, intra, w, b):
    T, B, Q, Hh = y4.shape
    C = w.shape[1]
    return pl.pallas_call(
        _linear_residual_kernel,
        out_shape=jax.ShapeDtypeStruct((B, T, Q, C), jnp.float32),
        grid=(B,),
        in_specs=[
            pl.BlockSpec((T, 1, Q, Hh), lambda i: (0, i, 0, 0)),
            pl.BlockSpec((1, T, Q, C), lambda i: (i, 0, 0, 0)),
            pl.BlockSpec((Hh, C), lambda i: (0, 0)),
            pl.BlockSpec((1, C), lambda i: (0, 0)),
        ],
        out_specs=pl.BlockSpec((1, T, Q, C), lambda i: (i, 0, 0, 0)),
        compiler_params=pltpu.CompilerParams(
            dimension_semantics=("parallel",)),
    )(y4, intra, w, b)


# ----------------------------------------------------------------------------
# GridNetBlock forward (conv_lstm=True, unidirectional inter RNN), Pallas path
# ----------------------------------------------------------------------------
def gridnet_block_forward_pallas(params, x, h0, c0, *, lstm_down, hidden):
    B, T, Q, C = x.shape
    k = lstm_down
    H = hidden
    Qp = Q // k
    Ck = C * k
    M1 = B * T * Qp

    # ---- host-side weight re-layouts (traced constants under jit) ----
    wconv = params['conv_w'].transpose(2, 1, 0).reshape(k * C, Ck)
    alpha_row = jnp.full((1, Ck), params['prelu_a'], jnp.float32)

    wih_f = _perm_ifog(params['intra_fwd_wih'].T)                # [Ck, 4H]
    wih_r = _perm_ifog(params['intra_rev_wih'].T)
    w_ih_cat = jnp.concatenate([wih_f, wih_r], axis=1)           # [Ck, 8H]
    b_f = _perm_ifog((params['intra_fwd_bih'] + params['intra_fwd_bhh'])[None, :])
    b_r = _perm_ifog((params['intra_rev_bih'] + params['intra_rev_bhh'])[None, :])
    b_cat = jnp.concatenate([b_f, b_r], axis=1)                  # [1, 8H]
    whh_f = _perm_ifog(params['intra_fwd_whh'].T)                # [H, 4H]
    whh_r = _perm_ifog(params['intra_rev_whh'].T)
    zero = jnp.zeros((H, 4 * H), jnp.float32)
    whh_blk = jnp.concatenate(
        [jnp.concatenate([whh_f, zero], axis=1),
         jnp.concatenate([zero, whh_r], axis=1)], axis=0)        # [2H, 8H]

    wd = params['deconv_w'].transpose(0, 2, 1).reshape(2 * H, k * C)
    wdf, wdr = wd[:H], wd[H:]
    bd = jnp.tile(params['deconv_b'], k)[None, :]                # [1, kC]

    wp_inter = _perm_ifog(params['inter_wih'].T)                 # [C, 4H]
    bp_inter = _perm_ifog(
        (params['inter_bih'] + params['inter_bhh'])[None, :])    # [1, 4H]
    whh_inter = _perm_ifog(params['inter_whh'].T)                # [H, 4H]

    # ---- intra path ----
    patches = x[:, :, :Qp * k, :].reshape(M1, k * C)
    gx = conv_ln_proj_pallas(patches, wconv, params['conv_b'][None, :],
                             alpha_row, params['norm_g'][None, :],
                             params['norm_b'][None, :], w_ih_cat, b_cat)
    gx_seq = gx.reshape(B * T, Qp, 8 * H).transpose(1, 0, 2)     # [Qp, BT, 8H]
    y_f, y_r = bilstm_pallas(gx_seq, whh_blk, H)                 # [Qp, BT, H] x2

    yf_rows = y_f.transpose(1, 0, 2).reshape(M1, H)
    yr_rows = y_r.transpose(1, 0, 2).reshape(M1, H)
    intra_rows, gates2 = deconv_res_ln_proj_pallas(
        yf_rows, yr_rows, patches, wdf, wdr, bd,
        params['inorm_g'][None, :], params['inorm_b'][None, :],
        wp_inter, bp_inter)
    intra = intra_rows.reshape(B, T, Qp * k, C)
    g2 = gates2.reshape(B, T, Qp * k, 4 * H)
    if Qp * k < Q:
        # ConvTranspose1d output_padding positions receive only the bias.
        tail_x = x[:, :, Qp * k:, :]
        tail_intra = tail_x + params['deconv_b']
        intra = jnp.concatenate([intra, tail_intra], axis=2)
        t_ln = _ln_ref(tail_intra.reshape(-1, C),
                       params['inorm_g'], params['inorm_b'])
        t_g = jnp.dot(t_ln, wp_inter) + bp_inter
        g2 = jnp.concatenate(
            [g2, t_g.reshape(B, T, Q - Qp * k, 4 * H)], axis=2)

    # ---- inter path ----
    gx2_seq = g2.transpose(1, 0, 2, 3).reshape(T, B * Q, 4 * H)  # [T, BQ, 4H]
    y_i, hT, cT = lstm_pallas(gx2_seq, whh_inter,
                              h0.reshape(B * Q, H), c0.reshape(B * Q, H))
    out = linear_residual_pallas(y_i.reshape(T, B, Q, H), intra,
                                 params['inter_lin_w'].T,
                                 params['inter_lin_b'][None, :])
    new_state = {'h0': hT.reshape(1, B * Q, H), 'c0': cT.reshape(1, B * Q, H)}
    return out, new_state


# ----------------------------------------------------------------------------
# Pure-JAX reference of the same module math (high-precision matmuls)
# ----------------------------------------------------------------------------
def _lstm_ref(x_seq, w_ih_t, w_hh_t, bias, h0, c0, prec):
    Hh = h0.shape[-1]

    def step(carry, x_t):
        h, c = carry
        g = (jnp.dot(x_t, w_ih_t, precision=prec)
             + jnp.dot(h, w_hh_t, precision=prec) + bias)
        i = jax.nn.sigmoid(g[:, :Hh])
        f = jax.nn.sigmoid(g[:, Hh:2 * Hh])
        gg = jnp.tanh(g[:, 2 * Hh:3 * Hh])
        o = jax.nn.sigmoid(g[:, 3 * Hh:])
        c = f * c + i * gg
        h = o * jnp.tanh(c)
        return (h, c), h

    (hT, cT), ys = lax.scan(step, (h0, c0), x_seq)
    return ys, hT, cT


def reference_forward(params, x, h0, c0, *, k, H):
    B, T, Q, C = x.shape
    Qp = Q // k
    Ck = C * k
    hp = lax.Precision.HIGHEST

    xs = x[:, :, :Qp * k, :].reshape(B * T * Qp, k * C)
    wconv = params['conv_w'].transpose(2, 1, 0).reshape(k * C, Ck)
    y = jnp.dot(xs, wconv, precision=hp) + params['conv_b']
    y = jnp.where(y >= 0.0, y, params['prelu_a'] * y)
    y = _ln_ref(y, params['norm_g'], params['norm_b'])

    seq = y.reshape(B * T, Qp, Ck).transpose(1, 0, 2)            # [Qp, BT, Ck]
    z = jnp.zeros((B * T, H), jnp.float32)
    yf, _, _ = _lstm_ref(seq, params['intra_fwd_wih'].T, params['intra_fwd_whh'].T,
                         params['intra_fwd_bih'] + params['intra_fwd_bhh'], z, z, hp)
    yr, _, _ = _lstm_ref(seq[::-1], params['intra_rev_wih'].T, params['intra_rev_whh'].T,
                         params['intra_rev_bih'] + params['intra_rev_bhh'], z, z, hp)
    ybi = jnp.concatenate([yf, yr[::-1]], axis=-1)               # [Qp, BT, 2H]

    wd = params['deconv_w'].transpose(0, 2, 1).reshape(2 * H, k * C)
    d = (jnp.dot(ybi.transpose(1, 0, 2).reshape(B * T * Qp, 2 * H), wd, precision=hp)
         + jnp.tile(params['deconv_b'], k))
    d = d.reshape(B, T, Qp * k, C)
    if Qp * k < Q:
        pad = jnp.broadcast_to(params['deconv_b'], (B, T, Q - Qp * k, C))
        d = jnp.concatenate([d, pad], axis=2)
    intra = d + x

    ln2 = _ln_ref(intra.reshape(-1, C), params['inorm_g'],
                  params['inorm_b']).reshape(B, T, Q, C)
    seq2 = ln2.transpose(0, 2, 1, 3).reshape(B * Q, T, C).transpose(1, 0, 2)
    yi, hT, cT = _lstm_ref(seq2, params['inter_wih'].T, params['inter_whh'].T,
                           params['inter_bih'] + params['inter_bhh'],
                           h0.reshape(B * Q, H), c0.reshape(B * Q, H), hp)
    lin = (jnp.dot(yi.reshape(T * B * Q, H), params['inter_lin_w'].T, precision=hp)
           + params['inter_lin_b'])
    lin = lin.reshape(T, B, Q, C).transpose(1, 0, 2, 3)
    out = lin + intra
    return out, hT.reshape(1, B * Q, H), cT.reshape(1, B * Q, H)


# ----------------------------------------------------------------------------
# Deterministic parameter init (matches shapes declared in __init__)
# ----------------------------------------------------------------------------
def init_params(key, C, H, k):
    Ck = C * k
    ks = iter(jax.random.split(key, 24))

    def u(shape, scale):
        return jax.random.uniform(next(ks), shape, jnp.float32, -scale, scale)

    s = 1.0 / float(H) ** 0.5
    p = {
        'conv_w': u((Ck, C, k), 0.3),        # Conv1d weight [out, in, k]
        'conv_b': u((Ck,), 0.1),
        'prelu_a': jnp.float32(0.25),        # PReLU default init
        'norm_g': 1.0 + u((Ck,), 0.1),       # LayerNorm(C*k)
        'norm_b': u((Ck,), 0.1),
        'deconv_w': u((2 * H, C, k), 0.2),   # ConvTranspose1d weight [in, out, k]
        'deconv_b': u((C,), 0.1),
        'inorm_g': 1.0 + u((C,), 0.1),       # inter LayerNorm(C)
        'inorm_b': u((C,), 0.1),
        'inter_lin_w': u((C, H), s),         # Linear(H -> C)
        'inter_lin_b': u((C,), s),
    }
    for name, D in (('intra_fwd', Ck), ('intra_rev', Ck), ('inter', C)):
        p[f'{name}_wih'] = u((4 * H, D), s)
        p[f'{name}_whh'] = u((4 * H, H), s)
        p[f'{name}_bih'] = u((4 * H,), s)
        p[f'{name}_bhh'] = u((4 * H,), s)
    return p


if __name__ == "__main__":
    # Small shapes: emb_dim=16, n_freqs=16, hidden_channels=32, lstm_down=4
    B, T, Q, C = 2, 8, 16, 16
    H = 32
    k = 4

    key = jax.random.PRNGKey(0)
    kx, kh, kc, kp = jax.random.split(key, 4)
    x = jax.random.normal(kx, (B, T, Q, C), jnp.float32)
    h0 = 0.1 * jax.random.normal(kh, (1, B * Q, H), jnp.float32)
    c0 = 0.1 * jax.random.normal(kc, (1, B * Q, H), jnp.float32)
    params = init_params(kp, C, H, k)

    fwd = jax.jit(functools.partial(gridnet_block_forward_pallas,
                                    lstm_down=k, hidden=H))
    out, state = fwd(params, x, h0, c0)
    jax.block_until_ready((out, state))

    # Numerical check against a pure-JAX high-precision reference.
    out_r, h_r, c_r = reference_forward(params, x, h0, c0, k=k, H=H)
    assert out.shape == (B, T, Q, C)
    assert state['h0'].shape == (1, B * Q, H)
    assert state['c0'].shape == (1, B * Q, H)
    assert jnp.max(jnp.abs(out - out_r)) < 2e-3
    assert jnp.max(jnp.abs(state['h0'] - h_r)) < 2e-3
    assert jnp.max(jnp.abs(state['c0'] - c_r)) < 2e-3

    print("KERNEL_OK")
</pallas_src>

<mosaic_0001>
module attributes {stable_mosaic.version = 11 : i64} {
  func.func @_conv_ln_proj_kernel(%arg0: i32, %arg1: memref<64x64xf32, #tpu.memory_space<vmem>>, %arg2: memref<64x64xf32, #tpu.memory_space<vmem>>, %arg3: memref<1x64xf32, #tpu.memory_space<vmem>>, %arg4: memref<1x64xf32, #tpu.memory_space<vmem>>, %arg5: memref<1x64xf32, #tpu.memory_space<vmem>>, %arg6: memref<1x64xf32, #tpu.memory_space<vmem>>, %arg7: memref<64x256xf32, #tpu.memory_space<vmem>>, %arg8: memref<1x256xf32, #tpu.memory_space<vmem>>, %arg9: memref<64x256xf32, #tpu.memory_space<vmem>>) attributes {dimension_semantics = [#tpu.dimension_semantics<parallel>], iteration_bounds = array<i64: 1>, scalar_prefetch = 0 : i64, scratch_operands = 0 : i64, tpu.core_type = #tpu.core_type<tc>, window_params = [{transform_indices = @transform_0, window_bounds = array<i64: 64, 64>}, {pipeline_mode = #tpu.pipeline_mode<synchronous>, transform_indices = @transform_1, window_bounds = array<i64: 64, 64>}, {pipeline_mode = #tpu.pipeline_mode<synchronous>, transform_indices = @transform_2, window_bounds = array<i64: 1, 64>}, {pipeline_mode = #tpu.pipeline_mode<synchronous>, transform_indices = @transform_3, window_bounds = array<i64: 1, 64>}, {pipeline_mode = #tpu.pipeline_mode<synchronous>, transform_indices = @transform_4, window_bounds = array<i64: 1, 64>}, {pipeline_mode = #tpu.pipeline_mode<synchronous>, transform_indices = @transform_5, window_bounds = array<i64: 1, 64>}, {pipeline_mode = #tpu.pipeline_mode<synchronous>, transform_indices = @transform_6, window_bounds = array<i64: 64, 256>}, {pipeline_mode = #tpu.pipeline_mode<synchronous>, transform_indices = @transform_7, window_bounds = array<i64: 1, 256>}, {transform_indices = @transform_8, window_bounds = array<i64: 64, 256>}]} {
    %c0 = arith.constant 0 : index
    %c0_0 = arith.constant 0 : index
    %0 = vector.load %arg1[%c0, %c0_0] : memref<64x64xf32, #tpu.memory_space<vmem>>, vector<64x64xf32>
    %c0_1 = arith.constant 0 : index
    %c0_2 = arith.constant 0 : index
    %1 = vector.load %arg2[%c0_1, %c0_2] : memref<64x64xf32, #tpu.memory_space<vmem>>, vector<64x64xf32>
    %cst = arith.constant dense<0.000000e+00> : vector<64x64xf32>
    %2 = tpu.matmul %0, %1, %cst {dimension_numbers = #tpu.dot_dimension_numbers<[1], [0], [0], [1], [0, 0, 1, 1], [], []>} : vector<64x64xf32>, vector<64x64xf32>, vector<64x64xf32> -> vector<64x64xf32>
    %c0_3 = arith.constant 0 : index
    %c0_4 = arith.constant 0 : index
    %3 = vector.load %arg3[%c0_3, %c0_4] : memref<1x64xf32, #tpu.memory_space<vmem>>, vector<1x64xf32>
    %4 = vector.broadcast %3 : vector<1x64xf32> to vector<64x64xf32>
    %5 = arith.addf %2, %4 : vector<64x64xf32>
    %cst_5 = arith.constant 0.000000e+00 : f32
    %6 = vector.broadcast %cst_5 : f32 to vector<64x64xf32>
    %7 = arith.cmpf oge, %5, %6 : vector<64x64xf32>
    %c0_6 = arith.constant 0 : index
    %c0_7 = arith.constant 0 : index
    %8 = vector.load %arg4[%c0_6, %c0_7] : memref<1x64xf32, #tpu.memory_space<vmem>>, vector<1x64xf32>
    %9 = vector.broadcast %8 : vector<1x64xf32> to vector<64x64xf32>
    %10 = arith.mulf %9, %5 : vector<64x64xf32>
    %11 = arith.select %7, %5, %10 : vector<64x64xi1>, vector<64x64xf32>
    %cst_8 = arith.constant dense<0.000000e+00> : vector<64xf32>
    %12 = vector.multi_reduction <add>, %11, %cst_8 [1] : vector<64x64xf32> to vector<64xf32>
    %13 = vector.shape_cast %12 : vector<64xf32> to vector<64x1xf32>
    %cst_9 = arith.constant 6.400000e+01 : f32
    %14 = vector.broadcast %cst_9 : f32 to vector<64x1xf32>
    %15 = arith.divf %13, %14 : vector<64x1xf32>
    %16 = vector.broadcast %15 : vector<64x1xf32> to vector<64x64xf32>
    %17 = arith.subf %11, %16 : vector<64x64xf32>
    %18 = arith.mulf %17, %17 : vector<64x64xf32>
    %cst_10 = arith.constant dense<0.000000e+00> : vector<64xf32>
    %19 = vector.multi_reduction <add>, %18, %cst_10 [1] : vector<64x64xf32> to vector<64xf32>
    %20 = vector.shape_cast %19 : vector<64xf32> to vector<64x1xf32>
    %cst_11 = arith.constant 6.400000e+01 : f32
    %21 = vector.broadcast %cst_11 : f32 to vector<64x1xf32>
    %22 = arith.divf %20, %21 : vector<64x1xf32>
    %cst_12 = arith.constant 9.99999974E-6 : f32
    %23 = vector.broadcast %cst_12 : f32 to vector<64x1xf32>
    %24 = arith.addf %22, %23 : vector<64x1xf32>
    %25 = math.rsqrt %24 : vector<64x1xf32>
    %26 = vector.broadcast %25 : vector<64x1xf32> to vector<64x64xf32>
    %27 = arith.mulf %17, %26 : vector<64x64xf32>
    %c0_13 = arith.constant 0 : index
    %c0_14 = arith.constant 0 : index
    %28 = vector.load %arg5[%c0_13, %c0_14] : memref<1x64xf32, #tpu.memory_space<vmem>>, vector<1x64xf32>
    %29 = vector.broadcast %28 : vector<1x64xf32> to vector<64x64xf32>
    %30 = arith.mulf %27, %29 : vector<64x64xf32>
    %c0_15 = arith.constant 0 : index
    %c0_16 = arith.constant 0 : index
    %31 = vector.load %arg6[%c0_15, %c0_16] : memref<1x64xf32, #tpu.memory_space<vmem>>, vector<1x64xf32>
    %32 = vector.broadcast %31 : vector<1x64xf32> to vector<64x64xf32>
    %33 = arith.addf %30, %32 : vector<64x64xf32>
    %c0_17 = arith.constant 0 : index
    %c0_18 = arith.constant 0 : index
    %34 = vector.load %arg7[%c0_17, %c0_18] : memref<64x256xf32, #tpu.memory_space<vmem>>, vector<64x256xf32>
    %cst_19 = arith.constant dense<0.000000e+00> : vector<64x256xf32>
    %35 = tpu.matmul %33, %34, %cst_19 {dimension_numbers = #tpu.dot_dimension_numbers<[1], [0], [0], [1], [0, 0, 1, 1], [], []>} : vector<64x64xf32>, vector<64x256xf32>, vector<64x256xf32> -> vector<64x256xf32>
    %c0_20 = arith.constant 0 : index
    %c0_21 = arith.constant 0 : index
    %36 = vector.load %arg8[%c0_20, %c0_21] : memref<1x256xf32, #tpu.memory_space<vmem>>, vector<1x256xf32>
    %37 = vector.broadcast %36 : vector<1x256xf32> to vector<64x256xf32>
    %38 = arith.addf %35, %37 : vector<64x256xf32>
    %c0_22 = arith.constant 0 : index
    %c0_23 = arith.constant 0 : index
    %39 = vector.load %arg9[%c0_22, %c0_23] : memref<64x256xf32, #tpu.memory_space<vmem>>, vector<64x256xf32>
    tpu.vector_store %arg9[%c0_22, %c0_23], %38 {strides = array<i32>} : memref<64x256xf32, #tpu.memory_space<vmem>>, vector<64x256xf32>,
    return
  }
  func.func @transform_0(%arg0: i32) -> (i32, i32) {
    %c0_i32 = arith.constant 0 : i32
    %c0_i32_0 = arith.constant 0 : i32
    return %arg0, %c0_i32 : i32, i32
  }
  func.func @transform_1(%arg0: i32) -> (i32, i32) {
    %c0_i32 = arith.constant 0 : i32
    %c0_i32_0 = arith.constant 0 : i32
    %c0_i32_1 = arith.constant 0 : i32
    return %c0_i32, %c0_i32_0 : i32, i32
  }
  func.func @transform_2(%arg0: i32) -> (i32, i32) {
    %c0_i32 = arith.constant 0 : i32
    %c0_i32_0 = arith.constant 0 : i32
    %c0_i32_1 = arith.constant 0 : i32
    return %c0_i32, %c0_i32_0 : i32, i32
  }
  func.func @transform_3(%arg0: i32) -> (i32, i32) {
    %c0_i32 = arith.constant 0 : i32
    %c0_i32_0 = arith.constant 0 : i32
    %c0_i32_1 = arith.constant 0 : i32
    return %c0_i32, %c0_i32_0 : i32, i32
  }
  func.func @transform_4(%arg0: i32) -> (i32, i32) {
    %c0_i32 = arith.constant 0 : i32
    %c0_i32_0 = arith.constant 0 : i32
    %c0_i32_1 = arith.constant 0 : i32
    return %c0_i32, %c0_i32_0 : i32, i32
  }
  func.func @transform_5(%arg0: i32) -> (i32, i32) {
    %c0_i32 = arith.constant 0 : i32
    %c0_i32_0 = arith.constant 0 : i32
    %c0_i32_1 = arith.constant 0 : i32
    return %c0_i32, %c0_i32_0 : i32, i32
  }
  func.func @transform_6(%arg0: i32) -> (i32, i32) {
    %c0_i32 = arith.constant 0 : i32
    %c0_i32_0 = arith.constant 0 : i32
    %c0_i32_1 = arith.constant 0 : i32
    return %c0_i32, %c0_i32_0 : i32, i32
  }
  func.func @transform_7(%arg0: i32) -> (i32, i32) {
    %c0_i32 = arith.constant 0 : i32
    %c0_i32_0 = arith.constant 0 : i32
    %c0_i32_1 = arith.constant 0 : i32
    return %c0_i32, %c0_i32_0 : i32, i32
  }
  func.func @transform_8(%arg0: i32) -> (i32, i32) {
    %c0_i32 = arith.constant 0 : i32
    %c0_i32_0 = arith.constant 0 : i32
    return %arg0, %c0_i32 : i32, i32
  }
}

module attributes {stable_mosaic.version = 11 : i64} {
  func.func @_bilstm_kernel(%arg0: memref<4x16x256xf32, #tpu.memory_space<vmem>>, %arg1: memref<64x256xf32, #tpu.memory_space<vmem>>, %arg2: memref<4x16x32xf32, #tpu.memory_space<vmem>>, %arg3: memref<4x16x32xf32, #tpu.memory_space<vmem>>, %arg4: memref<16x64xf32, #tpu.memory_space<vmem>>, %arg5: memref<16x64xf32, #tpu.memory_space<vmem>>) attributes {dimension_semantics = [], scalar_prefetch = 0 : i64, scratch_operands = 2 : i64, tpu.core_type = #tpu.core_type<tc>} {
    %cst = arith.constant 0.000000e+00 : f32
    %0 = vector.broadcast %cst : f32 to vector<16x64xf32>
    %c0 = arith.constant 0 : index
    %c0_0 = arith.constant 0 : index
    %1 = vector.load %arg4[%c0, %c0_0] : memref<16x64xf32, #tpu.memory_space<vmem>>, vector<16x64xf32>
    tpu.vector_store %arg4[%c0, %c0_0], %0 {strides = array<i32>} : memref<16x64xf32, #tpu.memory_space<vmem>>, vector<16x64xf32>,
    %cst_1 = arith.constant 0.000000e+00 : f32
    %2 = vector.broadcast %cst_1 : f32 to vector<16x64xf32>
    %c0_2 = arith.constant 0 : index
    %c0_3 = arith.constant 0 : index
    %3 = vector.load %arg5[%c0_2, %c0_3] : memref<16x64xf32, #tpu.memory_space<vmem>>, vector<16x64xf32>
    tpu.vector_store %arg5[%c0_2, %c0_3], %2 {strides = array<i32>} : memref<16x64xf32, #tpu.memory_space<vmem>>, vector<16x64xf32>,
    %c0_4 = arith.constant 0 : index
    %c0_5 = arith.constant 0 : index
    %4 = vector.load %arg1[%c0_4, %c0_5] : memref<64x256xf32, #tpu.memory_space<vmem>>, vector<64x256xf32>
    %c0_i32 = arith.constant 0 : i32
    %c2_i32 = arith.constant 2 : i32
    %5 = arith.addi %c0_i32, %c2_i32 : i32
    %c1_i32 = arith.constant 1 : i32
    scf.for %arg6 = %c0_i32 to %5 step %c1_i32  : i32 {
      %c2_i32_7 = arith.constant 2 : i32
      %6 = arith.muli %c2_i32_7, %arg6 : i32
      %c3_i32 = arith.constant 3 : i32
      %7 = arith.subi %c3_i32, %6 : i32
      %8 = arith.index_cast %6 : i32 to index
      %c0_8 = arith.constant 0 : index
      %c0_9 = arith.constant 0 : index
      %9 = vector.load %arg0[%8, %c0_8, %c0_9] : memref<4x16x256xf32, #tpu.memory_space<vmem>>, vector<1x16x256xf32>
      %10 = vector.shape_cast %9 : vector<1x16x256xf32> to vector<16x256xf32>
      %11 = arith.index_cast %7 : i32 to index
      %c0_10 = arith.constant 0 : index
      %c0_11 = arith.constant 0 : index
      %12 = vector.load %arg0[%11, %c0_10, %c0_11] : memref<4x16x256xf32, #tpu.memory_space<vmem>>, vector<1x16x256xf32>
      %13 = vector.shape_cast %12 : vector<1x16x256xf32> to vector<16x256xf32>
      %c0_12 = arith.constant 0 : index
      %c0_13 = arith.constant 0 : index
      %14 = vector.load %arg4[%c0_12, %c0_13] : memref<16x64xf32, #tpu.memory_space<vmem>>, vector<16x64xf32>
      %c0_14 = arith.constant 0 : index
      %c0_15 = arith.constant 0 : index
      %15 = vector.load %arg5[%c0_14, %c0_15] : memref<16x64xf32, #tpu.memory_space<vmem>>, vector<16x64xf32>
      %cst_16 = arith.constant dense<0.000000e+00> : vector<16x256xf32>
      %16 = tpu.matmul %14, %4, %cst_16 {dimension_numbers = #tpu.dot_dimension_numbers<[1], [0], [0], [1], [0, 0, 1, 1], [], []>} : vector<16x64xf32>, vector<64x256xf32>, vector<16x256xf32> -> vector<16x256xf32>
      %17 = vector.extract_strided_slice %10 {offsets = [0, 0], sizes = [16, 128], strides = [1, 1]} : vector<16x256xf32> to vector<16x128xf32>
      %18 = vector.extract_strided_slice %16 {offsets = [0, 0], sizes = [16, 128], strides = [1, 1]} : vector<16x256xf32> to vector<16x128xf32>
      %19 = arith.addf %17, %18 : vector<16x128xf32>
      %20 = vector.extract_strided_slice %13 {offsets = [0, 128], sizes = [16, 128], strides = [1, 1]} : vector<16x256xf32> to vector<16x128xf32>
      %21 = vector.extract_strided_slice %16 {offsets = [0, 128], sizes = [16, 128], strides = [1, 1]} : vector<16x256xf32> to vector<16x128xf32>
      %22 = arith.addf %20, %21 : vector<16x128xf32>
      %23 = vector.extract_strided_slice %19 {offsets = [0, 0], sizes = [16, 96], strides = [1, 1]} : vector<16x128xf32> to vector<16x96xf32>
      %24 = arith.negf %23 : vector<16x96xf32>
      %25 = math.exp %24 : vector<16x96xf32>
      %cst_17 = arith.constant 1.000000e+00 : f32
      %26 = vector.broadcast %cst_17 : f32 to vector<16x96xf32>
      %27 = arith.addf %26, %25 : vector<16x96xf32>
      %28 = arith.divf %26, %27 : vector<16x96xf32>
      %29 = vector.extract_strided_slice %19 {offsets = [0, 96], sizes = [16, 32], strides = [1, 1]} : vector<16x128xf32> to vector<16x32xf32>
      %30 = math.tanh %29 : vector<16x32xf32>
      %31 = vector.extract_strided_slice %28 {offsets = [0, 32], sizes = [16, 32], strides = [1, 1]} : vector<16x96xf32> to vector<16x32xf32>
      %32 = vector.extract_strided_slice %15 {offsets = [0, 0], sizes = [16, 32], strides = [1, 1]} : vector<16x64xf32> to vector<16x32xf32>
      %33 = arith.mulf %31, %32 : vector<16x32xf32>
      %34 = vector.extract_strided_slice %28 {offsets = [0, 0], sizes = [16, 32], strides = [1, 1]} : vector<16x96xf32> to vector<16x32xf32>
      %35 = arith.mulf %34, %30 : vector<16x32xf32>
      %36 = arith.addf %33, %35 : vector<16x32xf32>
      %37 = vector.extract_strided_slice %28 {offsets = [0, 64], sizes = [16, 32], strides = [1, 1]} : vector<16x96xf32> to vector<16x32xf32>
      %38 = math.tanh %36 : vector<16x32xf32>
      %39 = arith.mulf %37, %38 : vector<16x32xf32>
      %40 = vector.extract_strided_slice %22 {offsets = [0, 0], sizes = [16, 96], strides = [1, 1]} : vector<16x128xf32> to vector<16x96xf32>
      %41 = arith.negf %40 : vector<16x96xf32>
      %42 = math.exp %41 : vector<16x96xf32>
      %cst_18 = arith.constant 1.000000e+00 : f32
      %43 = vector.broadcast %cst_18 : f32 to vector<16x96xf32>
      %44 = arith.addf %43, %42 : vector<16x96xf32>
      %45 = arith.divf %43, %44 : vector<16x96xf32>
      %46 = vector.extract_strided_slice %22 {offsets = [0, 96], sizes = [16, 32], strides = [1, 1]} : vector<16x128xf32> to vector<16x32xf32>
      %47 = math.tanh %46 : vector<16x32xf32>
      %48 = vector.extract_strided_slice %45 {offsets = [0, 32], sizes = [16, 32], strides = [1, 1]} : vector<16x96xf32> to vector<16x32xf32>
      %49 = vector.extract_strided_slice %15 {offsets = [0, 32], sizes = [16, 32], strides = [1, 1]} : vector<16x64xf32> to vector<16x32xf32>
      %50 = arith.mulf %48, %49 : vector<16x32xf32>
      %51 = vector.extract_strided_slice %45 {offsets = [0, 0], sizes = [16, 32], strides = [1, 1]} : vector<16x96xf32> to vector<16x32xf32>
      %52 = arith.mulf %51, %47 : vector<16x32xf32>
      %53 = arith.addf %50, %52 : vector<16x32xf32>
      %54 = vector.extract_strided_slice %45 {offsets = [0, 64], sizes = [16, 32], strides = [1, 1]} : vector<16x96xf32> to vector<16x32xf32>
      %55 = math.tanh %53 : vector<16x32xf32>
      %56 = arith.mulf %54, %55 : vector<16x32xf32>
      %57 = tpu.concatenate %39, %56 in 1 : vector<16x32xf32>, vector<16x32xf32> -> vector<16x64xf32>
      %c0_19 = arith.constant 0 : index
      %c0_20 = arith.constant 0 : index
      %58 = vector.load %arg4[%c0_19, %c0_20] : memref<16x64xf32, #tpu.memory_space<vmem>>, vector<16x64xf32>
      tpu.vector_store %arg4[%c0_19, %c0_20], %57 {strides = array<i32>} : memref<16x64xf32, #tpu.memory_space<vmem>>, vector<16x64xf32>,
      %59 = tpu.concatenate %36, %53 in 1 : vector<16x32xf32>, vector<16x32xf32> -> vector<16x64xf32>
      %c0_21 = arith.constant 0 : index
      %c0_22 = arith.constant 0 : index
      %60 = vector.load %arg5[%c0_21, %c0_22] : memref<16x64xf32, #tpu.memory_space<vmem>>, vector<16x64xf32>
      tpu.vector_store %arg5[%c0_21, %c0_22], %59 {strides = array<i32>} : memref<16x64xf32, #tpu.memory_space<vmem>>, vector<16x64xf32>,
      %61 = arith.index_cast %6 : i32 to index
      %c0_23 = arith.constant 0 : index
      %c0_24 = arith.constant 0 : index
      %62 = vector.load %arg2[%61, %c0_23, %c0_24] : memref<4x16x32xf32, #tpu.memory_space<vmem>>, vector<1x16x32xf32>
      %63 = vector.shape_cast %62 : vector<1x16x32xf32> to vector<16x32xf32>
      %64 = vector.shape_cast %39 : vector<16x32xf32> to vector<1x16x32xf32>
      tpu.vector_store %arg2[%61, %c0_23, %c0_24], %64 {strides = array<i32>} : memref<4x16x32xf32, #tpu.memory_space<vmem>>, vector<1x16x32xf32>,
      %65 = arith.index_cast %7 : i32 to index
      %c0_25 = arith.constant 0 : index
      %c0_26 = arith.constant 0 : index
      %66 = vector.load %arg3[%65, %c0_25, %c0_26] : memref<4x16x32xf32, #tpu.memory_space<vmem>>, vector<1x16x32xf32>
      %67 = vector.shape_cast %66 : vector<1x16x32xf32> to vector<16x32xf32>
      %68 = vector.shape_cast %56 : vector<16x32xf32> to vector<1x16x32xf32>
      tpu.vector_store %arg3[%65, %c0_25, %c0_26], %68 {strides = array<i32>} : memref<4x16x32xf32, #tpu.memory_space<vmem>>, vector<1x16x32xf32>,
      %c2_i32_27 = arith.constant 2 : i32
      %69 = arith.muli %c2_i32_27, %arg6 : i32
      %c1_i32_28 = arith.constant 1 : i32
      %70 = arith.addi %69, %c1_i32_28 : i32
      %c3_i32_29 = arith.constant 3 : i32
      %71 = arith.subi %c3_i32_29, %70 : i32
      %72 = arith.index_cast %70 : i32 to index
      %c0_30 = arith.constant 0 : index
      %c0_31 = arith.constant 0 : index
      %73 = vector.load %arg0[%72, %c0_30, %c0_31] : memref<4x16x256xf32, #tpu.memory_space<vmem>>, vector<1x16x256xf32>
      %74 = vector.shape_cast %73 : vector<1x16x256xf32> to vector<16x256xf32>
      %75 = arith.index_cast %71 : i32 to index
      %c0_32 = arith.constant 0 : index
      %c0_33 = arith.constant 0 : index
      %76 = vector.load %arg0[%75, %c0_32, %c0_33] : memref<4x16x256xf32, #tpu.memory_space<vmem>>, vector<1x16x256xf32>
      %77 = vector.shape_cast %76 : vector<1x16x256xf32> to vector<16x256xf32>
      %c0_34 = arith.constant 0 : index
      %c0_35 = arith.constant 0 : index
      %78 = vector.load %arg4[%c0_34, %c0_35] : memref<16x64xf32, #tpu.memory_space<vmem>>, vector<16x64xf32>
      %c0_36 = arith.constant 0 : index
      %c0_37 = arith.constant 0 : index
      %79 = vector.load %arg5[%c0_36, %c0_37] : memref<16x64xf32, #tpu.memory_space<vmem>>, vector<16x64xf32>
      %cst_38 = arith.constant dense<0.000000e+00> : vector<16x256xf32>
      %80 = tpu.matmul %78, %4, %cst_38 {dimension_numbers = #tpu.dot_dimension_numbers<[1], [0], [0], [1], [0, 0, 1, 1], [], []>} : vector<16x64xf32>, vector<64x256xf32>, vector<16x256xf32> -> vector<16x256xf32>
      %81 = vector.extract_strided_slice %74 {offsets = [0, 0], sizes = [16, 128], strides = [1, 1]} : vector<16x256xf32> to vector<16x128xf32>
      %82 = vector.extract_strided_slice %80 {offsets = [0, 0], sizes = [16, 128], strides = [1, 1]} : vector<16x256xf32> to vector<16x128xf32>
      %83 = arith.addf %81, %82 : vector<16x128xf32>
      %84 = vector.extract_strided_slice %77 {offsets = [0, 128], sizes = [16, 128], strides = [1, 1]} : vector<16x256xf32> to vector<16x128xf32>
      %85 = vector.extract_strided_slice %80 {offsets = [0, 128], sizes = [16, 128], strides = [1, 1]} : vector<16x256xf32> to vector<16x128xf32>
      %86 = arith.addf %84, %85 : vector<16x128xf32>
      %87 = vector.extract_strided_slice %83 {offsets = [0, 0], sizes = [16, 96], strides = [1, 1]} : vector<16x128xf32> to vector<16x96xf32>
      %88 = arith.negf %87 : vector<16x96xf32>
      %89 = math.exp %88 : vector<16x96xf32>
      %cst_39 = arith.constant 1.000000e+00 : f32
      %90 = vector.broadcast %cst_39 : f32 to vector<16x96xf32>
      %91 = arith.addf %90, %89 : vector<16x96xf32>
      %92 = arith.divf %90, %91 : vector<16x96xf32>
      %93 = vector.extract_strided_slice %83 {offsets = [0, 96], sizes = [16, 32], strides = [1, 1]} : vector<16x128xf32> to vector<16x32xf32>
      %94 = math.tanh %93 : vector<16x32xf32>
      %95 = vector.extract_strided_slice %92 {offsets = [0, 32], sizes = [16, 32], strides = [1, 1]} : vector<16x96xf32> to vector<16x32xf32>
      %96 = vector.extract_strided_slice %79 {offsets = [0, 0], sizes = [16, 32], strides = [1, 1]} : vector<16x64xf32> to vector<16x32xf32>
      %97 = arith.mulf %95, %96 : vector<16x32xf32>
      %98 = vector.extract_strided_slice %92 {offsets = [0, 0], sizes = [16, 32], strides = [1, 1]} : vector<16x96xf32> to vector<16x32xf32>
      %99 = arith.mulf %98, %94 : vector<16x32xf32>
      %100 = arith.addf %97, %99 : vector<16x32xf32>
      %101 = vector.extract_strided_slice %92 {offsets = [0, 64], sizes = [16, 32], strides = [1, 1]} : vector<16x96xf32> to vector<16x32xf32>
      %102 = math.tanh %100 : vector<16x32xf32>
      %103 = arith.mulf %101, %102 : vector<16x32xf32>
      %104 = vector.extract_strided_slice %86 {offsets = [0, 0], sizes = [16, 96], strides = [1, 1]} : vector<16x128xf32> to vector<16x96xf32>
      %105 = arith.negf %104 : vector<16x96xf32>
      %106 = math.exp %105 : vector<16x96xf32>
      %cst_40 = arith.constant 1.000000e+00 : f32
      %107 = vector.broadcast %cst_40 : f32 to vector<16x96xf32>
      %108 = arith.addf %107, %106 : vector<16x96xf32>
      %109 = arith.divf %107, %108 : vector<16x96xf32>
      %110 = vector.extract_strided_slice %86 {offsets = [0, 96], sizes = [16, 32], strides = [1, 1]} : vector<16x128xf32> to vector<16x32xf32>
      %111 = math.tanh %110 : vector<16x32xf32>
      %112 = vector.extract_strided_slice %109 {offsets = [0, 32], sizes = [16, 32], strides = [1, 1]} : vector<16x96xf32> to vector<16x32xf32>
      %113 = vector.extract_strided_slice %79 {offsets = [0, 32], sizes = [16, 32], strides = [1, 1]} : vector<16x64xf32> to vector<16x32xf32>
      %114 = arith.mulf %112, %113 : vector<16x32xf32>
      %115 = vector.extract_strided_slice %109 {offsets = [0, 0], sizes = [16, 32], strides = [1, 1]} : vector<16x96xf32> to vector<16x32xf32>
      %116 = arith.mulf %115, %111 : vector<16x32xf32>
      %117 = arith.addf %114, %116 : vector<16x32xf32>
      %118 = vector.extract_strided_slice %109 {offsets = [0, 64], sizes = [16, 32], strides = [1, 1]} : vector<16x96xf32> to vector<16x32xf32>
      %119 = math.tanh %117 : vector<16x32xf32>
      %120 = arith.mulf %118, %119 : vector<16x32xf32>
      %121 = tpu.concatenate %103, %120 in 1 : vector<16x32xf32>, vector<16x32xf32> -> vector<16x64xf32>
      %c0_41 = arith.constant 0 : index
      %c0_42 = arith.constant 0 : index
      %122 = vector.load %arg4[%c0_41, %c0_42] : memref<16x64xf32, #tpu.memory_space<vmem>>, vector<16x64xf32>
      tpu.vector_store %arg4[%c0_41, %c0_42], %121 {strides = array<i32>} : memref<16x64xf32, #tpu.memory_space<vmem>>, vector<16x64xf32>,
      %123 = tpu.concatenate %100, %117 in 1 : vector<16x32xf32>, vector<16x32xf32> -> vector<16x64xf32>
      %c0_43 = arith.constant 0 : index
      %c0_44 = arith.constant 0 : index
      %124 = vector.load %arg5[%c0_43, %c0_44] : memref<16x64xf32, #tpu.memory_space<vmem>>, vector<16x64xf32>
      tpu.vector_store %arg5[%c0_43, %c0_44], %123 {strides = array<i32>} : memref<16x64xf32, #tpu.memory_space<vmem>>, vector<16x64xf32>,
      %125 = arith.index_cast %70 : i32 to index
      %c0_45 = arith.constant 0 : index
      %c0_46 = arith.constant 0 : index
      %126 = vector.load %arg2[%125, %c0_45, %c0_46] : memref<4x16x32xf32, #tpu.memory_space<vmem>>, vector<1x16x32xf32>
      %127 = vector.shape_cast %126 : vector<1x16x32xf32> to vector<16x32xf32>
      %128 = vector.shape_cast %103 : vector<16x32xf32> to vector<1x16x32xf32>
      tpu.vector_store %arg2[%125, %c0_45, %c0_46], %128 {strides = array<i32>} : memref<4x16x32xf32, #tpu.memory_space<vmem>>, vector<1x16x32xf32>,
      %129 = arith.index_cast %71 : i32 to index
      %c0_47 = arith.constant 0 : index
      %c0_48 = arith.constant 0 : index
      %130 = vector.load %arg3[%129, %c0_47, %c0_48] : memref<4x16x32xf32, #tpu.memory_space<vmem>>, vector<1x16x32xf32>
      %131 = vector.shape_cast %130 : vector<1x16x32xf32> to vector<16x32xf32>
      %132 = vector.shape_cast %120 : vector<16x32xf32> to vector<1x16x32xf32>
      tpu.vector_store %arg3[%129, %c0_47, %c0_48], %132 {strides = array<i32>} : memref<4x16x32xf32, #tpu.memory_space<vmem>>, vector<1x16x32xf32>,
    }
    %c2_i32_6 = arith.constant 2 : i32
    return
  }
}

module attributes {stable_mosaic.version = 11 : i64} {
  func.func @_deconv_res_ln_proj_kernel(%arg0: i32, %arg1: memref<64x32xf32, #tpu.memory_space<vmem>>, %arg2: memref<64x32xf32, #tpu.memory_space<vmem>>, %arg3: memref<64x64xf32, #tpu.memory_space<vmem>>, %arg4: memref<32x64xf32, #tpu.memory_space<vmem>>, %arg5: memref<32x64xf32, #tpu.memory_space<vmem>>, %arg6: memref<1x64xf32, #tpu.memory_space<vmem>>, %arg7: memref<1x16xf32, #tpu.memory_space<vmem>>, %arg8: memref<1x16xf32, #tpu.memory_space<vmem>>, %arg9: memref<16x128xf32, #tpu.memory_space<vmem>>, %arg10: memref<1x128xf32, #tpu.memory_space<vmem>>, %arg11: memref<64x64xf32, #tpu.memory_space<vmem>>, %arg12: memref<64x512xf32, #tpu.memory_space<vmem>>) attributes {dimension_semantics = [#tpu.dimension_semantics<parallel>], iteration_bounds = array<i64: 1>, scalar_prefetch = 0 : i64, scratch_operands = 0 : i64, tpu.core_type = #tpu.core_type<tc>, window_params = [{transform_indices = @transform_0, window_bounds = array<i64: 64, 32>}, {transform_indices = @transform_1, window_bounds = array<i64: 64, 32>}, {transform_indices = @transform_2, window_bounds = array<i64: 64, 64>}, {pipeline_mode = #tpu.pipeline_mode<synchronous>, transform_indices = @transform_3, window_bounds = array<i64: 32, 64>}, {pipeline_mode = #tpu.pipeline_mode<synchronous>, transform_indices = @transform_4, window_bounds = array<i64: 32, 64>}, {pipeline_mode = #tpu.pipeline_mode<synchronous>, transform_indices = @transform_5, window_bounds = array<i64: 1, 64>}, {pipeline_mode = #tpu.pipeline_mode<synchronous>, transform_indices = @transform_6, window_bounds = array<i64: 1, 16>}, {pipeline_mode = #tpu.pipeline_mode<synchronous>, transform_indices = @transform_7, window_bounds = array<i64: 1, 16>}, {pipeline_mode = #tpu.pipeline_mode<synchronous>, transform_indices = @transform_8, window_bounds = array<i64: 16, 128>}, {pipeline_mode = #tpu.pipeline_mode<synchronous>, transform_indices = @transform_9, window_bounds = array<i64: 1, 128>}, {transform_indices = @transform_10, window_bounds = array<i64: 64, 64>}, {transform_indices = @transform_11, window_bounds = array<i64: 64, 512>}]} {
    %c0 = arith.constant 0 : index
    %c0_0 = arith.constant 0 : index
    %0 = vector.load %arg1[%c0, %c0_0] : memref<64x32xf32, #tpu.memory_space<vmem>>, vector<64x32xf32>
    %c0_1 = arith.constant 0 : index
    %c0_2 = arith.constant 0 : index
    %1 = vector.load %arg4[%c0_1, %c0_2] : memref<32x64xf32, #tpu.memory_space<vmem>>, vector<32x64xf32>
    %cst = arith.constant dense<0.000000e+00> : vector<64x64xf32>
    %2 = tpu.matmul %0, %1, %cst {dimension_numbers = #tpu.dot_dimension_numbers<[1], [0], [0], [1], [0, 0, 1, 1], [], []>} : vector<64x32xf32>, vector<32x64xf32>, vector<64x64xf32> -> vector<64x64xf32>
    %c0_3 = arith.constant 0 : index
    %c0_4 = arith.constant 0 : index
    %3 = vector.load %arg2[%c0_3, %c0_4] : memref<64x32xf32, #tpu.memory_space<vmem>>, vector<64x32xf32>
    %c0_5 = arith.constant 0 : index
    %c0_6 = arith.constant 0 : index
    %4 = vector.load %arg5[%c0_5, %c0_6] : memref<32x64xf32, #tpu.memory_space<vmem>>, vector<32x64xf32>
    %cst_7 = arith.constant dense<0.000000e+00> : vector<64x64xf32>
    %5 = tpu.matmul %3, %4, %cst_7 {dimension_numbers = #tpu.dot_dimension_numbers<[1], [0], [0], [1], [0, 0, 1, 1], [], []>} : vector<64x32xf32>, vector<32x64xf32>, vector<64x64xf32> -> vector<64x64xf32>
    %6 = arith.addf %2, %5 : vector<64x64xf32>
    %c0_8 = arith.constant 0 : index
    %c0_9 = arith.constant 0 : index
    %7 = vector.load %arg6[%c0_8, %c0_9] : memref<1x64xf32, #tpu.memory_space<vmem>>, vector<1x64xf32>
    %8 = vector.broadcast %7 : vector<1x64xf32> to vector<64x64xf32>
    %9 = arith.addf %6, %8 : vector<64x64xf32>
    %c0_10 = arith.constant 0 : index
    %c0_11 = arith.constant 0 : index
    %10 = vector.load %arg3[%c0_10, %c0_11] : memref<64x64xf32, #tpu.memory_space<vmem>>, vector<64x64xf32>
    %11 = arith.addf %9, %10 : vector<64x64xf32>
    %c0_12 = arith.constant 0 : index
    %c0_13 = arith.constant 0 : index
    %12 = vector.load %arg11[%c0_12, %c0_13] : memref<64x64xf32, #tpu.memory_space<vmem>>, vector<64x64xf32>
    tpu.vector_store %arg11[%c0_12, %c0_13], %11 {strides = array<i32>} : memref<64x64xf32, #tpu.memory_space<vmem>>, vector<64x64xf32>,
    %c0_14 = arith.constant 0 : index
    %c0_15 = arith.constant 0 : index
    %13 = vector.load %arg7[%c0_14, %c0_15] : memref<1x16xf32, #tpu.memory_space<vmem>>, vector<1x16xf32>
    %c0_16 = arith.constant 0 : index
    %c0_17 = arith.constant 0 : index
    %14 = vector.load %arg8[%c0_16, %c0_17] : memref<1x16xf32, #tpu.memory_space<vmem>>, vector<1x16xf32>
    %c0_18 = arith.constant 0 : index
    %c0_19 = arith.constant 0 : index
    %15 = vector.load %arg9[%c0_18, %c0_19] : memref<16x128xf32, #tpu.memory_space<vmem>>, vector<16x128xf32>
    %c0_20 = arith.constant 0 : index
    %c0_21 = arith.constant 0 : index
    %16 = vector.load %arg10[%c0_20, %c0_21] : memref<1x128xf32, #tpu.memory_space<vmem>>, vector<1x128xf32>
    %17 = vector.extract_strided_slice %11 {offsets = [0, 0], sizes = [64, 16], strides = [1, 1]} : vector<64x64xf32> to vector<64x16xf32>
    %cst_22 = arith.constant dense<0.000000e+00> : vector<64xf32>
    %18 = vector.multi_reduction <add>, %17, %cst_22 [1] : vector<64x16xf32> to vector<64xf32>
    %19 = vector.shape_cast %18 : vector<64xf32> to vector<64x1xf32>
    %cst_23 = arith.constant 1.600000e+01 : f32
    %20 = vector.broadcast %cst_23 : f32 to vector<64x1xf32>
    %21 = arith.divf %19, %20 : vector<64x1xf32>
    %22 = vector.broadcast %21 : vector<64x1xf32> to vector<64x16xf32>
    %23 = arith.subf %17, %22 : vector<64x16xf32>
    %24 = arith.mulf %23, %23 : vector<64x16xf32>
    %cst_24 = arith.constant dense<0.000000e+00> : vector<64xf32>
    %25 = vector.multi_reduction <add>, %24, %cst_24 [1] : vector<64x16xf32> to vector<64xf32>
    %26 = vector.shape_cast %25 : vector<64xf32> to vector<64x1xf32>
    %cst_25 = arith.constant 1.600000e+01 : f32
    %27 = vector.broadcast %cst_25 : f32 to vector<64x1xf32>
    %28 = arith.divf %26, %27 : vector<64x1xf32>
    %cst_26 = arith.constant 9.99999974E-6 : f32
    %29 = vector.broadcast %cst_26 : f32 to vector<64x1xf32>
    %30 = arith.addf %28, %29 : vector<64x1xf32>
    %31 = math.rsqrt %30 : vector<64x1xf32>
    %32 = vector.broadcast %31 : vector<64x1xf32> to vector<64x16xf32>
    %33 = arith.mulf %23, %32 : vector<64x16xf32>
    %34 = vector.broadcast %13 : vector<1x16xf32> to vector<64x16xf32>
    %35 = arith.mulf %33, %34 : vector<64x16xf32>
    %36 = vector.broadcast %14 : vector<1x16xf32> to vector<64x16xf32>
    %37 = arith.addf %35, %36 : vector<64x16xf32>
    %cst_27 = arith.constant dense<0.000000e+00> : vector<64x128xf32>
    %38 = tpu.matmul %37, %15, %cst_27 {dimension_numbers = #tpu.dot_dimension_numbers<[1], [0], [0], [1], [0, 0, 1, 1], [], []>} : vector<64x16xf32>, vector<16x128xf32>, vector<64x128xf32> -> vector<64x128xf32>
    %39 = vector.broadcast %16 : vector<1x128xf32> to vector<64x128xf32>
    %40 = arith.addf %38, %39 : vector<64x128xf32>
    %c0_28 = arith.constant 0 : index
    %c0_29 = arith.constant 0 : index
    %41 = vector.load %arg12[%c0_28, %c0_29] : memref<64x512xf32, #tpu.memory_space<vmem>>, vector<64x128xf32>
    tpu.vector_store %arg12[%c0_28, %c0_29], %40 {strides = array<i32>} : memref<64x512xf32, #tpu.memory_space<vmem>>, vector<64x128xf32>,
    %42 = vector.extract_strided_slice %11 {offsets = [0, 16], sizes = [64, 16], strides = [1, 1]} : vector<64x64xf32> to vector<64x16xf32>
    %cst_30 = arith.constant dense<0.000000e+00> : vector<64xf32>
    %43 = vector.multi_reduction <add>, %42, %cst_30 [1] : vector<64x16xf32> to vector<64xf32>
    %44 = vector.shape_cast %43 : vector<64xf32> to vector<64x1xf32>
    %cst_31 = arith.constant 1.600000e+01 : f32
    %45 = vector.broadcast %cst_31 : f32 to vector<64x1xf32>
    %46 = arith.divf %44, %45 : vector<64x1xf32>
    %47 = vector.broadcast %46 : vector<64x1xf32> to vector<64x16xf32>
    %48 = arith.subf %42, %47 : vector<64x16xf32>
    %49 = arith.mulf %48, %48 : vector<64x16xf32>
    %cst_32 = arith.constant dense<0.000000e+00> : vector<64xf32>
    %50 = vector.multi_reduction <add>, %49, %cst_32 [1] : vector<64x16xf32> to vector<64xf32>
    %51 = vector.shape_cast %50 : vector<64xf32> to vector<64x1xf32>
    %cst_33 = arith.constant 1.600000e+01 : f32
    %52 = vector.broadcast %cst_33 : f32 to vector<64x1xf32>
    %53 = arith.divf %51, %52 : vector<64x1xf32>
    %cst_34 = arith.constant 9.99999974E-6 : f32
    %54 = vector.broadcast %cst_34 : f32 to vector<64x1xf32>
    %55 = arith.addf %53, %54 : vector<64x1xf32>
    %56 = math.rsqrt %55 : vector<64x1xf32>
    %57 = vector.broadcast %56 : vector<64x1xf32> to vector<64x16xf32>
    %58 = arith.mulf %48, %57 : vector<64x16xf32>
    %59 = vector.broadcast %13 : vector<1x16xf32> to vector<64x16xf32>
    %60 = arith.mulf %58, %59 : vector<64x16xf32>
    %61 = vector.broadcast %14 : vector<1x16xf32> to vector<64x16xf32>
    %62 = arith.addf %60, %61 : vector<64x16xf32>
    %cst_35 = arith.constant dense<0.000000e+00> : vector<64x128xf32>
    %63 = tpu.matmul %62, %15, %cst_35 {dimension_numbers = #tpu.dot_dimension_numbers<[1], [0], [0], [1], [0, 0, 1, 1], [], []>} : vector<64x16xf32>, vector<16x128xf32>, vector<64x128xf32> -> vector<64x128xf32>
    %64 = vector.broadcast %16 : vector<1x128xf32> to vector<64x128xf32>
    %65 = arith.addf %63, %64 : vector<64x128xf32>
    %c0_36 = arith.constant 0 : index
    %c128 = arith.constant 128 : index
    %66 = vector.load %arg12[%c0_36, %c128] : memref<64x512xf32, #tpu.memory_space<vmem>>, vector<64x128xf32>
    tpu.vector_store %arg12[%c0_36, %c128], %65 {strides = array<i32>} : memref<64x512xf32, #tpu.memory_space<vmem>>, vector<64x128xf32>,
    %67 = vector.extract_strided_slice %11 {offsets = [0, 32], sizes = [64, 16], strides = [1, 1]} : vector<64x64xf32> to vector<64x16xf32>
    %cst_37 = arith.constant dense<0.000000e+00> : vector<64xf32>
    %68 = vector.multi_reduction <add>, %67, %cst_37 [1] : vector<64x16xf32> to vector<64xf32>
    %69 = vector.shape_cast %68 : vector<64xf32> to vector<64x1xf32>
    %cst_38 = arith.constant 1.600000e+01 : f32
    %70 = vector.broadcast %cst_38 : f32 to vector<64x1xf32>
    %71 = arith.divf %69, %70 : vector<64x1xf32>
    %72 = vector.broadcast %71 : vector<64x1xf32> to vector<64x16xf32>
    %73 = arith.subf %67, %72 : vector<64x16xf32>
    %74 = arith.mulf %73, %73 : vector<64x16xf32>
    %cst_39 = arith.constant dense<0.000000e+00> : vector<64xf32>
    %75 = vector.multi_reduction <add>, %74, %cst_39 [1] : vector<64x16xf32> to vector<64xf32>
    %76 = vector.shape_cast %75 : vector<64xf32> to vector<64x1xf32>
    %cst_40 = arith.constant 1.600000e+01 : f32
    %77 = vector.broadcast %cst_40 : f32 to vector<64x1xf32>
    %78 = arith.divf %76, %77 : vector<64x1xf32>
    %cst_41 = arith.constant 9.99999974E-6 : f32
    %79 = vector.broadcast %cst_41 : f32 to vector<64x1xf32>
    %80 = arith.addf %78, %79 : vector<64x1xf32>
    %81 = math.rsqrt %80 : vector<64x1xf32>
    %82 = vector.broadcast %81 : vector<64x1xf32> to vector<64x16xf32>
    %83 = arith.mulf %73, %82 : vector<64x16xf32>
    %84 = vector.broadcast %13 : vector<1x16xf32> to vector<64x16xf32>
    %85 = arith.mulf %83, %84 : vector<64x16xf32>
    %86 = vector.broadcast %14 : vector<1x16xf32> to vector<64x16xf32>
    %87 = arith.addf %85, %86 : vector<64x16xf32>
    %cst_42 = arith.constant dense<0.000000e+00> : vector<64x128xf32>
    %88 = tpu.matmul %87, %15, %cst_42 {dimension_numbers = #tpu.dot_dimension_numbers<[1], [0], [0], [1], [0, 0, 1, 1], [], []>} : vector<64x16xf32>, vector<16x128xf32>, vector<64x128xf32> -> vector<64x128xf32>
    %89 = vector.broadcast %16 : vector<1x128xf32> to vector<64x128xf32>
    %90 = arith.addf %88, %89 : vector<64x128xf32>
    %c0_43 = arith.constant 0 : index
    %c256 = arith.constant 256 : index
    %91 = vector.load %arg12[%c0_43, %c256] : memref<64x512xf32, #tpu.memory_space<vmem>>, vector<64x128xf32>
    tpu.vector_store %arg12[%c0_43, %c256], %90 {strides = array<i32>} : memref<64x512xf32, #tpu.memory_space<vmem>>, vector<64x128xf32>,
    %92 = vector.extract_strided_slice %11 {offsets = [0, 48], sizes = [64, 16], strides = [1, 1]} : vector<64x64xf32> to vector<64x16xf32>
    %cst_44 = arith.constant dense<0.000000e+00> : vector<64xf32>
    %93 = vector.multi_reduction <add>, %92, %cst_44 [1] : vector<64x16xf32> to vector<64xf32>
    %94 = vector.shape_cast %93 : vector<64xf32> to vector<64x1xf32>
    %cst_45 = arith.constant 1.600000e+01 : f32
    %95 = vector.broadcast %cst_45 : f32 to vector<64x1xf32>
    %96 = arith.divf %94, %95 : vector<64x1xf32>
    %97 = vector.broadcast %96 : vector<64x1xf32> to vector<64x16xf32>
    %98 = arith.subf %92, %97 : vector<64x16xf32>
    %99 = arith.mulf %98, %98 : vector<64x16xf32>
    %cst_46 = arith.constant dense<0.000000e+00> : vector<64xf32>
    %100 = vector.multi_reduction <add>, %99, %cst_46 [1] : vector<64x16xf32> to vector<64xf32>
    %101 = vector.shape_cast %100 : vector<64xf32> to vector<64x1xf32>
    %cst_47 = arith.constant 1.600000e+01 : f32
    %102 = vector.broadcast %cst_47 : f32 to vector<64x1xf32>
    %103 = arith.divf %101, %102 : vector<64x1xf32>
    %cst_48 = arith.constant 9.99999974E-6 : f32
    %104 = vector.broadcast %cst_48 : f32 to vector<64x1xf32>
    %105 = arith.addf %103, %104 : vector<64x1xf32>
    %106 = math.rsqrt %105 : vector<64x1xf32>
    %107 = vector.broadcast %106 : vector<64x1xf32> to vector<64x16xf32>
    %108 = arith.mulf %98, %107 : vector<64x16xf32>
    %109 = vector.broadcast %13 : vector<1x16xf32> to vector<64x16xf32>
    %110 = arith.mulf %108, %109 : vector<64x16xf32>
    %111 = vector.broadcast %14 : vector<1x16xf32> to vector<64x16xf32>
    %112 = arith.addf %110, %111 : vector<64x16xf32>
    %cst_49 = arith.constant dense<0.000000e+00> : vector<64x128xf32>
    %113 = tpu.matmul %112, %15, %cst_49 {dimension_numbers = #tpu.dot_dimension_numbers<[1], [0], [0], [1], [0, 0, 1, 1], [], []>} : vector<64x16xf32>, vector<16x128xf32>, vector<64x128xf32> -> vector<64x128xf32>
    %114 = vector.broadcast %16 : vector<1x128xf32> to vector<64x128xf32>
    %115 = arith.addf %113, %114 : vector<64x128xf32>
    %c0_50 = arith.constant 0 : index
    %c384 = arith.constant 384 : index
    %116 = vector.load %arg12[%c0_50, %c384] : memref<64x512xf32, #tpu.memory_space<vmem>>, vector<64x128xf32>
    tpu.vector_store %arg12[%c0_50, %c384], %115 {strides = array<i32>} : memref<64x512xf32, #tpu.memory_space<vmem>>, vector<64x128xf32>,
    return
  }
  func.func @transform_0(%arg0: i32) -> (i32, i32) {
    %c0_i32 = arith.constant 0 : i32
    %c0_i32_0 = arith.constant 0 : i32
    return %arg0, %c0_i32 : i32, i32
  }
  func.func @transform_1(%arg0: i32) -> (i32, i32) {
    %c0_i32 = arith.constant 0 : i32
    %c0_i32_0 = arith.constant 0 : i32
    return %arg0, %c0_i32 : i32, i32
  }
  func.func @transform_2(%arg0: i32) -> (i32, i32) {
    %c0_i32 = arith.constant 0 : i32
    %c0_i32_0 = arith.constant 0 : i32
    return %arg0, %c0_i32 : i32, i32
  }
  func.func @transform_3(%arg0: i32) -> (i32, i32) {
    %c0_i32 = arith.constant 0 : i32
    %c0_i32_0 = arith.constant 0 : i32
    %c0_i32_1 = arith.constant 0 : i32
    return %c0_i32, %c0_i32_0 : i32, i32
  }
  func.func @transform_4(%arg0: i32) -> (i32, i32) {
    %c0_i32 = arith.constant 0 : i32
    %c0_i32_0 = arith.constant 0 : i32
    %c0_i32_1 = arith.constant 0 : i32
    return %c0_i32, %c0_i32_0 : i32, i32
  }
  func.func @transform_5(%arg0: i32) -> (i32, i32) {
    %c0_i32 = arith.constant 0 : i32
    %c0_i32_0 = arith.constant 0 : i32
    %c0_i32_1 = arith.constant 0 : i32
    return %c0_i32, %c0_i32_0 : i32, i32
  }
  func.func @transform_6(%arg0: i32) -> (i32, i32) {
    %c0_i32 = arith.constant 0 : i32
    %c0_i32_0 = arith.constant 0 : i32
    %c0_i32_1 = arith.constant 0 : i32
    return %c0_i32, %c0_i32_0 : i32, i32
  }
  func.func @transform_7(%arg0: i32) -> (i32, i32) {
    %c0_i32 = arith.constant 0 : i32
    %c0_i32_0 = arith.constant 0 : i32
    %c0_i32_1 = arith.constant 0 : i32
    return %c0_i32, %c0_i32_0 : i32, i32
  }
  func.func @transform_8(%arg0: i32) -> (i32, i32) {
    %c0_i32 = arith.constant 0 : i32
    %c0_i32_0 = arith.constant 0 : i32
    %c0_i32_1 = arith.constant 0 : i32
    return %c0_i32, %c0_i32_0 : i32, i32
  }
  func.func @transform_9(%arg0: i32) -> (i32, i32) {
    %c0_i32 = arith.constant 0 : i32
    %c0_i32_0 = arith.constant 0 : i32
    %c0_i32_1 = arith.constant 0 : i32
    return %c0_i32, %c0_i32_0 : i32, i32
  }
  func.func @transform_10(%arg0: i32) -> (i32, i32) {
    %c0_i32 = arith.constant 0 : i32
    %c0_i32_0 = arith.constant 0 : i32
    return %arg0, %c0_i32 : i32, i32
  }
  func.func @transform_11(%arg0: i32) -> (i32, i32) {
    %c0_i32 = arith.constant 0 : i32
    %c0_i32_0 = arith.constant 0 : i32
    return %arg0, %c0_i32 : i32, i32
  }
}

module attributes {stable_mosaic.version = 11 : i64} {
  func.func @_lstm_kernel(%arg0: memref<8x32x128xf32, #tpu.memory_space<vmem>>, %arg1: memref<32x128xf32, #tpu.memory_space<vmem>>, %arg2: memref<32x32xf32, #tpu.memory_space<vmem>>, %arg3: memref<32x32xf32, #tpu.memory_space<vmem>>, %arg4: memref<8x32x32xf32, #tpu.memory_space<vmem>>, %arg5: memref<32x32xf32, #tpu.memory_space<vmem>>, %arg6: memref<32x32xf32, #tpu.memory_space<vmem>>, %arg7: memref<32x32xf32, #tpu.memory_space<vmem>>, %arg8: memref<32x32xf32, #tpu.memory_space<vmem>>) attributes {dimension_semantics = [], scalar_prefetch = 0 : i64, scratch_operands = 2 : i64, tpu.core_type = #tpu.core_type<tc>} {
    %c0 = arith.constant 0 : index
    %c0_0 = arith.constant 0 : index
    %0 = vector.load %arg2[%c0, %c0_0] : memref<32x32xf32, #tpu.memory_space<vmem>>, vector<32x32xf32>
    %c0_1 = arith.constant 0 : index
    %c0_2 = arith.constant 0 : index
    %1 = vector.load %arg7[%c0_1, %c0_2] : memref<32x32xf32, #tpu.memory_space<vmem>>, vector<32x32xf32>
    tpu.vector_store %arg7[%c0_1, %c0_2], %0 {strides = array<i32>} : memref<32x32xf32, #tpu.memory_space<vmem>>, vector<32x32xf32>,
    %c0_3 = arith.constant 0 : index
    %c0_4 = arith.constant 0 : index
    %2 = vector.load %arg3[%c0_3, %c0_4] : memref<32x32xf32, #tpu.memory_space<vmem>>, vector<32x32xf32>
    %c0_5 = arith.constant 0 : index
    %c0_6 = arith.constant 0 : index
    %3 = vector.load %arg8[%c0_5, %c0_6] : memref<32x32xf32, #tpu.memory_space<vmem>>, vector<32x32xf32>
    tpu.vector_store %arg8[%c0_5, %c0_6], %2 {strides = array<i32>} : memref<32x32xf32, #tpu.memory_space<vmem>>, vector<32x32xf32>,
    %c0_7 = arith.constant 0 : index
    %c0_8 = arith.constant 0 : index
    %4 = vector.load %arg1[%c0_7, %c0_8] : memref<32x128xf32, #tpu.memory_space<vmem>>, vector<32x128xf32>
    %c0_i32 = arith.constant 0 : i32
    %c4_i32 = arith.constant 4 : i32
    %5 = arith.addi %c0_i32, %c4_i32 : i32
    %c1_i32 = arith.constant 1 : i32
    scf.for %arg9 = %c0_i32 to %5 step %c1_i32  : i32 {
      %c2_i32 = arith.constant 2 : i32
      %10 = arith.muli %c2_i32, %arg9 : i32
      %c0_18 = arith.constant 0 : index
      %c0_19 = arith.constant 0 : index
      %11 = vector.load %arg7[%c0_18, %c0_19] : memref<32x32xf32, #tpu.memory_space<vmem>>, vector<32x32xf32>
      %c0_20 = arith.constant 0 : index
      %c0_21 = arith.constant 0 : index
      %12 = vector.load %arg8[%c0_20, %c0_21] : memref<32x32xf32, #tpu.memory_space<vmem>>, vector<32x32xf32>
      %13 = arith.index_cast %10 : i32 to index
      %c0_22 = arith.constant 0 : index
      %c0_23 = arith.constant 0 : index
      %14 = vector.load %arg0[%13, %c0_22, %c0_23] : memref<8x32x128xf32, #tpu.memory_space<vmem>>, vector<1x32x128xf32>
      %15 = vector.shape_cast %14 : vector<1x32x128xf32> to vector<32x128xf32>
      %cst = arith.constant dense<0.000000e+00> : vector<32x128xf32>
      %16 = tpu.matmul %11, %4, %cst {dimension_numbers = #tpu.dot_dimension_numbers<[1], [0], [0], [1], [0, 0, 1, 1], [], []>} : vector<32x32xf32>, vector<32x128xf32>, vector<32x128xf32> -> vector<32x128xf32>
      %17 = arith.addf %15, %16 : vector<32x128xf32>
      %18 = vector.extract_strided_slice %17 {offsets = [0, 0], sizes = [32, 96], strides = [1, 1]} : vector<32x128xf32> to vector<32x96xf32>
      %19 = arith.negf %18 : vector<32x96xf32>
      %20 = math.exp %19 : vector<32x96xf32>
      %cst_24 = arith.constant 1.000000e+00 : f32
      %21 = vector.broadcast %cst_24 : f32 to vector<32x96xf32>
      %22 = arith.addf %21, %20 : vector<32x96xf32>
      %23 = arith.divf %21, %22 : vector<32x96xf32>
      %24 = vector.extract_strided_slice %17 {offsets = [0, 96], sizes = [32, 32], strides = [1, 1]} : vector<32x128xf32> to vector<32x32xf32>
      %25 = math.tanh %24 : vector<32x32xf32>
      %26 = vector.extract_strided_slice %23 {offsets = [0, 32], sizes = [32, 32], strides = [1, 1]} : vector<32x96xf32> to vector<32x32xf32>
      %27 = arith.mulf %26, %12 : vector<32x32xf32>
      %28 = vector.extract_strided_slice %23 {offsets = [0, 0], sizes = [32, 32], strides = [1, 1]} : vector<32x96xf32> to vector<32x32xf32>
      %29 = arith.mulf %28, %25 : vector<32x32xf32>
      %30 = arith.addf %27, %29 : vector<32x32xf32>
      %31 = vector.extract_strided_slice %23 {offsets = [0, 64], sizes = [32, 32], strides = [1, 1]} : vector<32x96xf32> to vector<32x32xf32>
      %32 = math.tanh %30 : vector<32x32xf32>
      %33 = arith.mulf %31, %32 : vector<32x32xf32>
      %c0_25 = arith.constant 0 : index
      %c0_26 = arith.constant 0 : index
      %34 = vector.load %arg7[%c0_25, %c0_26] : memref<32x32xf32, #tpu.memory_space<vmem>>, vector<32x32xf32>
      tpu.vector_store %arg7[%c0_25, %c0_26], %33 {strides = array<i32>} : memref<32x32xf32, #tpu.memory_space<vmem>>, vector<32x32xf32>,
      %c0_27 = arith.constant 0 : index
      %c0_28 = arith.constant 0 : index
      %35 = vector.load %arg8[%c0_27, %c0_28] : memref<32x32xf32, #tpu.memory_space<vmem>>, vector<32x32xf32>
      tpu.vector_store %arg8[%c0_27, %c0_28], %30 {strides = array<i32>} : memref<32x32xf32, #tpu.memory_space<vmem>>, vector<32x32xf32>,
      %36 = arith.index_cast %10 : i32 to index
      %c0_29 = arith.constant 0 : index
      %c0_30 = arith.constant 0 : index
      %37 = vector.load %arg4[%36, %c0_29, %c0_30] : memref<8x32x32xf32, #tpu.memory_space<vmem>>, vector<1x32x32xf32>
      %38 = vector.shape_cast %37 : vector<1x32x32xf32> to vector<32x32xf32>
      %39 = vector.shape_cast %33 : vector<32x32xf32> to vector<1x32x32xf32>
      tpu.vector_store %arg4[%36, %c0_29, %c0_30], %39 {strides = array<i32>} : memref<8x32x32xf32, #tpu.memory_space<vmem>>, vector<1x32x32xf32>,
      %c2_i32_31 = arith.constant 2 : i32
      %40 = arith.muli %c2_i32_31, %arg9 : i32
      %c1_i32_32 = arith.constant 1 : i32
      %41 = arith.addi %40, %c1_i32_32 : i32
      %c0_33 = arith.constant 0 : index
      %c0_34 = arith.constant 0 : index
      %42 = vector.load %arg7[%c0_33, %c0_34] : memref<32x32xf32, #tpu.memory_space<vmem>>, vector<32x32xf32>
      %c0_35 = arith.constant 0 : index
      %c0_36 = arith.constant 0 : index
      %43 = vector.load %arg8[%c0_35, %c0_36] : memref<32x32xf32, #tpu.memory_space<vmem>>, vector<32x32xf32>
      %44 = arith.index_cast %41 : i32 to index
      %c0_37 = arith.constant 0 : index
      %c0_38 = arith.constant 0 : index
      %45 = vector.load %arg0[%44, %c0_37, %c0_38] : memref<8x32x128xf32, #tpu.memory_space<vmem>>, vector<1x32x128xf32>
      %46 = vector.shape_cast %45 : vector<1x32x128xf32> to vector<32x128xf32>
      %cst_39 = arith.constant dense<0.000000e+00> : vector<32x128xf32>
      %47 = tpu.matmul %42, %4, %cst_39 {dimension_numbers = #tpu.dot_dimension_numbers<[1], [0], [0], [1], [0, 0, 1, 1], [], []>} : vector<32x32xf32>, vector<32x128xf32>, vector<32x128xf32> -> vector<32x128xf32>
      %48 = arith.addf %46, %47 : vector<32x128xf32>
      %49 = vector.extract_strided_slice %48 {offsets = [0, 0], sizes = [32, 96], strides = [1, 1]} : vector<32x128xf32> to vector<32x96xf32>
      %50 = arith.negf %49 : vector<32x96xf32>
      %51 = math.exp %50 : vector<32x96xf32>
      %cst_40 = arith.constant 1.000000e+00 : f32
      %52 = vector.broadcast %cst_40 : f32 to vector<32x96xf32>
      %53 = arith.addf %52, %51 : vector<32x96xf32>
      %54 = arith.divf %52, %53 : vector<32x96xf32>
      %55 = vector.extract_strided_slice %48 {offsets = [0, 96], sizes = [32, 32], strides = [1, 1]} : vector<32x128xf32> to vector<32x32xf32>
      %56 = math.tanh %55 : vector<32x32xf32>
      %57 = vector.extract_strided_slice %54 {offsets = [0, 32], sizes = [32, 32], strides = [1, 1]} : vector<32x96xf32> to vector<32x32xf32>
      %58 = arith.mulf %57, %43 : vector<32x32xf32>
      %59 = vector.extract_strided_slice %54 {offsets = [0, 0], sizes = [32, 32], strides = [1, 1]} : vector<32x96xf32> to vector<32x32xf32>
      %60 = arith.mulf %59, %56 : vector<32x32xf32>
      %61 = arith.addf %58, %60 : vector<32x32xf32>
      %62 = vector.extract_strided_slice %54 {offsets = [0, 64], sizes = [32, 32], strides = [1, 1]} : vector<32x96xf32> to vector<32x32xf32>
      %63 = math.tanh %61 : vector<32x32xf32>
      %64 = arith.mulf %62, %63 : vector<32x32xf32>
      %c0_41 = arith.constant 0 : index
      %c0_42 = arith.constant 0 : index
      %65 = vector.load %arg7[%c0_41, %c0_42] : memref<32x32xf32, #tpu.memory_space<vmem>>, vector<32x32xf32>
      tpu.vector_store %arg7[%c0_41, %c0_42], %64 {strides = array<i32>} : memref<32x32xf32, #tpu.memory_space<vmem>>, vector<32x32xf32>,
      %c0_43 = arith.constant 0 : index
      %c0_44 = arith.constant 0 : index
      %66 = vector.load %arg8[%c0_43, %c0_44] : memref<32x32xf32, #tpu.memory_space<vmem>>, vector<32x32xf32>
      tpu.vector_store %arg8[%c0_43, %c0_44], %61 {strides = array<i32>} : memref<32x32xf32, #tpu.memory_space<vmem>>, vector<32x32xf32>,
      %67 = arith.index_cast %41 : i32 to index
      %c0_45 = arith.constant 0 : index
      %c0_46 = arith.constant 0 : index
      %68 = vector.load %arg4[%67, %c0_45, %c0_46] : memref<8x32x32xf32, #tpu.memory_space<vmem>>, vector<1x32x32xf32>
      %69 = vector.shape_cast %68 : vector<1x32x32xf32> to vector<32x32xf32>
      %70 = vector.shape_cast %64 : vector<32x32xf32> to vector<1x32x32xf32>
      tpu.vector_store %arg4[%67, %c0_45, %c0_46], %70 {strides = array<i32>} : memref<8x32x32xf32, #tpu.memory_space<vmem>>, vector<1x32x32xf32>,
    }
    %c4_i32_9 = arith.constant 4 : i32
    %c0_10 = arith.constant 0 : index
    %c0_11 = arith.constant 0 : index
    %6 = vector.load %arg7[%c0_10, %c0_11] : memref<32x32xf32, #tpu.memory_space<vmem>>, vector<32x32xf32>
    %c0_12 = arith.constant 0 : index
    %c0_13 = arith.constant 0 : index
    %7 = vector.load %arg5[%c0_12, %c0_13] : memref<32x32xf32, #tpu.memory_space<vmem>>, vector<32x32xf32>
    tpu.vector_store %arg5[%c0_12, %c0_13], %6 {strides = array<i32>} : memref<32x32xf32, #tpu.memory_space<vmem>>, vector<32x32xf32>,
    %c0_14 = arith.constant 0 : index
    %c0_15 = arith.constant 0 : index
    %8 = vector.load %arg8[%c0_14, %c0_15] : memref<32x32xf32, #tpu.memory_space<vmem>>, vector<32x32xf32>
    %c0_16 = arith.constant 0 : index
    %c0_17 = arith.constant 0 : index
    %9 = vector.load %arg6[%c0_16, %c0_17] : memref<32x32xf32, #tpu.memory_space<vmem>>, vector<32x32xf32>
    tpu.vector_store %arg6[%c0_16, %c0_17], %8 {strides = array<i32>} : memref<32x32xf32, #tpu.memory_space<vmem>>, vector<32x32xf32>,
    return
  }
}

module attributes {stable_mosaic.version = 11 : i64} {
  func.func @_linear_residual_kernel(%arg0: i32, %arg1: memref<8x1x16x32xf32, #tpu.memory_space<vmem>>, %arg2: memref<1x8x16x16xf32, #tpu.memory_space<vmem>>, %arg3: memref<32x16xf32, #tpu.memory_space<vmem>>, %arg4: memref<1x16xf32, #tpu.memory_space<vmem>>, %arg5: memref<1x8x16x16xf32, #tpu.memory_space<vmem>>) attributes {dimension_semantics = [#tpu.dimension_semantics<parallel>], iteration_bounds = array<i64: 2>, scalar_prefetch = 0 : i64, scratch_operands = 0 : i64, tpu.core_type = #tpu.core_type<tc>, window_params = [{transform_indices = @transform_0, window_bounds = array<i64: 8, 1, 16, 32>}, {transform_indices = @transform_1, window_bounds = array<i64: 1, 8, 16, 16>}, {pipeline_mode = #tpu.pipeline_mode<synchronous>, transform_indices = @transform_2, window_bounds = array<i64: 32, 16>}, {pipeline_mode = #tpu.pipeline_mode<synchronous>, transform_indices = @transform_3, window_bounds = array<i64: 1, 16>}, {transform_indices = @transform_4, window_bounds = array<i64: 1, 8, 16, 16>}]} {
    %c0 = arith.constant 0 : index
    %c0_0 = arith.constant 0 : index
    %0 = vector.load %arg3[%c0, %c0_0] : memref<32x16xf32, #tpu.memory_space<vmem>>, vector<32x16xf32>
    %c0_1 = arith.constant 0 : index
    %c0_2 = arith.constant 0 : index
    %1 = vector.load %arg4[%c0_1, %c0_2] : memref<1x16xf32, #tpu.memory_space<vmem>>, vector<1x16xf32>
    %c0_3 = arith.constant 0 : index
    %c0_4 = arith.constant 0 : index
    %c0_5 = arith.constant 0 : index
    %c0_6 = arith.constant 0 : index
    %2 = vector.load %arg1[%c0_3, %c0_4, %c0_5, %c0_6] : memref<8x1x16x32xf32, #tpu.memory_space<vmem>>, vector<1x1x16x32xf32>
    %3 = vector.shape_cast %2 : vector<1x1x16x32xf32> to vector<16x32xf32>
    %cst = arith.constant dense<0.000000e+00> : vector<16x16xf32>
    %4 = tpu.matmul %3, %0, %cst {dimension_numbers = #tpu.dot_dimension_numbers<[1], [0], [0], [1], [0, 0, 1, 1], [], []>} : vector<16x32xf32>, vector<32x16xf32>, vector<16x16xf32> -> vector<16x16xf32>
    %5 = vector.broadcast %1 : vector<1x16xf32> to vector<16x16xf32>
    %6 = arith.addf %4, %5 : vector<16x16xf32>
    %c0_7 = arith.constant 0 : index
    %c0_8 = arith.constant 0 : index
    %c0_9 = arith.constant 0 : index
    %c0_10 = arith.constant 0 : index
    %7 = vector.load %arg2[%c0_7, %c0_8, %c0_9, %c0_10] : memref<1x8x16x16xf32, #tpu.memory_space<vmem>>, vector<1x1x16x16xf32>
    %8 = vector.shape_cast %7 : vector<1x1x16x16xf32> to vector<16x16xf32>
    %9 = arith.addf %6, %8 : vector<16x16xf32>
    %c0_11 = arith.constant 0 : index
    %c0_12 = arith.constant 0 : index
    %c0_13 = arith.constant 0 : index
    %c0_14 = arith.constant 0 : index
    %10 = vector.load %arg5[%c0_11, %c0_12, %c0_13, %c0_14] : memref<1x8x16x16xf32, #tpu.memory_space<vmem>>, vector<1x1x16x16xf32>
    %11 = vector.shape_cast %10 : vector<1x1x16x16xf32> to vector<16x16xf32>
    %12 = vector.shape_cast %9 : vector<16x16xf32> to vector<1x1x16x16xf32>
    tpu.vector_store %arg5[%c0_11, %c0_12, %c0_13, %c0_14], %12 {strides = array<i32>} : memref<1x8x16x16xf32, #tpu.memory_space<vmem>>, vector<1x1x16x16xf32>,
    %c1 = arith.constant 1 : index
    %c0_15 = arith.constant 0 : index
    %c0_16 = arith.constant 0 : index
    %c0_17 = arith.constant 0 : index
    %13 = vector.load %arg1[%c1, %c0_15, %c0_16, %c0_17] : memref<8x1x16x32xf32, #tpu.memory_space<vmem>>, vector<1x1x16x32xf32>
    %14 = vector.shape_cast %13 : vector<1x1x16x32xf32> to vector<16x32xf32>
    %cst_18 = arith.constant dense<0.000000e+00> : vector<16x16xf32>
    %15 = tpu.matmul %14, %0, %cst_18 {dimension_numbers = #tpu.dot_dimension_numbers<[1], [0], [0], [1], [0, 0, 1, 1], [], []>} : vector<16x32xf32>, vector<32x16xf32>, vector<16x16xf32> -> vector<16x16xf32>
    %16 = vector.broadcast %1 : vector<1x16xf32> to vector<16x16xf32>
    %17 = arith.addf %15, %16 : vector<16x16xf32>
    %c0_19 = arith.constant 0 : index
    %c1_20 = arith.constant 1 : index
    %c0_21 = arith.constant 0 : index
    %c0_22 = arith.constant 0 : index
    %18 = vector.load %arg2[%c0_19, %c1_20, %c0_21, %c0_22] : memref<1x8x16x16xf32, #tpu.memory_space<vmem>>, vector<1x1x16x16xf32>
    %19 = vector.shape_cast %18 : vector<1x1x16x16xf32> to vector<16x16xf32>
    %20 = arith.addf %17, %19 : vector<16x16xf32>
    %c0_23 = arith.constant 0 : index
    %c1_24 = arith.constant 1 : index
    %c0_25 = arith.constant 0 : index
    %c0_26 = arith.constant 0 : index
    %21 = vector.load %arg5[%c0_23, %c1_24, %c0_25, %c0_26] : memref<1x8x16x16xf32, #tpu.memory_space<vmem>>, vector<1x1x16x16xf32>
    %22 = vector.shape_cast %21 : vector<1x1x16x16xf32> to vector<16x16xf32>
    %23 = vector.shape_cast %20 : vector<16x16xf32> to vector<1x1x16x16xf32>
    tpu.vector_store %arg5[%c0_23, %c1_24, %c0_25, %c0_26], %23 {strides = array<i32>} : memref<1x8x16x16xf32, #tpu.memory_space<vmem>>, vector<1x1x16x16xf32>,
    %c2 = arith.constant 2 : index
    %c0_27 = arith.constant 0 : index
    %c0_28 = arith.constant 0 : index
    %c0_29 = arith.constant 0 : index
    %24 = vector.load %arg1[%c2, %c0_27, %c0_28, %c0_29] : memref<8x1x16x32xf32, #tpu.memory_space<vmem>>, vector<1x1x16x32xf32>
    %25 = vector.shape_cast %24 : vector<1x1x16x32xf32> to vector<16x32xf32>
    %cst_30 = arith.constant dense<0.000000e+00> : vector<16x16xf32>
    %26 = tpu.matmul %25, %0, %cst_30 {dimension_numbers = #tpu.dot_dimension_numbers<[1], [0], [0], [1], [0, 0, 1, 1], [], []>} : vector<16x32xf32>, vector<32x16xf32>, vector<16x16xf32> -> vector<16x16xf32>
    %27 = vector.broadcast %1 : vector<1x16xf32> to vector<16x16xf32>
    %28 = arith.addf %26, %27 : vector<16x16xf32>
    %c0_31 = arith.constant 0 : index
    %c2_32 = arith.constant 2 : index
    %c0_33 = arith.constant 0 : index
    %c0_34 = arith.constant 0 : index
    %29 = vector.load %arg2[%c0_31, %c2_32, %c0_33, %c0_34] : memref<1x8x16x16xf32, #tpu.memory_space<vmem>>, vector<1x1x16x16xf32>
    %30 = vector.shape_cast %29 : vector<1x1x16x16xf32> to vector<16x16xf32>
    %31 = arith.addf %28, %30 : vector<16x16xf32>
    %c0_35 = arith.constant 0 : index
    %c2_36 = arith.constant 2 : index
    %c0_37 = arith.constant 0 : index
    %c0_38 = arith.constant 0 : index
    %32 = vector.load %arg5[%c0_35, %c2_36, %c0_37, %c0_38] : memref<1x8x16x16xf32, #tpu.memory_space<vmem>>, vector<1x1x16x16xf32>
    %33 = vector.shape_cast %32 : vector<1x1x16x16xf32> to vector<16x16xf32>
    %34 = vector.shape_cast %31 : vector<16x16xf32> to vector<1x1x16x16xf32>
    tpu.vector_store %arg5[%c0_35, %c2_36, %c0_37, %c0_38], %34 {strides = array<i32>} : memref<1x8x16x16xf32, #tpu.memory_space<vmem>>, vector<1x1x16x16xf32>,
    %c3 = arith.constant 3 : index
    %c0_39 = arith.constant 0 : index
    %c0_40 = arith.constant 0 : index
    %c0_41 = arith.constant 0 : index
    %35 = vector.load %arg1[%c3, %c0_39, %c0_40, %c0_41] : memref<8x1x16x32xf32, #tpu.memory_space<vmem>>, vector<1x1x16x32xf32>
    %36 = vector.shape_cast %35 : vector<1x1x16x32xf32> to vector<16x32xf32>
    %cst_42 = arith.constant dense<0.000000e+00> : vector<16x16xf32>
    %37 = tpu.matmul %36, %0, %cst_42 {dimension_numbers = #tpu.dot_dimension_numbers<[1], [0], [0], [1], [0, 0, 1, 1], [], []>} : vector<16x32xf32>, vector<32x16xf32>, vector<16x16xf32> -> vector<16x16xf32>
    %38 = vector.broadcast %1 : vector<1x16xf32> to vector<16x16xf32>
    %39 = arith.addf %37, %38 : vector<16x16xf32>
    %c0_43 = arith.constant 0 : index
    %c3_44 = arith.constant 3 : index
    %c0_45 = arith.constant 0 : index
    %c0_46 = arith.constant 0 : index
    %40 = vector.load %arg2[%c0_43, %c3_44, %c0_45, %c0_46] : memref<1x8x16x16xf32, #tpu.memory_space<vmem>>, vector<1x1x16x16xf32>
    %41 = vector.shape_cast %40 : vector<1x1x16x16xf32> to vector<16x16xf32>
    %42 = arith.addf %39, %41 : vector<16x16xf32>
    %c0_47 = arith.constant 0 : index
    %c3_48 = arith.constant 3 : index
    %c0_49 = arith.constant 0 : index
    %c0_50 = arith.constant 0 : index
    %43 = vector.load %arg5[%c0_47, %c3_48, %c0_49, %c0_50] : memref<1x8x16x16xf32, #tpu.memory_space<vmem>>, vector<1x1x16x16xf32>
    %44 = vector.shape_cast %43 : vector<1x1x16x16xf32> to vector<16x16xf32>
    %45 = vector.shape_cast %42 : vector<16x16xf32> to vector<1x1x16x16xf32>
    tpu.vector_store %arg5[%c0_47, %c3_48, %c0_49, %c0_50], %45 {strides = array<i32>} : memref<1x8x16x16xf32, #tpu.memory_space<vmem>>, vector<1x1x16x16xf32>,
    %c4 = arith.constant 4 : index
    %c0_51 = arith.constant 0 : index
    %c0_52 = arith.constant 0 : index
    %c0_53 = arith.constant 0 : index
    %46 = vector.load %arg1[%c4, %c0_51, %c0_52, %c0_53] : memref<8x1x16x32xf32, #tpu.memory_space<vmem>>, vector<1x1x16x32xf32>
    %47 = vector.shape_cast %46 : vector<1x1x16x32xf32> to vector<16x32xf32>
    %cst_54 = arith.constant dense<0.000000e+00> : vector<16x16xf32>
    %48 = tpu.matmul %47, %0, %cst_54 {dimension_numbers = #tpu.dot_dimension_numbers<[1], [0], [0], [1], [0, 0, 1, 1], [], []>} : vector<16x32xf32>, vector<32x16xf32>, vector<16x16xf32> -> vector<16x16xf32>
    %49 = vector.broadcast %1 : vector<1x16xf32> to vector<16x16xf32>
    %50 = arith.addf %48, %49 : vector<16x16xf32>
    %c0_55 = arith.constant 0 : index
    %c4_56 = arith.constant 4 : index
    %c0_57 = arith.constant 0 : index
    %c0_58 = arith.constant 0 : index
    %51 = vector.load %arg2[%c0_55, %c4_56, %c0_57, %c0_58] : memref<1x8x16x16xf32, #tpu.memory_space<vmem>>, vector<1x1x16x16xf32>
    %52 = vector.shape_cast %51 : vector<1x1x16x16xf32> to vector<16x16xf32>
    %53 = arith.addf %50, %52 : vector<16x16xf32>
    %c0_59 = arith.constant 0 : index
    %c4_60 = arith.constant 4 : index
    %c0_61 = arith.constant 0 : index
    %c0_62 = arith.constant 0 : index
    %54 = vector.load %arg5[%c0_59, %c4_60, %c0_61, %c0_62] : memref<1x8x16x16xf32, #tpu.memory_space<vmem>>, vector<1x1x16x16xf32>
    %55 = vector.shape_cast %54 : vector<1x1x16x16xf32> to vector<16x16xf32>
    %56 = vector.shape_cast %53 : vector<16x16xf32> to vector<1x1x16x16xf32>
    tpu.vector_store %arg5[%c0_59, %c4_60, %c0_61, %c0_62], %56 {strides = array<i32>} : memref<1x8x16x16xf32, #tpu.memory_space<vmem>>, vector<1x1x16x16xf32>,
    %c5 = arith.constant 5 : index
    %c0_63 = arith.constant 0 : index
    %c0_64 = arith.constant 0 : index
    %c0_65 = arith.constant 0 : index
    %57 = vector.load %arg1[%c5, %c0_63, %c0_64, %c0_65] : memref<8x1x16x32xf32, #tpu.memory_space<vmem>>, vector<1x1x16x32xf32>
    %58 = vector.shape_cast %57 : vector<1x1x16x32xf32> to vector<16x32xf32>
    %cst_66 = arith.constant dense<0.000000e+00> : vector<16x16xf32>
    %59 = tpu.matmul %58, %0, %cst_66 {dimension_numbers = #tpu.dot_dimension_numbers<[1], [0], [0], [1], [0, 0, 1, 1], [], []>} : vector<16x32xf32>, vector<32x16xf32>, vector<16x16xf32> -> vector<16x16xf32>
    %60 = vector.broadcast %1 : vector<1x16xf32> to vector<16x16xf32>
    %61 = arith.addf %59, %60 : vector<16x16xf32>
    %c0_67 = arith.constant 0 : index
    %c5_68 = arith.constant 5 : index
    %c0_69 = arith.constant 0 : index
    %c0_70 = arith.constant 0 : index
    %62 = vector.load %arg2[%c0_67, %c5_68, %c0_69, %c0_70] : memref<1x8x16x16xf32, #tpu.memory_space<vmem>>, vector<1x1x16x16xf32>
    %63 = vector.shape_cast %62 : vector<1x1x16x16xf32> to vector<16x16xf32>
    %64 = arith.addf %61, %63 : vector<16x16xf32>
    %c0_71 = arith.constant 0 : index
    %c5_72 = arith.constant 5 : index
    %c0_73 = arith.constant 0 : index
    %c0_74 = arith.constant 0 : index
    %65 = vector.load %arg5[%c0_71, %c5_72, %c0_73, %c0_74] : memref<1x8x16x16xf32, #tpu.memory_space<vmem>>, vector<1x1x16x16xf32>
    %66 = vector.shape_cast %65 : vector<1x1x16x16xf32> to vector<16x16xf32>
    %67 = vector.shape_cast %64 : vector<16x16xf32> to vector<1x1x16x16xf32>
    tpu.vector_store %arg5[%c0_71, %c5_72, %c0_73, %c0_74], %67 {strides = array<i32>} : memref<1x8x16x16xf32, #tpu.memory_space<vmem>>, vector<1x1x16x16xf32>,
    %c6 = arith.constant 6 : index
    %c0_75 = arith.constant 0 : index
    %c0_76 = arith.constant 0 : index
    %c0_77 = arith.constant 0 : index
    %68 = vector.load %arg1[%c6, %c0_75, %c0_76, %c0_77] : memref<8x1x16x32xf32, #tpu.memory_space<vmem>>, vector<1x1x16x32xf32>
    %69 = vector.shape_cast %68 : vector<1x1x16x32xf32> to vector<16x32xf32>
    %cst_78 = arith.constant dense<0.000000e+00> : vector<16x16xf32>
    %70 = tpu.matmul %69, %0, %cst_78 {dimension_numbers = #tpu.dot_dimension_numbers<[1], [0], [0], [1], [0, 0, 1, 1], [], []>} : vector<16x32xf32>, vector<32x16xf32>, vector<16x16xf32> -> vector<16x16xf32>
    %71 = vector.broadcast %1 : vector<1x16xf32> to vector<16x16xf32>
    %72 = arith.addf %70, %71 : vector<16x16xf32>
    %c0_79 = arith.constant 0 : index
    %c6_80 = arith.constant 6 : index
    %c0_81 = arith.constant 0 : index
    %c0_82 = arith.constant 0 : index
    %73 = vector.load %arg2[%c0_79, %c6_80, %c0_81, %c0_82] : memref<1x8x16x16xf32, #tpu.memory_space<vmem>>, vector<1x1x16x16xf32>
    %74 = vector.shape_cast %73 : vector<1x1x16x16xf32> to vector<16x16xf32>
    %75 = arith.addf %72, %74 : vector<16x16xf32>
    %c0_83 = arith.constant 0 : index
    %c6_84 = arith.constant 6 : index
    %c0_85 = arith.constant 0 : index
    %c0_86 = arith.constant 0 : index
    %76 = vector.load %arg5[%c0_83, %c6_84, %c0_85, %c0_86] : memref<1x8x16x16xf32, #tpu.memory_space<vmem>>, vector<1x1x16x16xf32>
    %77 = vector.shape_cast %76 : vector<1x1x16x16xf32> to vector<16x16xf32>
    %78 = vector.shape_cast %75 : vector<16x16xf32> to vector<1x1x16x16xf32>
    tpu.vector_store %arg5[%c0_83, %c6_84, %c0_85, %c0_86], %78 {strides = array<i32>} : memref<1x8x16x16xf32, #tpu.memory_space<vmem>>, vector<1x1x16x16xf32>,
    %c7 = arith.constant 7 : index
    %c0_87 = arith.constant 0 : index
    %c0_88 = arith.constant 0 : index
    %c0_89 = arith.constant 0 : index
    %79 = vector.load %arg1[%c7, %c0_87, %c0_88, %c0_89] : memref<8x1x16x32xf32, #tpu.memory_space<vmem>>, vector<1x1x16x32xf32>
    %80 = vector.shape_cast %79 : vector<1x1x16x32xf32> to vector<16x32xf32>
    %cst_90 = arith.constant dense<0.000000e+00> : vector<16x16xf32>
    %81 = tpu.matmul %80, %0, %cst_90 {dimension_numbers = #tpu.dot_dimension_numbers<[1], [0], [0], [1], [0, 0, 1, 1], [], []>} : vector<16x32xf32>, vector<32x16xf32>, vector<16x16xf32> -> vector<16x16xf32>
    %82 = vector.broadcast %1 : vector<1x16xf32> to vector<16x16xf32>
    %83 = arith.addf %81, %82 : vector<16x16xf32>
    %c0_91 = arith.constant 0 : index
    %c7_92 = arith.constant 7 : index
    %c0_93 = arith.constant 0 : index
    %c0_94 = arith.constant 0 : index
    %84 = vector.load %arg2[%c0_91, %c7_92, %c0_93, %c0_94] : memref<1x8x16x16xf32, #tpu.memory_space<vmem>>, vector<1x1x16x16xf32>
    %85 = vector.shape_cast %84 : vector<1x1x16x16xf32> to vector<16x16xf32>
    %86 = arith.addf %83, %85 : vector<16x16xf32>
    %c0_95 = arith.constant 0 : index
    %c7_96 = arith.constant 7 : index
    %c0_97 = arith.constant 0 : index
    %c0_98 = arith.constant 0 : index
    %87 = vector.load %arg5[%c0_95, %c7_96, %c0_97, %c0_98] : memref<1x8x16x16xf32, #tpu.memory_space<vmem>>, vector<1x1x16x16xf32>
    %88 = vector.shape_cast %87 : vector<1x1x16x16xf32> to vector<16x16xf32>
    %89 = vector.shape_cast %86 : vector<16x16xf32> to vector<1x1x16x16xf32>
    tpu.vector_store %arg5[%c0_95, %c7_96, %c0_97, %c0_98], %89 {strides = array<i32>} : memref<1x8x16x16xf32, #tpu.memory_space<vmem>>, vector<1x1x16x16xf32>,
    return
  }
  func.func @transform_0(%arg0: i32) -> (i32, i32, i32, i32) {
    %c0_i32 = arith.constant 0 : i32
    %c0_i32_0 = arith.constant 0 : i32
    %c0_i32_1 = arith.constant 0 : i32
    %c0_i32_2 = arith.constant 0 : i32
    return %c0_i32, %arg0, %c0_i32_0, %c0_i32_1 : i32, i32, i32, i32
  }
  func.func @transform_1(%arg0: i32) -> (i32, i32, i32, i32) {
    %c0_i32 = arith.constant 0 : i32
    %c0_i32_0 = arith.constant 0 : i32
    %c0_i32_1 = arith.constant 0 : i32
    %c0_i32_2 = arith.constant 0 : i32
    return %arg0, %c0_i32, %c0_i32_0, %c0_i32_1 : i32, i32, i32, i32
  }
  func.func @transform_2(%arg0: i32) -> (i32, i32) {
    %c0_i32 = arith.constant 0 : i32
    %c0_i32_0 = arith.constant 0 : i32
    %c0_i32_1 = arith.constant 0 : i32
    return %c0_i32, %c0_i32_0 : i32, i32
  }
  func.func @transform_3(%arg0: i32) -> (i32, i32) {
    %c0_i32 = arith.constant 0 : i32
    %c0_i32_0 = arith.constant 0 : i32
    %c0_i32_1 = arith.constant 0 : i32
    return %c0_i32, %c0_i32_0 : i32, i32
  }
  func.func @transform_4(%arg0: i32) -> (i32, i32, i32, i32) {
    %c0_i32 = arith.constant 0 : i32
    %c0_i32_0 = arith.constant 0 : i32
    %c0_i32_1 = arith.constant 0 : i32
    %c0_i32_2 = arith.constant 0 : i32
    return %arg0, %c0_i32, %c0_i32_0, %c0_i32_1 : i32, i32, i32, i32
  }
}

</mosaic_0001>

<llo_original>
// kernel: tile.8
$region0: #{tile.8}
  #allocation2 [shape = 's32[1]{0}', space=sflag, size = 0x4, scoped, tag = 'scoped memory for tile.8']
  %s0 = inlined_call_operand.hbm [shape: f32[16], index: 0, kind: input, shape index: {}]
  %s1 = inlined_call_operand.vmem [shape: f32[4,16], index: 1, kind: output, shape index: {}]
  $region1: #{tile.8} parent=0
    #allocation0 [shape = 'u8[512]{0}', space=vmem, size = 0x400, scoped, tag = 'operand span for operand 0']
    #allocation1 [shape = 's32[1]{0}', space=sflag, size = 0x4, scoped, tag = 'scoped memory for tile.8']
    %2 = vsyncpa [#allocation1], 0
    // Predicated region
    $region2: #{tile.8} parent=1 // pred_check
      _
    $region3: #{tile.8} parent=1 // pred_check_branch
      %4 = sbr.rel (0) target = $region5
    $region4: #{tile.8} parent=1 // pred_region
      %s6 = ssub.s32 16, 16
      %7 = vsyncadd [#allocation1], %s6
      %s9 = sshll.u32 [#allocation0], 4
      %s10 = int_to_ptr.vmem [resolvable:$true] %s9
      %12 = dma.hbm_to_vmem [thread:$0]  %s0, 16, %s10, [#allocation1]
    $region5: #{tile.8} parent=1 // pred_fallthru
      _
    // Predicated region
    $region6: #{tile.8} parent=1 // pred_check
      _
    $region7: #{tile.8} parent=1 // pred_check_branch
      %14 = sbr.rel (0) target = $region9
    $region8: #{tile.8} parent=1 // pred_region
      %15 = dma.done [#allocation1], 16
    $region9: #{tile.8} parent=1 // pred_fallthru
      _
    %v16 = vld [vmem:[#allocation0] ss:$0 sm:$0xff]
    %17 = vst [vmem:[%s1] sm:$0xf] %v16
    %18 = vsyncpa [#allocation1], 1

// kernel: tile.9
$region0: #{tile.9}
  %s0 = inlined_call_operand.vmem [shape: f32[4,16], index: 0, kind: input, shape index: {}]
  %s1 = inlined_call_operand.vmem [shape: f32[1,64], index: 1, kind: output, shape index: {}]
  $region1: #{tile.9} parent=0
    #allocation0 [shape = 'u8[4096]{0}', space=vmem, size = 0x1000, scoped, tag = 'scoped mem for output reshape']
    #allocation1 [shape = 'u8[4096]{0}', space=vmem, size = 0x1000, scoped, tag = 'scoped mem for input reshape']
    %s3 = sshll.u32 1, 4
    %s4 = ssub.s32 %s3, 1
    %v5 = vld [vmem:[%s0] sm:%s4]
    %6 = vst [vmem:[#allocation1] sm:%s4] %v5
    %v7 = vld [vmem:[#allocation1] sm:$0x1]
    %vm8 = vcmask 130048
    %9 = vst.msk [vmem:[#allocation0] sm:$0x1] %vm8, %v7
    %s10 = scalar_lea.vmem [#allocation1], 3
    %v11 = vld [vmem:[%s10] sm:$0x1]
    %12 = vrot.lane.b32.xlu0 %v11, 48
    %v13 = vpop.permute.xlu0 %12
    %vm14 = vcmask 523648
    %15 = vst.msk [vmem:[#allocation0] sm:$0x1] %vm14, %v13
    %s16 = scalar_lea.vmem [#allocation1], 2
    %v17 = vld [vmem:[%s16] sm:$0x1]
    %18 = vrot.lane.b32.xlu0 %v17, 32
    %v19 = vpop.permute.xlu0 %18
    %vm20 = vcmask 392448
    %21 = vst.msk [vmem:[#allocation0] sm:$0x1] %vm20, %v19
    %s22 = scalar_lea.vmem [#allocation1], 1
    %v23 = vld [vmem:[%s22] sm:$0x1]
    %24 = vrot.lane.b32.xlu0 %v23, 16
    %v25 = vpop.permute.xlu0 %24
    %vm26 = vcmask 261248
    %27 = vst.msk [vmem:[#allocation0] sm:$0x1] %vm26, %v25
    %s29 = sshll.u32 1, 1
    %s30 = ssub.s32 %s29, 1
    %v32 = vld [vmem:[#allocation0] sm:%s30]
    %s33 = sshll.u32 1, 1
    %s34 = ssub.s32 %s33, 1
    %35 = vst [vmem:[%s1] sm:%s34] %v32

// kernel: gridnet_block_forward_pallas.6
$region0: #{gridnet_block_forward_pallas.6}
  #allocation0 [shape = 'u32[]', space=smem, size = 0x4, offset = 0x4, fixed_abs, tag = 'smem constant byte address 0x4 - core index']
  #allocation1 [shape = 'u32[144,128]{1,0:T(1,128)}', space=vmem, size = 0x12000, scoped, tag = 'internal scratch']
  #allocation2 [shape = 'f32[16,64]{1,0:T(8,128)}', space=vmem, size = 0x2000, scoped, tag = 'scratch operand']
  #allocation3 [shape = 'f32[16,64]{1,0:T(8,128)}', space=vmem, size = 0x2000, scoped, tag = 'scratch operand']
  %s0 = inlined_call_operand.vmem [shape: f32[4,16,256], index: 0, kind: input, shape index: {}]
  %s1 = inlined_call_operand.vmem [shape: f32[64,256], index: 1, kind: input, shape index: {}]
  %s2 = inlined_call_operand.vmem [shape: f32[4,16,32], index: 2, kind: output, shape index: {0}]
  %s3 = inlined_call_operand.vmem [shape: f32[4,16,32], index: 3, kind: output, shape index: {1}]
  %4 = xla_tuple %s2, %s3
  %s5 = sld [smem:[#allocation0]]
  $region33: #{gridnet_block_forward_pallas.6} parent=0
    _
  %s7 = ssub.s32 1, %s5
  %s8 = scalar_select 0, %s7, %s5
  // Predicated region
  $region2: #{gridnet_block_forward_pallas.6} parent=0 // pred_check
    _
  $region3: #{gridnet_block_forward_pallas.6} parent=0 // pred_check_branch
    %10 = sbr.rel (0) target = $region5
  $region4: #{gridnet_block_forward_pallas.6} parent=0 // pred_region
    _
  $region5: #{gridnet_block_forward_pallas.6} parent=0 // pred_fallthru
    _
  // Predicated region
  $region6: #{gridnet_block_forward_pallas.6} parent=0 // pred_check
    _
  $region7: #{gridnet_block_forward_pallas.6} parent=0 // pred_check_branch
    %12 = sbr.rel (0) target = $region9
  $region8: #{gridnet_block_forward_pallas.6} parent=0 // pred_region
    _
  $region9: #{gridnet_block_forward_pallas.6} parent=0 // pred_fallthru
    _
  %vm13 = vcmask 523264
  %14 = vst.msk [vmem:[#allocation2] sm:$0xff] %vm13, 0.0
  %15 = vst.msk [vmem:[#allocation2 + $0x8] sm:$0xff] %vm13, 0.0
  %16 = vst.msk [vmem:[#allocation3] sm:$0xff] %vm13, 0.0
  %17 = vst.msk [vmem:[#allocation3 + $0x8] sm:$0xff] %vm13, 0.0
  %v18 = vld [vmem:[%s1] sm:$0xff]
  %v19 = vld [vmem:[%s1 + $0x8] sm:$0xff]
  %v20 = vld [vmem:[%s1 + $0x10] sm:$0xff]
  %v21 = vld [vmem:[%s1 + $0x18] sm:$0xff]
  %v22 = vld [vmem:[%s1 + $0x20] sm:$0xff]
  %v23 = vld [vmem:[%s1 + $0x28] sm:$0xff]
  %v24 = vld [vmem:[%s1 + $0x30] sm:$0xff]
  %v25 = vld [vmem:[%s1 + $0x38] sm:$0xff]
  %v26 = vld [vmem:[%s1 + $0x40] sm:$0xff]
  %v27 = vld [vmem:[%s1 + $0x48] sm:$0xff]
  %v28 = vld [vmem:[%s1 + $0x50] sm:$0xff]
  %v29 = vld [vmem:[%s1 + $0x58] sm:$0xff]
  %v30 = vld [vmem:[%s1 + $0x60] sm:$0xff]
  %v31 = vld [vmem:[%s1 + $0x68] sm:$0xff]
  %v32 = vld [vmem:[%s1 + $0x70] sm:$0xff]
  %v33 = vld [vmem:[%s1 + $0x78] sm:$0xff]
  loop: start=0, step=1, limit=2
  $region10: #{gridnet_block_forward_pallas.6} parent=0 // loop_pre_header
    _
  $region11: #{gridnet_block_forward_pallas.6} parent=0 // loop_header
    %s35 = sphi 0, %s39
    %p36 = scmp.ge.s32.totalorder %s35, 2
  $region12: #{gridnet_block_forward_pallas.6} parent=0 // loop_header_branch
    %38 = sbr.rel (%p36) target = $region16
  $region13: #{gridnet_block_forward_pallas.6} parent=0 // loop_body
    %s40 = smul.u32 %s35, 2
    %s41 = ssub.s32 3, %s40
    %s42 = smul.u32 %s40, 4
    %s43 = smul.addr %s42, 8
    %s44 = scalar_lea.vmem %s0, %s43
    %v45 = vld [vmem:[%s44] sm:$0xff]
    %v46 = vld [vmem:[%s44 + $0x10] sm:$0xff]
    %s47 = smul.u32 %s41, 4
    %s48 = smul.addr %s47, 8
    %s49 = scalar_lea.vmem %s0, %s48
    %v50 = vld [vmem:[%s49 + $0x8] sm:$0xff]
    %v51 = vld [vmem:[%s49 + $0x18] sm:$0xff]
    %v52 = vld [vmem:[#allocation2] sm:$0xff]
    %v53 = vld [vmem:[#allocation2 + $0x8] sm:$0xff]
    %v54 = vld [vmem:[#allocation3] sm:$0xff]
    %v55 = vld [vmem:[#allocation3 + $0x8] sm:$0xff]
    %v57 = vsel %vm13, %v52, 0
    %v60 = vsel %vm13, %v53, 0
    %62 = vmatprep.subr.mxu0 0.0
    %63 = vmatpush1.msra.mxu0 0.0
    %64 = vmatprep.subr.mxu0 0.0
    %65 = vmatpush1.msra.mxu0 0.0
    %66 = vmatprep.subr.mxu0 0.0
    %67 = vmatpush1.msra.mxu0 0.0
    %68 = vmatprep.subr.mxu0 0.0
    %69 = vmatpush1.msra.mxu0 0.0
    %70 = vmatprep.subr.mxu0 0.0
    %71 = vmatpush1.msra.mxu0 0.0
    %72 = vmatprep.subr.mxu0 0.0
    %73 = vmatpush1.msra.mxu0 0.0
    %74 = vmatprep.subr.mxu0 0.0
    %75 = vmatpush1.msra.mxu0 0.0
    %76 = vmatprep.subr.mxu0 0.0
    %77 = vmatpush1.msra.mxu0 0.0
    %78 = vmatprep.subr.mxu0 %v33
    %79 = vmatpush1.msra.mxu0 %v32
    %80 = vmatprep.subr.mxu0 %v31
    %81 = vmatpush1.msra.mxu0 %v30
    %82 = vmatprep.subr.mxu0 %v29
    %83 = vmatpush1.msra.mxu0 %v28
    %84 = vmatprep.subr.mxu0 %v27
    %85 = vmatpush1.msra.mxu0 %v26
    %86 = vmatprep.subr.mxu0 %v25
    %87 = vmatpush1.msra.mxu0 %v24
    %88 = vmatprep.subr.mxu0 %v23
    %89 = vmatpush1.msra.mxu0 %v22
    %90 = vmatprep.subr.mxu0 %v21
    %91 = vmatpush1.msra.mxu0 %v20
    %92 = vmatprep.subr.mxu0 %v19
    %93 = vmatpush1.msra.mxu0 %v18
    %94 = vmatprep.subr.mxu0 0.0
    %95 = vmatpush2.msra.mxu0 0.0
    %96 = vmatprep.subr.mxu0 0.0
    %97 = vmatpush2.msra.mxu0 0.0
    %98 = vmatprep.subr.mxu0 0.0
    %99 = vmatpush2.msra.mxu0 0.0
    %100 = vmatprep.subr.mxu0 0.0
    %101 = vmatpush2.msra.mxu0 0.0
    %102 = vmatprep.subr.mxu0 0.0
    %103 = vmatpush2.msra.mxu0 0.0
    %104 = vmatprep.subr.mxu0 0.0
    %105 = vmatpush2.msra.mxu0 0.0
    %106 = vmatprep.subr.mxu0 0.0
    %107 = vmatpush2.msra.mxu0 0.0
    %108 = vmatprep.subr.mxu0 0.0
    %109 = vmatpush2.msra.mxu0 0.0
    %110 = vmatprep.subr.mxu0 0.0
    %111 = vmatpush2.msra.mxu0 0.0
    %112 = vmatprep.subr.mxu0 0.0
    %113 = vmatpush2.msra.mxu0 0.0
    %114 = vmatprep.subr.mxu0 0.0
    %115 = vmatpush2.msra.mxu0 0.0
    %116 = vmatprep.subr.mxu0 0.0
    %117 = vmatpush2.msra.mxu0 0.0
    %118 = vmatprep.subr.mxu0 0.0
    %119 = vmatpush2.msra.mxu0 0.0
    %120 = vmatprep.subr.mxu0 0.0
    %121 = vmatpush2.msra.mxu0 0.0
    %122 = vmatprep.subr.mxu0 0.0
    %123 = vmatpush2.msra.mxu0 0.0
    %124 = vmatprep.subr.mxu0 0.0
    %125 = vmatpush2.msra.mxu0 0.0
    %126 = vmatprep.mubr.f32.mxu0 0.0
    %127 = vmatmul.mubr.f32.gmra.mxu0 %v57
    %v128 = vpop.f32.mrf.mxu0
    %v129 = vadd.f32 0.0, %v128
    %v130 = vpop.f32.mrf.mxu0
    %v131 = vadd.f32 0.0, %v130
    %132 = vmatprep.mubr.f32.mxu0 0.0
    %133 = vmatmul.mubr.f32.gmra.mxu0 %v60
    %v134 = vpop.f32.mrf.mxu0
    %v135 = vadd.f32 0.0, %v134
    %v136 = vpop.f32.mrf.mxu0
    %v137 = vadd.f32 0.0, %v136
    %138 = vdwg.mxu0
    %v139 = vadd.f32 %v45, %v129
    %v140 = vadd.f32 %v46, %v135
    %v141 = vadd.f32 %v50, %v131
    %v142 = vadd.f32 %v51, %v137
    %v143 = vxor.u32 %v139, 2147483648
    %v144 = vxor.u32 %v140, 2147483648
    %v145 = vmul.f32 %v143, 1.442695
    %v146 = vpow.pop %v145
    %v147 = vmul.f32 %v144, 1.442695
    %v148 = vpow.pop %v147
    %v149 = vadd.f32 %v146, 1.0
    %v150 = vadd.f32 %v148, 1.0
    %v151 = vrcp.pop %v149
    %v152 = vmul.f32 1.0, %v151
    %v153 = vrcp.pop %v150
    %v154 = vmul.f32 1.0, %v153
    %v155 = vtanh.pop %v139
    %v156 = vtanh.pop %v140
    %159 = vrot.lane.b32.xlu0 %v54, 32
    %v160 = vpop.permute.xlu0 %159
    %161 = vrot.lane.b32.xlu0 %v55, 32
    %v162 = vpop.permute.xlu0 %161
    %v165 = vmul.f32 %v152, %v160
    %v166 = vmul.f32 %v154, %v162
    %169 = vrot.lane.b32.xlu0 %v155, 32
    %v170 = vpop.permute.xlu0 %169
    %171 = vrot.lane.b32.xlu0 %v156, 32
    %v172 = vpop.permute.xlu0 %171
    %v175 = vmul.f32 %v152, %v170
    %v176 = vmul.f32 %v154, %v172
    %179 = vrot.lane.b32.xlu0 %v175, 32
    %v180 = vpop.permute.xlu0 %179
    %181 = vrot.lane.b32.xlu0 %v176, 32
    %v182 = vpop.permute.xlu0 %181
    %v185 = vadd.f32 %v165, %v180
    %v186 = vadd.f32 %v166, %v182
    %v187 = vtanh.pop %v185
    %v188 = vtanh.pop %v186
    %191 = vrot.lane.b32.xlu0 %v187, 32
    %v192 = vpop.permute.xlu0 %191
    %193 = vrot.lane.b32.xlu0 %v188, 32
    %v194 = vpop.permute.xlu0 %193
    %v197 = vmul.f32 %v152, %v192
    %v198 = vmul.f32 %v154, %v194
    %v199 = vxor.u32 %v141, 2147483648
    %v200 = vxor.u32 %v142, 2147483648
    %v201 = vmul.f32 %v199, 1.442695
    %v202 = vpow.pop %v201
    %v203 = vmul.f32 %v200, 1.442695
    %v204 = vpow.pop %v203
    %v205 = vadd.f32 %v202, 1.0
    %v206 = vadd.f32 %v204, 1.0
    %v207 = vrcp.pop %v205
    %v208 = vmul.f32 1.0, %v207
    %v209 = vrcp.pop %v206
    %v210 = vmul.f32 1.0, %v209
    %v211 = vtanh.pop %v141
    %v212 = vtanh.pop %v142
    %v213 = vmul.f32 %v208, %v54
    %v214 = vmul.f32 %v210, %v55
    %217 = vrot.lane.b32.xlu0 %v211, 32
    %v218 = vpop.permute.xlu0 %217
    %219 = vrot.lane.b32.xlu0 %v212, 32
    %v220 = vpop.permute.xlu0 %219
    %v223 = vmul.f32 %v208, %v218
    %v224 = vmul.f32 %v210, %v220
    %227 = vrot.lane.b32.xlu0 %v223, 32
    %v228 = vpop.permute.xlu0 %227
    %229 = vrot.lane.b32.xlu0 %v224, 32
    %v230 = vpop.permute.xlu0 %229
    %v233 = vadd.f32 %v213, %v228
    %v234 = vadd.f32 %v214, %v230
    %v235 = vtanh.pop %v233
    %v236 = vtanh.pop %v234
    %239 = vrot.lane.b32.xlu0 %v235, 32
    %v240 = vpop.permute.xlu0 %239
    %241 = vrot.lane.b32.xlu0 %v236, 32
    %v242 = vpop.permute.xlu0 %241
    %v245 = vmul.f32 %v208, %v240
    %v246 = vmul.f32 %v210, %v242
    %249 = vrot.lane.b32.xlu0 %v197, 64
    %v250 = vpop.permute.xlu0 %249
    %251 = vrot.lane.b32.xlu0 %v198, 64
    %v252 = vpop.permute.xlu0 %251
    %257 = vrot.lane.b32.xlu0 %v245, 96
    %v258 = vpop.permute.xlu0 %257
    %259 = vrot.lane.b32.xlu0 %v246, 96
    %v260 = vpop.permute.xlu0 %259
    %vm263 = vcmask 261120
    %v264 = vsel %vm263, %v250, %v258
    %v265 = vsel %vm263, %v252, %v260
    %266 = vst.msk [vmem:[#allocation2] sm:$0xff] %vm13, %v264
    %267 = vst.msk [vmem:[#allocation2 + $0x8] sm:$0xff] %vm13, %v265
    %270 = vrot.lane.b32.xlu0 %v185, 96
    %v271 = vpop.permute.xlu0 %270
    %272 = vrot.lane.b32.xlu0 %v186, 96
    %v273 = vpop.permute.xlu0 %272
    %v276 = vsel %vm263, %v271, %v233
    %v277 = vsel %vm263, %v273, %v234
    %278 = vst.msk [vmem:[#allocation3] sm:$0xff] %vm13, %v276
    %279 = vst.msk [vmem:[#allocation3 + $0x8] sm:$0xff] %vm13, %v277
    %s280 = smul.u32 %s40, 16
    %s281 = scalar_lea.vmem %s2, %s280
    %282 = vst.msk [vmem:[%s281] sm:$0xff] %vm263, %v250
    %283 = vst.msk [vmem:[%s281 + $0x8] sm:$0xff] %vm263, %v252
    %284 = vrot.lane.b32.xlu0 %v245, 64
    %v285 = vpop.permute.xlu0 %284
    %286 = vrot.lane.b32.xlu0 %v246, 64
    %v287 = vpop.permute.xlu0 %286
    %s290 = smul.u32 %s41, 16
    %s291 = scalar_lea.vmem %s3, %s290
    %292 = vst.msk [vmem:[%s291] sm:$0xff] %vm263, %v285
    %293 = vst.msk [vmem:[%s291 + $0x8] sm:$0xff] %vm263, %v287
    %s294 = sadd.s32 %s40, 1
    %s295 = ssub.s32 2, %s40
    %s296 = smul.u32 %s294, 4
    %s297 = smul.addr %s296, 8
    %s298 = scalar_lea.vmem %s0, %s297
    %v299 = vld [vmem:[%s298] sm:$0xff]
    %v300 = vld [vmem:[%s298 + $0x10] sm:$0xff]
    %s301 = smul.u32 %s295, 4
    %s302 = smul.addr %s301, 8
    %s303 = scalar_lea.vmem %s0, %s302
    %v304 = vld [vmem:[%s303 + $0x8] sm:$0xff]
    %v305 = vld [vmem:[%s303 + $0x18] sm:$0xff]
    %v306 = vld [vmem:[#allocation2] sm:$0xff]
    %v307 = vld [vmem:[#allocation2 + $0x8] sm:$0xff]
    %v308 = vld [vmem:[#allocation3] sm:$0xff]
    %v309 = vld [vmem:[#allocation3 + $0x8] sm:$0xff]
    %v311 = vsel %vm13, %v306, 0
    %v314 = vsel %vm13, %v307, 0
    %316 = vmatprep.subr.mxu0 0.0
    %317 = vmatpush1.msra.mxu0 0.0
    %318 = vmatprep.subr.mxu0 0.0
    %319 = vmatpush1.msra.mxu0 0.0
    %320 = vmatprep.subr.mxu0 0.0
    %321 = vmatpush1.msra.mxu0 0.0
    %322 = vmatprep.subr.mxu0 0.0
    %323 = vmatpush1.msra.mxu0 0.0
    %324 = vmatprep.subr.mxu0 0.0
    %325 = vmatpush1.msra.mxu0 0.0
    %326 = vmatprep.subr.mxu0 0.0
    %327 = vmatpush1.msra.mxu0 0.0
    %328 = vmatprep.subr.mxu0 0.0
    %329 = vmatpush1.msra.mxu0 0.0
    %330 = vmatprep.subr.mxu0 0.0
    %331 = vmatpush1.msra.mxu0 0.0
    %332 = vmatprep.subr.mxu0 %v33
    %333 = vmatpush1.msra.mxu0 %v32
    %334 = vmatprep.subr.mxu0 %v31
    %335 = vmatpush1.msra.mxu0 %v30
    %336 = vmatprep.subr.mxu0 %v29
    %337 = vmatpush1.msra.mxu0 %v28
    %338 = vmatprep.subr.mxu0 %v27
    %339 = vmatpush1.msra.mxu0 %v26
    %340 = vmatprep.subr.mxu0 %v25
    %341 = vmatpush1.msra.mxu0 %v24
    %342 = vmatprep.subr.mxu0 %v23
    %343 = vmatpush1.msra.mxu0 %v22
    %344 = vmatprep.subr.mxu0 %v21
    %345 = vmatpush1.msra.mxu0 %v20
    %346 = vmatprep.subr.mxu0 %v19
    %347 = vmatpush1.msra.mxu0 %v18
    %348 = vmatprep.subr.mxu0 0.0
    %349 = vmatpush2.msra.mxu0 0.0
    %350 = vmatprep.subr.mxu0 0.0
    %351 = vmatpush2.msra.mxu0 0.0
    %352 = vmatprep.subr.mxu0 0.0
    %353 = vmatpush2.msra.mxu0 0.0
    %354 = vmatprep.subr.mxu0 0.0
    %355 = vmatpush2.msra.mxu0 0.0
    %356 = vmatprep.subr.mxu0 0.0
    %357 = vmatpush2.msra.mxu0 0.0
    %358 = vmatprep.subr.mxu0 0.0
    %359 = vmatpush2.msra.mxu0 0.0
    %360 = vmatprep.subr.mxu0 0.0
    %361 = vmatpush2.msra.mxu0 0.0
    %362 = vmatprep.subr.mxu0 0.0
    %363 = vmatpush2.msra.mxu0 0.0
    %364 = vmatprep.subr.mxu0 0.0
    %365 = vmatpush2.msra.mxu0 0.0
    %366 = vmatprep.subr.mxu0 0.0
    %367 = vmatpush2.msra.mxu0 0.0
    %368 = vmatprep.subr.mxu0 0.0
    %369 = vmatpush2.msra.mxu0 0.0
    %370 = vmatprep.subr.mxu0 0.0
    %371 = vmatpush2.msra.mxu0 0.0
    %372 = vmatprep.subr.mxu0 0.0
    %373 = vmatpush2.msra.mxu0 0.0
    %374 = vmatprep.subr.mxu0 0.0
    %375 = vmatpush2.msra.mxu0 0.0
    %376 = vmatprep.subr.mxu0 0.0
    %377 = vmatpush2.msra.mxu0 0.0
    %378 = vmatprep.subr.mxu0 0.0
    %379 = vmatpush2.msra.mxu0 0.0
    %380 = vmatprep.mubr.f32.mxu0 0.0
    %381 = vmatmul.mubr.f32.gmra.mxu0 %v311
    %v382 = vpop.f32.mrf.mxu0
    %v383 = vadd.f32 0.0, %v382
    %v384 = vpop.f32.mrf.mxu0
    %v385 = vadd.f32 0.0, %v384
    %386 = vmatprep.mubr.f32.mxu0 0.0
    %387 = vmatmul.mubr.f32.gmra.mxu0 %v314
    %v388 = vpop.f32.mrf.mxu0
    %v389 = vadd.f32 0.0, %v388
    %v390 = vpop.f32.mrf.mxu0
    %v391 = vadd.f32 0.0, %v390
    %392 = vdwg.mxu0
    %v393 = vadd.f32 %v299, %v383
    %v394 = vadd.f32 %v300, %v389
    %v395 = vadd.f32 %v304, %v385
    %v396 = vadd.f32 %v305, %v391
    %v397 = vxor.u32 %v393, 2147483648
    %v398 = vxor.u32 %v394, 2147483648
    %v399 = vmul.f32 %v397, 1.442695
    %v400 = vpow.pop %v399
    %v401 = vmul.f32 %v398, 1.442695
    %v402 = vpow.pop %v401
    %v403 = vadd.f32 %v400, 1.0
    %v404 = vadd.f32 %v402, 1.0
    %v405 = vrcp.pop %v403
    %v406 = vmul.f32 1.0, %v405
    %v407 = vrcp.pop %v404
    %v408 = vmul.f32 1.0, %v407
    %v409 = vtanh.pop %v393
    %v410 = vtanh.pop %v394
    %413 = vrot.lane.b32.xlu0 %v308, 32
    %v414 = vpop.permute.xlu0 %413
    %415 = vrot.lane.b32.xlu0 %v309, 32
    %v416 = vpop.permute.xlu0 %415
    %v419 = vmul.f32 %v406, %v414
    %v420 = vmul.f32 %v408, %v416
    %423 = vrot.lane.b32.xlu0 %v409, 32
    %v424 = vpop.permute.xlu0 %423
    %425 = vrot.lane.b32.xlu0 %v410, 32
    %v426 = vpop.permute.xlu0 %425
    %v429 = vmul.f32 %v406, %v424
    %v430 = vmul.f32 %v408, %v426
    %433 = vrot.lane.b32.xlu0 %v429, 32
    %v434 = vpop.permute.xlu0 %433
    %435 = vrot.lane.b32.xlu0 %v430, 32
    %v436 = vpop.permute.xlu0 %435
    %v439 = vadd.f32 %v419, %v434
    %v440 = vadd.f32 %v420, %v436
    %v441 = vtanh.pop %v439
    %v442 = vtanh.pop %v440
    %445 = vrot.lane.b32.xlu0 %v441, 32
    %v446 = vpop.permute.xlu0 %445
    %447 = vrot.lane.b32.xlu0 %v442, 32
    %v448 = vpop.permute.xlu0 %447
    %v451 = vmul.f32 %v406, %v446
    %v452 = vmul.f32 %v408, %v448
    %v453 = vxor.u32 %v395, 2147483648
    %v454 = vxor.u32 %v396, 2147483648
    %v455 = vmul.f32 %v453, 1.442695
    %v456 = vpow.pop %v455
    %v457 = vmul.f32 %v454, 1.442695
    %v458 = vpow.pop %v457
    %v459 = vadd.f32 %v456, 1.0
    %v460 = vadd.f32 %v458, 1.0
    %v461 = vrcp.pop %v459
    %v462 = vmul.f32 1.0, %v461
    %v463 = vrcp.pop %v460
    %v464 = vmul.f32 1.0, %v463
    %v465 = vtanh.pop %v395
    %v466 = vtanh.pop %v396
    %v467 = vmul.f32 %v462, %v308
    %v468 = vmul.f32 %v464, %v309
    %471 = vrot.lane.b32.xlu0 %v465, 32
    %v472 = vpop.permute.xlu0 %471
    %473 = vrot.lane.b32.xlu0 %v466, 32
    %v474 = vpop.permute.xlu0 %473
    %v477 = vmul.f32 %v462, %v472
    %v478 = vmul.f32 %v464, %v474
    %481 = vrot.lane.b32.xlu0 %v477, 32
    %v482 = vpop.permute.xlu0 %481
    %483 = vrot.lane.b32.xlu0 %v478, 32
    %v484 = vpop.permute.xlu0 %483
    %v487 = vadd.f32 %v467, %v482
    %v488 = vadd.f32 %v468, %v484
    %v489 = vtanh.pop %v487
    %v490 = vtanh.pop %v488
    %493 = vrot.lane.b32.xlu0 %v489, 32
    %v494 = vpop.permute.xlu0 %493
    %495 = vrot.lane.b32.xlu0 %v490, 32
    %v496 = vpop.permute.xlu0 %495
    %v499 = vmul.f32 %v462, %v494
    %v500 = vmul.f32 %v464, %v496
    %503 = vrot.lane.b32.xlu0 %v451, 64
    %v504 = vpop.permute.xlu0 %503
    %505 = vrot.lane.b32.xlu0 %v452, 64
    %v506 = vpop.permute.xlu0 %505
    %511 = vrot.lane.b32.xlu0 %v499, 96
    %v512 = vpop.permute.xlu0 %511
    %513 = vrot.lane.b32.xlu0 %v500, 96
    %v514 = vpop.permute.xlu0 %513
    %v517 = vsel %vm263, %v504, %v512
    %v518 = vsel %vm263, %v506, %v514
    %519 = vst.msk [vmem:[#allocation2] sm:$0xff] %vm13, %v517
    %520 = vst.msk [vmem:[#allocation2 + $0x8] sm:$0xff] %vm13, %v518
    %523 = vrot.lane.b32.xlu0 %v439, 96
    %v524 = vpop.permute.xlu0 %523
    %525 = vrot.lane.b32.xlu0 %v440, 96
    %v526 = vpop.permute.xlu0 %525
    %v529 = vsel %vm263, %v524, %v487
    %v530 = vsel %vm263, %v526, %v488
    %531 = vst.msk [vmem:[#allocation3] sm:$0xff] %vm13, %v529
    %532 = vst.msk [vmem:[#allocation3 + $0x8] sm:$0xff] %vm13, %v530
    %s533 = smul.u32 %s294, 16
    %s534 = scalar_lea.vmem %s2, %s533
    %535 = vst.msk [vmem:[%s534] sm:$0xff] %vm263, %v504
    %536 = vst.msk [vmem:[%s534 + $0x8] sm:$0xff] %vm263, %v506
    %537 = vrot.lane.b32.xlu0 %v499, 64
    %v538 = vpop.permute.xlu0 %537
    %539 = vrot.lane.b32.xlu0 %v500, 64
    %v540 = vpop.permute.xlu0 %539
    %s543 = smul.u32 %s295, 16
    %s544 = scalar_lea.vmem %s3, %s543
    %545 = vst.msk [vmem:[%s544] sm:$0xff] %vm263, %v538
    %546 = vst.msk [vmem:[%s544 + $0x8] sm:$0xff] %vm263, %v540
  $region14: #{gridnet_block_forward_pallas.6} parent=0 // loop_footer
    %s39 = sadd.s32 1, %s35
  $region15: #{gridnet_block_forward_pallas.6} parent=0 // loop_footer_branch
    %34 = sbr.rel target = $region11
  $region16: #{gridnet_block_forward_pallas.6} parent=0 // loop_exit
    _
  // Predicated region
  $region17: #{gridnet_block_forward_pallas.6} parent=0 // pred_check
    _
  $region18: #{gridnet_block_forward_pallas.6} parent=0 // pred_check_branch
    %548 = sbr.rel (0) target = $region20
  $region19: #{gridnet_block_forward_pallas.6} parent=0 // pred_region
    _
  $region20: #{gridnet_block_forward_pallas.6} parent=0 // pred_fallthru
    _
  // Predicated region
  $region21: #{gridnet_block_forward_pallas.6} parent=0 // pred_check
    _
  $region22: #{gridnet_block_forward_pallas.6} parent=0 // pred_check_branch
    %550 = sbr.rel (0) target = $region24
  $region23: #{gridnet_block_forward_pallas.6} parent=0 // pred_region
    _
  $region24: #{gridnet_block_forward_pallas.6} parent=0 // pred_fallthru
    _
  // Predicated region
  $region25: #{gridnet_block_forward_pallas.6} parent=0 // pred_check
    _
  $region26: #{gridnet_block_forward_pallas.6} parent=0 // pred_check_branch
    %552 = sbr.rel (0) target = $region28
  $region27: #{gridnet_block_forward_pallas.6} parent=0 // pred_region
    _
  $region28: #{gridnet_block_forward_pallas.6} parent=0 // pred_fallthru
    _
  // Predicated region
  $region29: #{gridnet_block_forward_pallas.6} parent=0 // pred_check
    _
  $region30: #{gridnet_block_forward_pallas.6} parent=0 // pred_check_branch
    %554 = sbr.rel (0) target = $region32
  $region31: #{gridnet_block_forward_pallas.6} parent=0 // pred_region
    _
  $region32: #{gridnet_block_forward_pallas.6} parent=0 // pred_fallthru
    _

// kernel: gridnet_block_forward_pallas.5
$region0: #{gridnet_block_forward_pallas.5}
  #allocation0 [shape = 'u32[]', space=smem, size = 0x4, offset = 0x4, fixed_abs, tag = 'smem constant byte address 0x4 - core index']
  #allocation1 [shape = 'u32[144,128]{1,0:T(1,128)}', space=vmem, size = 0x12000, scoped, tag = 'internal scratch']
  %s0 = inlined_call_operand.vmem [shape: f32[64,64], index: 0, kind: input, shape index: {}]
  %s1 = inlined_call_operand.vmem [shape: f32[64,64], index: 1, kind: input, shape index: {}]
  %s2 = inlined_call_operand.vmem [shape: f32[1,64], index: 2, kind: input, shape index: {}]
  %s3 = inlined_call_operand.vmem [shape: f32[1,64], index: 3, kind: input, shape index: {}]
  %s4 = inlined_call_operand.vmem [shape: f32[1,64], index: 4, kind: input, shape index: {}]
  %s5 = inlined_call_operand.vmem [shape: f32[1,64], index: 5, kind: input, shape index: {}]
  %s6 = inlined_call_operand.vmem [shape: f32[64,256], index: 6, kind: input, shape index: {}]
  %s7 = inlined_call_operand.vmem [shape: f32[1,256], index: 7, kind: input, shape index: {}]
  %s8 = inlined_call_operand.vmem [shape: f32[64,256], index: 8, kind: output, shape index: {}]
  %s9 = sld [smem:[#allocation0]]
  $region42: #{gridnet_block_forward_pallas.5} parent=0
    _
  %s11 = ssub.s32 1, %s9
  %s12 = scalar_select 0, %s11, %s9
  // Predicated region
  $region2: #{gridnet_block_forward_pallas.5} parent=0 // pred_check
    _
  $region3: #{gridnet_block_forward_pallas.5} parent=0 // pred_check_branch
    %14 = sbr.rel (0) target = $region5
  $region4: #{gridnet_block_forward_pallas.5} parent=0 // pred_region
    _
  $region5: #{gridnet_block_forward_pallas.5} parent=0 // pred_fallthru
    _
  // Predicated region
  $region6: #{gridnet_block_forward_pallas.5} parent=0 // pred_check
    _
  $region7: #{gridnet_block_forward_pallas.5} parent=0 // pred_check_branch
    %16 = sbr.rel (0) target = $region9
  $region8: #{gridnet_block_forward_pallas.5} parent=0 // pred_region
    _
  $region9: #{gridnet_block_forward_pallas.5} parent=0 // pred_fallthru
    _
  // Predicated region
  $region10: #{gridnet_block_forward_pallas.5} parent=0 // pred_check
    _
  $region11: #{gridnet_block_forward_pallas.5} parent=0 // pred_check_branch
    %18 = sbr.rel (0) target = $region13
  $region12: #{gridnet_block_forward_pallas.5} parent=0 // pred_region
    _
  $region13: #{gridnet_block_forward_pallas.5} parent=0 // pred_fallthru
    _
  // Predicated region
  $region14: #{gridnet_block_forward_pallas.5} parent=0 // pred_check
    _
  $region15: #{gridnet_block_forward_pallas.5} parent=0 // pred_check_branch
    %20 = sbr.rel (0) target = $region17
  $region16: #{gridnet_block_forward_pallas.5} parent=0 // pred_region
    _
  $region17: #{gridnet_block_forward_pallas.5} parent=0 // pred_fallthru
    _
  // Predicated region
  $region18: #{gridnet_block_forward_pallas.5} parent=0 // pred_check
    _
  $region19: #{gridnet_block_forward_pallas.5} parent=0 // pred_check_branch
    %22 = sbr.rel (0) target = $region21
  $region20: #{gridnet_block_forward_pallas.5} parent=0 // pred_region
    _
  $region21: #{gridnet_block_forward_pallas.5} parent=0 // pred_fallthru
    _
  // Predicated region
  $region22: #{gridnet_block_forward_pallas.5} parent=0 // pred_check
    _
  $region23: #{gridnet_block_forward_pallas.5} parent=0 // pred_check_branch
    %24 = sbr.rel (0) target = $region25
  $region24: #{gridnet_block_forward_pallas.5} parent=0 // pred_region
    _
  $region25: #{gridnet_block_forward_pallas.5} parent=0 // pred_fallthru
    _
  // Predicated region
  $region26: #{gridnet_block_forward_pallas.5} parent=0 // pred_check
    _
  $region27: #{gridnet_block_forward_pallas.5} parent=0 // pred_check_branch
    %26 = sbr.rel (0) target = $region29
  $region28: #{gridnet_block_forward_pallas.5} parent=0 // pred_region
    _
  $region29: #{gridnet_block_forward_pallas.5} parent=0 // pred_fallthru
    _
  // Predicated region
  $region30: #{gridnet_block_forward_pallas.5} parent=0 // pred_check
    _
  $region31: #{gridnet_block_forward_pallas.5} parent=0 // pred_check_branch
    %28 = sbr.rel (0) target = $region33
  $region32: #{gridnet_block_forward_pallas.5} parent=0 // pred_region
    _
  $region33: #{gridnet_block_forward_pallas.5} parent=0 // pred_fallthru
    _
  %v29 = vld [vmem:[%s0] sm:$0xff]
  %v30 = vld [vmem:[%s0 + $0x8] sm:$0xff]
  %v31 = vld [vmem:[%s0 + $0x10] sm:$0xff]
  %v32 = vld [vmem:[%s0 + $0x18] sm:$0xff]
  %v33 = vld [vmem:[%s0 + $0x20] sm:$0xff]
  %v34 = vld [vmem:[%s0 + $0x28] sm:$0xff]
  %v35 = vld [vmem:[%s0 + $0x30] sm:$0xff]
  %v36 = vld [vmem:[%s0 + $0x38] sm:$0xff]
  %v37 = vld [vmem:[%s1] sm:$0xff]
  %v38 = vld [vmem:[%s1 + $0x8] sm:$0xff]
  %v39 = vld [vmem:[%s1 + $0x10] sm:$0xff]
  %v40 = vld [vmem:[%s1 + $0x18] sm:$0xff]
  %v41 = vld [vmem:[%s1 + $0x20] sm:$0xff]
  %v42 = vld [vmem:[%s1 + $0x28] sm:$0xff]
  %v43 = vld [vmem:[%s1 + $0x30] sm:$0xff]
  %v44 = vld [vmem:[%s1 + $0x38] sm:$0xff]
  %v45 = vld [vmem:[%s2] sm:$0x1]
  %v47 = vlaneseq
  %v48 = vshrl.u32 %v47, 7
  %v49 = vsub.s32 0, %v48
  %v50 = vrot.slane %v45, %v49
  %vm52 = vcmask 523264
  %v54 = vsel %vm52, %v29, 0
  %v57 = vsel %vm52, %v30, 0
  %v60 = vsel %vm52, %v31, 0
  %v63 = vsel %vm52, %v32, 0
  %v66 = vsel %vm52, %v33, 0
  %v69 = vsel %vm52, %v34, 0
  %v72 = vsel %vm52, %v35, 0
  %v75 = vsel %vm52, %v36, 0
  %77 = vmatprep.subr.mxu0 0.0
  %78 = vmatpush1.msra.mxu0 0.0
  %79 = vmatprep.subr.mxu0 0.0
  %80 = vmatpush1.msra.mxu0 0.0
  %81 = vmatprep.subr.mxu0 0.0
  %82 = vmatpush1.msra.mxu0 0.0
  %83 = vmatprep.subr.mxu0 0.0
  %84 = vmatpush1.msra.mxu0 0.0
  %85 = vmatprep.subr.mxu0 0.0
  %86 = vmatpush1.msra.mxu0 0.0
  %87 = vmatprep.subr.mxu0 0.0
  %88 = vmatpush1.msra.mxu0 0.0
  %89 = vmatprep.subr.mxu0 0.0
  %90 = vmatpush1.msra.mxu0 0.0
  %91 = vmatprep.subr.mxu0 0.0
  %92 = vmatpush1.msra.mxu0 0.0
  %93 = vmatprep.subr.mxu0 0.0
  %94 = vmatpush1.msra.mxu0 %v44
  %95 = vmatprep.subr.mxu0 0.0
  %96 = vmatpush1.msra.mxu0 %v43
  %97 = vmatprep.subr.mxu0 0.0
  %98 = vmatpush1.msra.mxu0 %v42
  %99 = vmatprep.subr.mxu0 0.0
  %100 = vmatpush1.msra.mxu0 %v41
  %101 = vmatprep.subr.mxu0 0.0
  %102 = vmatpush1.msra.mxu0 %v40
  %103 = vmatprep.subr.mxu0 0.0
  %104 = vmatpush1.msra.mxu0 %v39
  %105 = vmatprep.subr.mxu0 0.0
  %106 = vmatpush1.msra.mxu0 %v38
  %107 = vmatprep.subr.mxu0 0.0
  %108 = vmatpush1.msra.mxu0 %v37
  %109 = vmatprep.subr.mxu0 0.0
  %110 = vmatpush2.msra.mxu0 0.0
  %111 = vmatprep.subr.mxu0 0.0
  %112 = vmatpush2.msra.mxu0 0.0
  %113 = vmatprep.subr.mxu0 0.0
  %114 = vmatpush2.msra.mxu0 0.0
  %115 = vmatprep.subr.mxu0 0.0
  %116 = vmatpush2.msra.mxu0 0.0
  %117 = vmatprep.subr.mxu0 0.0
  %118 = vmatpush2.msra.mxu0 0.0
  %119 = vmatprep.subr.mxu0 0.0
  %120 = vmatpush2.msra.mxu0 0.0
  %121 = vmatprep.subr.mxu0 0.0
  %122 = vmatpush2.msra.mxu0 0.0
  %123 = vmatprep.subr.mxu0 0.0
  %124 = vmatpush2.msra.mxu0 0.0
  %125 = vmatprep.subr.mxu0 0.0
  %126 = vmatpush2.msra.mxu0 0.0
  %127 = vmatprep.subr.mxu0 0.0
  %128 = vmatpush2.msra.mxu0 0.0
  %129 = vmatprep.subr.mxu0 0.0
  %130 = vmatpush2.msra.mxu0 0.0
  %131 = vmatprep.subr.mxu0 0.0
  %132 = vmatpush2.msra.mxu0 0.0
  %133 = vmatprep.subr.mxu0 0.0
  %134 = vmatpush2.msra.mxu0 0.0
  %135 = vmatprep.subr.mxu0 0.0
  %136 = vmatpush2.msra.mxu0 0.0
  %137 = vmatprep.subr.mxu0 0.0
  %138 = vmatpush2.msra.mxu0 0.0
  %139 = vmatprep.subr.mxu0 0.0
  %140 = vmatpush2.msra.mxu0 0.0
  %141 = vmatprep.mubr.f32.mxu0 0.0
  %142 = vmatmul.mubr.f32.gmra.mxu0 %v54
  %v143 = vpop.f32.mrf.mxu0
  %v144 = vadd.f32 %v50, %v143
  %v145 = vpop.f32.mrf.mxu0
  %146 = vmatprep.mubr.f32.mxu0 0.0
  %147 = vmatmul.mubr.f32.gmra.mxu0 %v57
  %v148 = vpop.f32.mrf.mxu0
  %v149 = vadd.f32 %v50, %v148
  %v150 = vpop.f32.mrf.mxu0
  %151 = vmatprep.mubr.f32.mxu0 0.0
  %152 = vmatmul.mubr.f32.gmra.mxu0 %v60
  %v153 = vpop.f32.mrf.mxu0
  %v154 = vadd.f32 %v50, %v153
  %v155 = vpop.f32.mrf.mxu0
  %156 = vmatprep.mubr.f32.mxu0 0.0
  %157 = vmatmul.mubr.f32.gmra.mxu0 %v63
  %v158 = vpop.f32.mrf.mxu0
  %v159 = vadd.f32 %v50, %v158
  %v160 = vpop.f32.mrf.mxu0
  %161 = vmatprep.mubr.f32.mxu0 0.0
  %162 = vmatmul.mubr.f32.gmra.mxu0 %v66
  %v163 = vpop.f32.mrf.mxu0
  %v164 = vadd.f32 %v50, %v163
  %v165 = vpop.f32.mrf.mxu0
  %166 = vmatprep.mubr.f32.mxu0 0.0
  %167 = vmatmul.mubr.f32.gmra.mxu0 %v69
  %v168 = vpop.f32.mrf.mxu0
  %v169 = vadd.f32 %v50, %v168
  %v170 = vpop.f32.mrf.mxu0
  %171 = vmatprep.mubr.f32.mxu0 0.0
  %172 = vmatmul.mubr.f32.gmra.mxu0 %v72
  %v173 = vpop.f32.mrf.mxu0
  %v174 = vadd.f32 %v50, %v173
  %v175 = vpop.f32.mrf.mxu0
  %176 = vmatprep.mubr.f32.mxu0 0.0
  %177 = vmatmul.mubr.f32.gmra.mxu0 %v75
  %v178 = vpop.f32.mrf.mxu0
  %v179 = vadd.f32 %v50, %v178
  %v180 = vpop.f32.mrf.mxu0
  %181 = vdwg.mxu0
  %vm182 = vcmp.ge.f32.partialorder %v144, 0.0
  %vm183 = vcmp.ge.f32.partialorder %v149, 0.0
  %vm184 = vcmp.ge.f32.partialorder %v154, 0.0
  %vm185 = vcmp.ge.f32.partialorder %v159, 0.0
  %vm186 = vcmp.ge.f32.partialorder %v164, 0.0
  %vm187 = vcmp.ge.f32.partialorder %v169, 0.0
  %vm188 = vcmp.ge.f32.partialorder %v174, 0.0
  %vm189 = vcmp.ge.f32.partialorder %v179, 0.0
  %v190 = vld [vmem:[%s3] sm:$0x1]
  %v192 = vlaneseq
  %v193 = vshrl.u32 %v192, 7
  %v194 = vsub.s32 0, %v193
  %v195 = vrot.slane %v190, %v194
  %v197 = vmul.f32 %v195, %v144
  %v198 = vmul.f32 %v195, %v149
  %v199 = vmul.f32 %v195, %v154
  %v200 = vmul.f32 %v195, %v159
  %v201 = vmul.f32 %v195, %v164
  %v202 = vmul.f32 %v195, %v169
  %v203 = vmul.f32 %v195, %v174
  %v204 = vmul.f32 %v195, %v179
  %v205 = vsel %vm182, %v144, %v197
  %v206 = vsel %vm183, %v149, %v198
  %v207 = vsel %vm184, %v154, %v199
  %v208 = vsel %vm185, %v159, %v200
  %v209 = vsel %vm186, %v164, %v201
  %v210 = vsel %vm187, %v169, %v202
  %v211 = vsel %vm188, %v174, %v203
  %v212 = vsel %vm189, %v179, %v204
  %v213 = vsel %vm52, %v205, 0.0
  %214 = vadd.xlane.f32.xlu0 %v213
  %v215 = vpop.xlane.xlu0 %214
  %v216 = vsel %vm52, %v206, 0.0
  %217 = vadd.xlane.f32.xlu0 %v216
  %v218 = vpop.xlane.xlu0 %217
  %v219 = vsel %vm52, %v207, 0.0
  %220 = vadd.xlane.f32.xlu0 %v219
  %v221 = vpop.xlane.xlu0 %220
  %v222 = vsel %vm52, %v208, 0.0
  %223 = vadd.xlane.f32.xlu0 %v222
  %v224 = vpop.xlane.xlu0 %223
  %v225 = vsel %vm52, %v209, 0.0
  %226 = vadd.xlane.f32.xlu0 %v225
  %v227 = vpop.xlane.xlu0 %226
  %v228 = vsel %vm52, %v210, 0.0
  %229 = vadd.xlane.f32.xlu0 %v228
  %v230 = vpop.xlane.xlu0 %229
  %v231 = vsel %vm52, %v211, 0.0
  %232 = vadd.xlane.f32.xlu0 %v231
  %v233 = vpop.xlane.xlu0 %232
  %v234 = vsel %vm52, %v212, 0.0
  %235 = vadd.xlane.f32.xlu0 %v234
  %v236 = vpop.xlane.xlu0 %235
  %v237 = vrcp.pop 64.0
  %v238 = vmul.f32 %v215, %v237
  %v239 = vmul.f32 %v218, %v237
  %v240 = vmul.f32 %v221, %v237
  %v241 = vmul.f32 %v224, %v237
  %v242 = vmul.f32 %v227, %v237
  %v243 = vmul.f32 %v230, %v237
  %v244 = vmul.f32 %v233, %v237
  %v245 = vmul.f32 %v236, %v237
  %v246 = vsub.f32 %v205, %v238
  %v247 = vsub.f32 %v206, %v239
  %v248 = vsub.f32 %v207, %v240
  %v249 = vsub.f32 %v208, %v241
  %v250 = vsub.f32 %v209, %v242
  %v251 = vsub.f32 %v210, %v243
  %v252 = vsub.f32 %v211, %v244
  %v253 = vsub.f32 %v212, %v245
  %v254 = vmul.f32 %v246, %v246
  %v255 = vmul.f32 %v247, %v247
  %v256 = vmul.f32 %v248, %v248
  %v257 = vmul.f32 %v249, %v249
  %v258 = vmul.f32 %v250, %v250
  %v259 = vmul.f32 %v251, %v251
  %v260 = vmul.f32 %v252, %v252
  %v261 = vmul.f32 %v253, %v253
  %v262 = vsel %vm52, %v254, 0.0
  %263 = vadd.xlane.f32.xlu0 %v262
  %v264 = vpop.xlane.xlu0 %263
  %v265 = vsel %vm52, %v255, 0.0
  %266 = vadd.xlane.f32.xlu0 %v265
  %v267 = vpop.xlane.xlu0 %266
  %v268 = vsel %vm52, %v256, 0.0
  %269 = vadd.xlane.f32.xlu0 %v268
  %v270 = vpop.xlane.xlu0 %269
  %v271 = vsel %vm52, %v257, 0.0
  %272 = vadd.xlane.f32.xlu0 %v271
  %v273 = vpop.xlane.xlu0 %272
  %v274 = vsel %vm52, %v258, 0.0
  %275 = vadd.xlane.f32.xlu0 %v274
  %v276 = vpop.xlane.xlu0 %275
  %v277 = vsel %vm52, %v259, 0.0
  %278 = vadd.xlane.f32.xlu0 %v277
  %v279 = vpop.xlane.xlu0 %278
  %v280 = vsel %vm52, %v260, 0.0
  %281 = vadd.xlane.f32.xlu0 %v280
  %v282 = vpop.xlane.xlu0 %281
  %v283 = vsel %vm52, %v261, 0.0
  %284 = vadd.xlane.f32.xlu0 %v283
  %v285 = vpop.xlane.xlu0 %284
  %v286 = vmul.f32 %v264, %v237
  %v287 = vmul.f32 %v267, %v237
  %v288 = vmul.f32 %v270, %v237
  %v289 = vmul.f32 %v273, %v237
  %v290 = vmul.f32 %v276, %v237
  %v291 = vmul.f32 %v279, %v237
  %v292 = vmul.f32 %v282, %v237
  %v293 = vmul.f32 %v285, %v237
  %v294 = vadd.f32 %v286, 1e-05
  %v295 = vadd.f32 %v287, 1e-05
  %v296 = vadd.f32 %v288, 1e-05
  %v297 = vadd.f32 %v289, 1e-05
  %v298 = vadd.f32 %v290, 1e-05
  %v299 = vadd.f32 %v291, 1e-05
  %v300 = vadd.f32 %v292, 1e-05
  %v301 = vadd.f32 %v293, 1e-05
  %v302 = vrsqrt.pop %v294
  %v303 = vrsqrt.pop %v295
  %v304 = vrsqrt.pop %v296
  %v305 = vrsqrt.pop %v297
  %v306 = vrsqrt.pop %v298
  %v307 = vrsqrt.pop %v299
  %v308 = vrsqrt.pop %v300
  %v309 = vrsqrt.pop %v301
  %v310 = vmul.f32 %v246, %v302
  %v311 = vmul.f32 %v247, %v303
  %v312 = vmul.f32 %v248, %v304
  %v313 = vmul.f32 %v249, %v305
  %v314 = vmul.f32 %v250, %v306
  %v315 = vmul.f32 %v251, %v307
  %v316 = vmul.f32 %v252, %v308
  %v317 = vmul.f32 %v253, %v309
  %v318 = vld [vmem:[%s4] sm:$0x1]
  %v320 = vlaneseq
  %v321 = vshrl.u32 %v320, 7
  %v322 = vsub.s32 0, %v321
  %v323 = vrot.slane %v318, %v322
  %v325 = vmul.f32 %v310, %v323
  %v326 = vmul.f32 %v311, %v323
  %v327 = vmul.f32 %v312, %v323
  %v328 = vmul.f32 %v313, %v323
  %v329 = vmul.f32 %v314, %v323
  %v330 = vmul.f32 %v315, %v323
  %v331 = vmul.f32 %v316, %v323
  %v332 = vmul.f32 %v317, %v323
  %v333 = vld [vmem:[%s5] sm:$0x1]
  %v335 = vlaneseq
  %v336 = vshrl.u32 %v335, 7
  %v337 = vsub.s32 0, %v336
  %v338 = vrot.slane %v333, %v337
  %v340 = vadd.f32 %v325, %v338
  %v341 = vadd.f32 %v326, %v338
  %v342 = vadd.f32 %v327, %v338
  %v343 = vadd.f32 %v328, %v338
  %v344 = vadd.f32 %v329, %v338
  %v345 = vadd.f32 %v330, %v338
  %v346 = vadd.f32 %v331, %v338
  %v347 = vadd.f32 %v332, %v338
  %v348 = vld [vmem:[%s6] sm:$0xff]
  %v349 = vld [vmem:[%s6 + $0x8] sm:$0xff]
  %v350 = vld [vmem:[%s6 + $0x10] sm:$0xff]
  %v351 = vld [vmem:[%s6 + $0x18] sm:$0xff]
  %v352 = vld [vmem:[%s6 + $0x20] sm:$0xff]
  %v353 = vld [vmem:[%s6 + $0x28] sm:$0xff]
  %v354 = vld [vmem:[%s6 + $0x30] sm:$0xff]
  %v355 = vld [vmem:[%s6 + $0x38] sm:$0xff]
  %v356 = vld [vmem:[%s6 + $0x40] sm:$0xff]
  %v357 = vld [vmem:[%s6 + $0x48] sm:$0xff]
  %v358 = vld [vmem:[%s6 + $0x50] sm:$0xff]
  %v359 = vld [vmem:[%s6 + $0x58] sm:$0xff]
  %v360 = vld [vmem:[%s6 + $0x60] sm:$0xff]
  %v361 = vld [vmem:[%s6 + $0x68] sm:$0xff]
  %v362 = vld [vmem:[%s6 + $0x70] sm:$0xff]
  %v363 = vld [vmem:[%s6 + $0x78] sm:$0xff]
  %v364 = vld [vmem:[%s7] sm:$0x3]
  %v366 = vlaneseq
  %v367 = vshrl.u32 %v366, 7
  %v368 = vsub.s32 0, %v367
  %v369 = vrot.slane %v364, %v368
  %v370 = vlaneseq
  %v371 = vshrl.u32 %v370, 7
  %v372 = vsub.s32 1, %v371
  %v373 = vrot.slane %v364, %v372
  %v377 = vsel %vm52, %v340, 0
  %v380 = vsel %vm52, %v341, 0
  %v383 = vsel %vm52, %v342, 0
  %v386 = vsel %vm52, %v343, 0
  %v389 = vsel %vm52, %v344, 0
  %v392 = vsel %vm52, %v345, 0
  %v395 = vsel %vm52, %v346, 0
  %v398 = vsel %vm52, %v347, 0
  %400 = vmatprep.subr.mxu0 0.0
  %401 = vmatpush1.msra.mxu0 0.0
  %402 = vmatprep.subr.mxu0 0.0
  %403 = vmatpush1.msra.mxu0 0.0
  %404 = vmatprep.subr.mxu0 0.0
  %405 = vmatpush1.msra.mxu0 0.0
  %406 = vmatprep.subr.mxu0 0.0
  %407 = vmatpush1.msra.mxu0 0.0
  %408 = vmatprep.subr.mxu0 0.0
  %409 = vmatpush1.msra.mxu0 0.0
  %410 = vmatprep.subr.mxu0 0.0
  %411 = vmatpush1.msra.mxu0 0.0
  %412 = vmatprep.subr.mxu0 0.0
  %413 = vmatpush1.msra.mxu0 0.0
  %414 = vmatprep.subr.mxu0 0.0
  %415 = vmatpush1.msra.mxu0 0.0
  %416 = vmatprep.subr.mxu0 %v363
  %417 = vmatpush1.msra.mxu0 %v362
  %418 = vmatprep.subr.mxu0 %v361
  %419 = vmatpush1.msra.mxu0 %v360
  %420 = vmatprep.subr.mxu0 %v359
  %421 = vmatpush1.msra.mxu0 %v358
  %422 = vmatprep.subr.mxu0 %v357
  %423 = vmatpush1.msra.mxu0 %v356
  %424 = vmatprep.subr.mxu0 %v355
  %425 = vmatpush1.msra.mxu0 %v354
  %426 = vmatprep.subr.mxu0 %v353
  %427 = vmatpush1.msra.mxu0 %v352
  %428 = vmatprep.subr.mxu0 %v351
  %429 = vmatpush1.msra.mxu0 %v350
  %430 = vmatprep.subr.mxu0 %v349
  %431 = vmatpush1.msra.mxu0 %v348
  %432 = vmatprep.subr.mxu0 0.0
  %433 = vmatpush2.msra.mxu0 0.0
  %434 = vmatprep.subr.mxu0 0.0
  %435 = vmatpush2.msra.mxu0 0.0
  %436 = vmatprep.subr.mxu0 0.0
  %437 = vmatpush2.msra.mxu0 0.0
  %438 = vmatprep.subr.mxu0 0.0
  %439 = vmatpush2.msra.mxu0 0.0
  %440 = vmatprep.subr.mxu0 0.0
  %441 = vmatpush2.msra.mxu0 0.0
  %442 = vmatprep.subr.mxu0 0.0
  %443 = vmatpush2.msra.mxu0 0.0
  %444 = vmatprep.subr.mxu0 0.0
  %445 = vmatpush2.msra.mxu0 0.0
  %446 = vmatprep.subr.mxu0 0.0
  %447 = vmatpush2.msra.mxu0 0.0
  %448 = vmatprep.subr.mxu0 0.0
  %449 = vmatpush2.msra.mxu0 0.0
  %450 = vmatprep.subr.mxu0 0.0
  %451 = vmatpush2.msra.mxu0 0.0
  %452 = vmatprep.subr.mxu0 0.0
  %453 = vmatpush2.msra.mxu0 0.0
  %454 = vmatprep.subr.mxu0 0.0
  %455 = vmatpush2.msra.mxu0 0.0
  %456 = vmatprep.subr.mxu0 0.0
  %457 = vmatpush2.msra.mxu0 0.0
  %458 = vmatprep.subr.mxu0 0.0
  %459 = vmatpush2.msra.mxu0 0.0
  %460 = vmatprep.subr.mxu0 0.0
  %461 = vmatpush2.msra.mxu0 0.0
  %462 = vmatprep.subr.mxu0 0.0
  %463 = vmatpush2.msra.mxu0 0.0
  %464 = vmatprep.mubr.f32.mxu0 0.0
  %465 = vmatmul.mubr.f32.gmra.mxu0 %v377
  %v466 = vpop.f32.mrf.mxu0
  %v467 = vadd.f32 %v369, %v466
  %v468 = vpop.f32.mrf.mxu0
  %v469 = vadd.f32 %v373, %v468
  %470 = vmatprep.mubr.f32.mxu0 0.0
  %471 = vmatmul.mubr.f32.gmra.mxu0 %v380
  %v472 = vpop.f32.mrf.mxu0
  %v473 = vadd.f32 %v369, %v472
  %v474 = vpop.f32.mrf.mxu0
  %v475 = vadd.f32 %v373, %v474
  %476 = vmatprep.mubr.f32.mxu0 0.0
  %477 = vmatmul.mubr.f32.gmra.mxu0 %v383
  %v478 = vpop.f32.mrf.mxu0
  %v479 = vadd.f32 %v369, %v478
  %v480 = vpop.f32.mrf.mxu0
  %v481 = vadd.f32 %v373, %v480
  %482 = vmatprep.mubr.f32.mxu0 0.0
  %483 = vmatmul.mubr.f32.gmra.mxu0 %v386
  %v484 = vpop.f32.mrf.mxu0
  %v485 = vadd.f32 %v369, %v484
  %v486 = vpop.f32.mrf.mxu0
  %v487 = vadd.f32 %v373, %v486
  %488 = vmatprep.mubr.f32.mxu0 0.0
  %489 = vmatmul.mubr.f32.gmra.mxu0 %v389
  %v490 = vpop.f32.mrf.mxu0
  %v491 = vadd.f32 %v369, %v490
  %v492 = vpop.f32.mrf.mxu0
  %v493 = vadd.f32 %v373, %v492
  %494 = vmatprep.mubr.f32.mxu0 0.0
  %495 = vmatmul.mubr.f32.gmra.mxu0 %v392
  %v496 = vpop.f32.mrf.mxu0
  %v497 = vadd.f32 %v369, %v496
  %v498 = vpop.f32.mrf.mxu0
  %v499 = vadd.f32 %v373, %v498
  %500 = vmatprep.mubr.f32.mxu0 0.0
  %501 = vmatmul.mubr.f32.gmra.mxu0 %v395
  %v502 = vpop.f32.mrf.mxu0
  %v503 = vadd.f32 %v369, %v502
  %v504 = vpop.f32.mrf.mxu0
  %v505 = vadd.f32 %v373, %v504
  %506 = vmatprep.mubr.f32.mxu0 0.0
  %507 = vmatmul.mubr.f32.gmra.mxu0 %v398
  %v508 = vpop.f32.mrf.mxu0
  %v509 = vadd.f32 %v369, %v508
  %v510 = vpop.f32.mrf.mxu0
  %v511 = vadd.f32 %v373, %v510
  %512 = vdwg.mxu0
  %513 = vst [vmem:[%s8] sm:$0xff] %v467
  %514 = vst [vmem:[%s8 + $0x8] sm:$0xff] %v469
  %515 = vst [vmem:[%s8 + $0x10] sm:$0xff] %v473
  %516 = vst [vmem:[%s8 + $0x18] sm:$0xff] %v475
  %517 = vst [vmem:[%s8 + $0x20] sm:$0xff] %v479
  %518 = vst [vmem:[%s8 + $0x28] sm:$0xff] %v481
  %519 = vst [vmem:[%s8 + $0x30] sm:$0xff] %v485
  %520 = vst [vmem:[%s8 + $0x38] sm:$0xff] %v487
  %521 = vst [vmem:[%s8 + $0x40] sm:$0xff] %v491
  %522 = vst [vmem:[%s8 + $0x48] sm:$0xff] %v493
  %523 = vst [vmem:[%s8 + $0x50] sm:$0xff] %v497
  %524 = vst [vmem:[%s8 + $0x58] sm:$0xff] %v499
  %525 = vst [vmem:[%s8 + $0x60] sm:$0xff] %v503
  %526 = vst [vmem:[%s8 + $0x68] sm:$0xff] %v505
  %527 = vst [vmem:[%s8 + $0x70] sm:$0xff] %v509
  %528 = vst [vmem:[%s8 + $0x78] sm:$0xff] %v511
  // Predicated region
  $region34: #{gridnet_block_forward_pallas.5} parent=0 // pred_check
    _
  $region35: #{gridnet_block_forward_pallas.5} parent=0 // pred_check_branch
    %530 = sbr.rel (0) target = $region37
  $region36: #{gridnet_block_forward_pallas.5} parent=0 // pred_region
    _
  $region37: #{gridnet_block_forward_pallas.5} parent=0 // pred_fallthru
    _
  // Predicated region
  $region38: #{gridnet_block_forward_pallas.5} parent=0 // pred_check
    _
  $region39: #{gridnet_block_forward_pallas.5} parent=0 // pred_check_branch
    %532 = sbr.rel (0) target = $region41
  $region40: #{gridnet_block_forward_pallas.5} parent=0 // pred_region
    _
  $region41: #{gridnet_block_forward_pallas.5} parent=0 // pred_fallthru
    _

// kernel: gridnet_block_forward_pallas.8
$region0: #{gridnet_block_forward_pallas.8}
  #allocation0 [shape = 'u32[]', space=smem, size = 0x4, offset = 0x4, fixed_abs, tag = 'smem constant byte address 0x4 - core index']
  #allocation1 [shape = 'u32[144,128]{1,0:T(1,128)}', space=vmem, size = 0x12000, scoped, tag = 'internal scratch']
  #allocation2 [shape = 'f32[32,32]{1,0:T(8,128)}', space=vmem, size = 0x4000, scoped, tag = 'scratch operand']
  #allocation3 [shape = 'f32[32,32]{1,0:T(8,128)}', space=vmem, size = 0x4000, scoped, tag = 'scratch operand']
  %s0 = inlined_call_operand.vmem [shape: f32[8,32,128], index: 0, kind: input, shape index: {}]
  %s1 = inlined_call_operand.vmem [shape: f32[32,128], index: 1, kind: input, shape index: {}]
  %s2 = inlined_call_operand.vmem [shape: f32[32,32], index: 2, kind: input, shape index: {}]
  %s3 = inlined_call_operand.vmem [shape: f32[32,32], index: 3, kind: input, shape index: {}]
  %s4 = inlined_call_operand.vmem [shape: f32[8,32,32], index: 4, kind: output, shape index: {0}]
  %s5 = inlined_call_operand.hbm [shape: f32[32,32], index: 5, kind: output, shape index: {1}]
  %s6 = inlined_call_operand.hbm [shape: f32[32,32], index: 6, kind: output, shape index: {2}]
  %7 = xla_tuple %s4, %s5, %s6
  %s8 = sld [smem:[#allocation0]]
  $region49: #{gridnet_block_forward_pallas.8} parent=0
    _
  %s10 = ssub.s32 1, %s8
  %s11 = scalar_select 0, %s10, %s8
  $region1: #{gridnet_block_forward_pallas.8} parent=0
    #allocation4 [shape = 'u8[16384]{0}', space=vmem, size = 0x4000, scoped, tag = 'output window, operand 1, single buffered']
    #allocation5 [shape = 's32[1]{0}', space=sflag, size = 0x4, scoped, tag = 'scoped memory for gridnet_block_forward_pallas.8']
    #allocation6 [shape = 'u8[16384]{0}', space=vmem, size = 0x4000, scoped, tag = 'output window, operand 2, single buffered']
    #allocation7 [shape = 's32[1]{0}', space=sflag, size = 0x4, scoped, tag = 'scoped memory for gridnet_block_forward_pallas.8']
    %12 = vsyncpa [#allocation5], 0
    %13 = vsyncpa [#allocation7], 0
    // Predicated region
    $region2: #{gridnet_block_forward_pallas.8} parent=1 // pred_check
      _
    $region3: #{gridnet_block_forward_pallas.8} parent=1 // pred_check_branch
      %15 = sbr.rel (0) target = $region5
    $region4: #{gridnet_block_forward_pallas.8} parent=1 // pred_region
      _
    $region5: #{gridnet_block_forward_pallas.8} parent=1 // pred_fallthru
      _
    // Predicated region
    $region6: #{gridnet_block_forward_pallas.8} parent=1 // pred_check
      _
    $region7: #{gridnet_block_forward_pallas.8} parent=1 // pred_check_branch
      %17 = sbr.rel (0) target = $region9
    $region8: #{gridnet_block_forward_pallas.8} parent=1 // pred_region
      _
    $region9: #{gridnet_block_forward_pallas.8} parent=1 // pred_fallthru
      _
    // Predicated region
    $region10: #{gridnet_block_forward_pallas.8} parent=1 // pred_check
      _
    $region11: #{gridnet_block_forward_pallas.8} parent=1 // pred_check_branch
      %19 = sbr.rel (0) target = $region13
    $region12: #{gridnet_block_forward_pallas.8} parent=1 // pred_region
      _
    $region13: #{gridnet_block_forward_pallas.8} parent=1 // pred_fallthru
      _
    // Predicated region
    $region14: #{gridnet_block_forward_pallas.8} parent=1 // pred_check
      _
    $region15: #{gridnet_block_forward_pallas.8} parent=1 // pred_check_branch
      %21 = sbr.rel (0) target = $region17
    $region16: #{gridnet_block_forward_pallas.8} parent=1 // pred_region
      _
    $region17: #{gridnet_block_forward_pallas.8} parent=1 // pred_fallthru
      _
    %v22 = vld [vmem:[%s2] sm:$0xff]
    %v23 = vld [vmem:[%s2 + $0x8] sm:$0xff]
    %v24 = vld [vmem:[%s2 + $0x10] sm:$0xff]
    %v25 = vld [vmem:[%s2 + $0x18] sm:$0xff]
    %vm26 = vcmask 261120
    %27 = vst.msk [vmem:[#allocation2] sm:$0xff] %vm26, %v22
    %28 = vst.msk [vmem:[#allocation2 + $0x8] sm:$0xff] %vm26, %v23
    %29 = vst.msk [vmem:[#allocation2 + $0x10] sm:$0xff] %vm26, %v24
    %30 = vst.msk [vmem:[#allocation2 + $0x18] sm:$0xff] %vm26, %v25
    %v31 = vld [vmem:[%s3] sm:$0xff]
    %v32 = vld [vmem:[%s3 + $0x8] sm:$0xff]
    %v33 = vld [vmem:[%s3 + $0x10] sm:$0xff]
    %v34 = vld [vmem:[%s3 + $0x18] sm:$0xff]
    %35 = vst.msk [vmem:[#allocation3] sm:$0xff] %vm26, %v31
    %36 = vst.msk [vmem:[#allocation3 + $0x8] sm:$0xff] %vm26, %v32
    %37 = vst.msk [vmem:[#allocation3 + $0x10] sm:$0xff] %vm26, %v33
    %38 = vst.msk [vmem:[#allocation3 + $0x18] sm:$0xff] %vm26, %v34
    %v39 = vld [vmem:[%s1] sm:$0xff]
    %v40 = vld [vmem:[%s1 + $0x8] sm:$0xff]
    %v41 = vld [vmem:[%s1 + $0x10] sm:$0xff]
    %v42 = vld [vmem:[%s1 + $0x18] sm:$0xff]
    loop: start=0, step=1, limit=4
    $region18: #{gridnet_block_forward_pallas.8} parent=1 // loop_pre_header
      _
    $region19: #{gridnet_block_forward_pallas.8} parent=1 // loop_header
      %s44 = sphi 0, %s48
      %p45 = scmp.ge.s32.totalorder %s44, 4
    $region20: #{gridnet_block_forward_pallas.8} parent=1 // loop_header_branch
      %47 = sbr.rel (%p45) target = $region24
    $region21: #{gridnet_block_forward_pallas.8} parent=1 // loop_body
      %s49 = smul.u32 %s44, 2
      %v50 = vld [vmem:[#allocation2] sm:$0xff]
      %v51 = vld [vmem:[#allocation2 + $0x8] sm:$0xff]
      %v52 = vld [vmem:[#allocation2 + $0x10] sm:$0xff]
      %v53 = vld [vmem:[#allocation2 + $0x18] sm:$0xff]
      %v54 = vld [vmem:[#allocation3] sm:$0xff]
      %v55 = vld [vmem:[#allocation3 + $0x8] sm:$0xff]
      %v56 = vld [vmem:[#allocation3 + $0x10] sm:$0xff]
      %v57 = vld [vmem:[#allocation3 + $0x18] sm:$0xff]
      %s58 = smul.u32 %s49, 32
      %s59 = scalar_lea.vmem %s0, %s58
      %v60 = vld [vmem:[%s59] sm:$0xff]
      %v61 = vld [vmem:[%s59 + $0x8] sm:$0xff]
      %v62 = vld [vmem:[%s59 + $0x10] sm:$0xff]
      %v63 = vld [vmem:[%s59 + $0x18] sm:$0xff]
      %v65 = vsel %vm26, %v50, 0
      %v68 = vsel %vm26, %v51, 0
      %v71 = vsel %vm26, %v52, 0
      %v74 = vsel %vm26, %v53, 0
      %76 = vmatprep.subr.mxu0 0.0
      %77 = vmatpush1.msra.mxu0 0.0
      %78 = vmatprep.subr.mxu0 0.0
      %79 = vmatpush1.msra.mxu0 0.0
      %80 = vmatprep.subr.mxu0 0.0
      %81 = vmatpush1.msra.mxu0 0.0
      %82 = vmatprep.subr.mxu0 0.0
      %83 = vmatpush1.msra.mxu0 0.0
      %84 = vmatprep.subr.mxu0 0.0
      %85 = vmatpush1.msra.mxu0 0.0
      %86 = vmatprep.subr.mxu0 0.0
      %87 = vmatpush1.msra.mxu0 0.0
      %88 = vmatprep.subr.mxu0 0.0
      %89 = vmatpush1.msra.mxu0 0.0
      %90 = vmatprep.subr.mxu0 0.0
      %91 = vmatpush1.msra.mxu0 0.0
      %92 = vmatprep.subr.mxu0 0.0
      %93 = vmatpush1.msra.mxu0 0.0
      %94 = vmatprep.subr.mxu0 0.0
      %95 = vmatpush1.msra.mxu0 0.0
      %96 = vmatprep.subr.mxu0 0.0
      %97 = vmatpush1.msra.mxu0 0.0
      %98 = vmatprep.subr.mxu0 0.0
      %99 = vmatpush1.msra.mxu0 0.0
      %100 = vmatprep.subr.mxu0 0.0
      %101 = vmatpush1.msra.mxu0 %v42
      %102 = vmatprep.subr.mxu0 0.0
      %103 = vmatpush1.msra.mxu0 %v41
      %104 = vmatprep.subr.mxu0 0.0
      %105 = vmatpush1.msra.mxu0 %v40
      %106 = vmatprep.subr.mxu0 0.0
      %107 = vmatpush1.msra.mxu0 %v39
      %108 = vmatprep.subr.mxu0 0.0
      %109 = vmatpush2.msra.mxu0 0.0
      %110 = vmatprep.subr.mxu0 0.0
      %111 = vmatpush2.msra.mxu0 0.0
      %112 = vmatprep.subr.mxu0 0.0
      %113 = vmatpush2.msra.mxu0 0.0
      %114 = vmatprep.subr.mxu0 0.0
      %115 = vmatpush2.msra.mxu0 0.0
      %116 = vmatprep.subr.mxu0 0.0
      %117 = vmatpush2.msra.mxu0 0.0
      %118 = vmatprep.subr.mxu0 0.0
      %119 = vmatpush2.msra.mxu0 0.0
      %120 = vmatprep.subr.mxu0 0.0
      %121 = vmatpush2.msra.mxu0 0.0
      %122 = vmatprep.subr.mxu0 0.0
      %123 = vmatpush2.msra.mxu0 0.0
      %124 = vmatprep.subr.mxu0 0.0
      %125 = vmatpush2.msra.mxu0 0.0
      %126 = vmatprep.subr.mxu0 0.0
      %127 = vmatpush2.msra.mxu0 0.0
      %128 = vmatprep.subr.mxu0 0.0
      %129 = vmatpush2.msra.mxu0 0.0
      %130 = vmatprep.subr.mxu0 0.0
      %131 = vmatpush2.msra.mxu0 0.0
      %132 = vmatprep.subr.mxu0 0.0
      %133 = vmatpush2.msra.mxu0 0.0
      %134 = vmatprep.subr.mxu0 0.0
      %135 = vmatpush2.msra.mxu0 0.0
      %136 = vmatprep.subr.mxu0 0.0
      %137 = vmatpush2.msra.mxu0 0.0
      %138 = vmatprep.subr.mxu0 0.0
      %139 = vmatpush2.msra.mxu0 0.0
      %140 = vmatprep.mubr.f32.mxu0 0.0
      %141 = vmatmul.mubr.f32.gmra.mxu0 %v65
      %v142 = vpop.f32.mrf.mxu0
      %v143 = vadd.f32 0.0, %v142
      %v144 = vpop.f32.mrf.mxu0
      %145 = vmatprep.mubr.f32.mxu0 0.0
      %146 = vmatmul.mubr.f32.gmra.mxu0 %v68
      %v147 = vpop.f32.mrf.mxu0
      %v148 = vadd.f32 0.0, %v147
      %v149 = vpop.f32.mrf.mxu0
      %150 = vmatprep.mubr.f32.mxu0 0.0
      %151 = vmatmul.mubr.f32.gmra.mxu0 %v71
      %v152 = vpop.f32.mrf.mxu0
      %v153 = vadd.f32 0.0, %v152
      %v154 = vpop.f32.mrf.mxu0
      %155 = vmatprep.mubr.f32.mxu0 0.0
      %156 = vmatmul.mubr.f32.gmra.mxu0 %v74
      %v157 = vpop.f32.mrf.mxu0
      %v158 = vadd.f32 0.0, %v157
      %v159 = vpop.f32.mrf.mxu0
      %160 = vdwg.mxu0
      %v161 = vadd.f32 %v60, %v143
      %v162 = vadd.f32 %v61, %v148
      %v163 = vadd.f32 %v62, %v153
      %v164 = vadd.f32 %v63, %v158
      %v165 = vxor.u32 %v161, 2147483648
      %v166 = vxor.u32 %v162, 2147483648
      %v167 = vxor.u32 %v163, 2147483648
      %v168 = vxor.u32 %v164, 2147483648
      %v169 = vmul.f32 %v165, 1.442695
      %v170 = vpow.pop %v169
      %v171 = vmul.f32 %v166, 1.442695
      %v172 = vpow.pop %v171
      %v173 = vmul.f32 %v167, 1.442695
      %v174 = vpow.pop %v173
      %v175 = vmul.f32 %v168, 1.442695
      %v176 = vpow.pop %v175
      %v177 = vadd.f32 %v170, 1.0
      %v178 = vadd.f32 %v172, 1.0
      %v179 = vadd.f32 %v174, 1.0
      %v180 = vadd.f32 %v176, 1.0
      %v181 = vrcp.pop %v177
      %v182 = vmul.f32 1.0, %v181
      %v183 = vrcp.pop %v178
      %v184 = vmul.f32 1.0, %v183
      %v185 = vrcp.pop %v179
      %v186 = vmul.f32 1.0, %v185
      %v187 = vrcp.pop %v180
      %v188 = vmul.f32 1.0, %v187
      %v189 = vtanh.pop %v161
      %v190 = vtanh.pop %v162
      %v191 = vtanh.pop %v163
      %v192 = vtanh.pop %v164
      %197 = vrot.lane.b32.xlu0 %v54, 32
      %v198 = vpop.permute.xlu0 %197
      %199 = vrot.lane.b32.xlu0 %v55, 32
      %v200 = vpop.permute.xlu0 %199
      %201 = vrot.lane.b32.xlu0 %v56, 32
      %v202 = vpop.permute.xlu0 %201
      %203 = vrot.lane.b32.xlu0 %v57, 32
      %v204 = vpop.permute.xlu0 %203
      %v209 = vmul.f32 %v182, %v198
      %v210 = vmul.f32 %v184, %v200
      %v211 = vmul.f32 %v186, %v202
      %v212 = vmul.f32 %v188, %v204
      %217 = vrot.lane.b32.xlu0 %v189, 32
      %v218 = vpop.permute.xlu0 %217
      %219 = vrot.lane.b32.xlu0 %v190, 32
      %v220 = vpop.permute.xlu0 %219
      %221 = vrot.lane.b32.xlu0 %v191, 32
      %v222 = vpop.permute.xlu0 %221
      %223 = vrot.lane.b32.xlu0 %v192, 32
      %v224 = vpop.permute.xlu0 %223
      %v229 = vmul.f32 %v182, %v218
      %v230 = vmul.f32 %v184, %v220
      %v231 = vmul.f32 %v186, %v222
      %v232 = vmul.f32 %v188, %v224
      %237 = vrot.lane.b32.xlu0 %v229, 32
      %v238 = vpop.permute.xlu0 %237
      %239 = vrot.lane.b32.xlu0 %v230, 32
      %v240 = vpop.permute.xlu0 %239
      %241 = vrot.lane.b32.xlu0 %v231, 32
      %v242 = vpop.permute.xlu0 %241
      %243 = vrot.lane.b32.xlu0 %v232, 32
      %v244 = vpop.permute.xlu0 %243
      %v249 = vadd.f32 %v209, %v238
      %v250 = vadd.f32 %v210, %v240
      %v251 = vadd.f32 %v211, %v242
      %v252 = vadd.f32 %v212, %v244
      %v253 = vtanh.pop %v249
      %v254 = vtanh.pop %v250
      %v255 = vtanh.pop %v251
      %v256 = vtanh.pop %v252
      %261 = vrot.lane.b32.xlu0 %v253, 32
      %v262 = vpop.permute.xlu0 %261
      %263 = vrot.lane.b32.xlu0 %v254, 32
      %v264 = vpop.permute.xlu0 %263
      %265 = vrot.lane.b32.xlu0 %v255, 32
      %v266 = vpop.permute.xlu0 %265
      %267 = vrot.lane.b32.xlu0 %v256, 32
      %v268 = vpop.permute.xlu0 %267
      %v273 = vmul.f32 %v182, %v262
      %v274 = vmul.f32 %v184, %v264
      %v275 = vmul.f32 %v186, %v266
      %v276 = vmul.f32 %v188, %v268
      %281 = vrot.lane.b32.xlu0 %v273, 64
      %v282 = vpop.permute.xlu0 %281
      %283 = vrot.lane.b32.xlu0 %v274, 64
      %v284 = vpop.permute.xlu0 %283
      %285 = vrot.lane.b32.xlu0 %v275, 64
      %v286 = vpop.permute.xlu0 %285
      %287 = vrot.lane.b32.xlu0 %v276, 64
      %v288 = vpop.permute.xlu0 %287
      %293 = vst.msk [vmem:[#allocation2] sm:$0xff] %vm26, %v282
      %294 = vst.msk [vmem:[#allocation2 + $0x8] sm:$0xff] %vm26, %v284
      %295 = vst.msk [vmem:[#allocation2 + $0x10] sm:$0xff] %vm26, %v286
      %296 = vst.msk [vmem:[#allocation2 + $0x18] sm:$0xff] %vm26, %v288
      %301 = vrot.lane.b32.xlu0 %v249, 96
      %v302 = vpop.permute.xlu0 %301
      %303 = vrot.lane.b32.xlu0 %v250, 96
      %v304 = vpop.permute.xlu0 %303
      %305 = vrot.lane.b32.xlu0 %v251, 96
      %v306 = vpop.permute.xlu0 %305
      %307 = vrot.lane.b32.xlu0 %v252, 96
      %v308 = vpop.permute.xlu0 %307
      %313 = vst.msk [vmem:[#allocation3] sm:$0xff] %vm26, %v302
      %314 = vst.msk [vmem:[#allocation3 + $0x8] sm:$0xff] %vm26, %v304
      %315 = vst.msk [vmem:[#allocation3 + $0x10] sm:$0xff] %vm26, %v306
      %316 = vst.msk [vmem:[#allocation3 + $0x18] sm:$0xff] %vm26, %v308
      %s317 = scalar_lea.vmem %s4, %s58
      %318 = vst.msk [vmem:[%s317] sm:$0xff] %vm26, %v282
      %319 = vst.msk [vmem:[%s317 + $0x8] sm:$0xff] %vm26, %v284
      %320 = vst.msk [vmem:[%s317 + $0x10] sm:$0xff] %vm26, %v286
      %321 = vst.msk [vmem:[%s317 + $0x18] sm:$0xff] %vm26, %v288
      %s322 = sadd.s32 %s49, 1
      %v323 = vld [vmem:[#allocation2] sm:$0xff]
      %v324 = vld [vmem:[#allocation2 + $0x8] sm:$0xff]
      %v325 = vld [vmem:[#allocation2 + $0x10] sm:$0xff]
      %v326 = vld [vmem:[#allocation2 + $0x18] sm:$0xff]
      %v327 = vld [vmem:[#allocation3] sm:$0xff]
      %v328 = vld [vmem:[#allocation3 + $0x8] sm:$0xff]
      %v329 = vld [vmem:[#allocation3 + $0x10] sm:$0xff]
      %v330 = vld [vmem:[#allocation3 + $0x18] sm:$0xff]
      %s331 = smul.u32 %s322, 32
      %s332 = scalar_lea.vmem %s0, %s331
      %v333 = vld [vmem:[%s332] sm:$0xff]
      %v334 = vld [vmem:[%s332 + $0x8] sm:$0xff]
      %v335 = vld [vmem:[%s332 + $0x10] sm:$0xff]
      %v336 = vld [vmem:[%s332 + $0x18] sm:$0xff]
      %v338 = vsel %vm26, %v323, 0
      %v341 = vsel %vm26, %v324, 0
      %v344 = vsel %vm26, %v325, 0
      %v347 = vsel %vm26, %v326, 0
      %349 = vmatprep.subr.mxu0 0.0
      %350 = vmatpush1.msra.mxu0 0.0
      %351 = vmatprep.subr.mxu0 0.0
      %352 = vmatpush1.msra.mxu0 0.0
      %353 = vmatprep.subr.mxu0 0.0
      %354 = vmatpush1.msra.mxu0 0.0
      %355 = vmatprep.subr.mxu0 0.0
      %356 = vmatpush1.msra.mxu0 0.0
      %357 = vmatprep.subr.mxu0 0.0
      %358 = vmatpush1.msra.mxu0 0.0
      %359 = vmatprep.subr.mxu0 0.0
      %360 = vmatpush1.msra.mxu0 0.0
      %361 = vmatprep.subr.mxu0 0.0
      %362 = vmatpush1.msra.mxu0 0.0
      %363 = vmatprep.subr.mxu0 0.0
      %364 = vmatpush1.msra.mxu0 0.0
      %365 = vmatprep.subr.mxu0 0.0
      %366 = vmatpush1.msra.mxu0 0.0
      %367 = vmatprep.subr.mxu0 0.0
      %368 = vmatpush1.msra.mxu0 0.0
      %369 = vmatprep.subr.mxu0 0.0
      %370 = vmatpush1.msra.mxu0 0.0
      %371 = vmatprep.subr.mxu0 0.0
      %372 = vmatpush1.msra.mxu0 0.0
      %373 = vmatprep.subr.mxu0 0.0
      %374 = vmatpush1.msra.mxu0 %v42
      %375 = vmatprep.subr.mxu0 0.0
      %376 = vmatpush1.msra.mxu0 %v41
      %377 = vmatprep.subr.mxu0 0.0
      %378 = vmatpush1.msra.mxu0 %v40
      %379 = vmatprep.subr.mxu0 0.0
      %380 = vmatpush1.msra.mxu0 %v39
      %381 = vmatprep.subr.mxu0 0.0
      %382 = vmatpush2.msra.mxu0 0.0
      %383 = vmatprep.subr.mxu0 0.0
      %384 = vmatpush2.msra.mxu0 0.0
      %385 = vmatprep.subr.mxu0 0.0
      %386 = vmatpush2.msra.mxu0 0.0
      %387 = vmatprep.subr.mxu0 0.0
      %388 = vmatpush2.msra.mxu0 0.0
      %389 = vmatprep.subr.mxu0 0.0
      %390 = vmatpush2.msra.mxu0 0.0
      %391 = vmatprep.subr.mxu0 0.0
      %392 = vmatpush2.msra.mxu0 0.0
      %393 = vmatprep.subr.mxu0 0.0
      %394 = vmatpush2.msra.mxu0 0.0
      %395 = vmatprep.subr.mxu0 0.0
      %396 = vmatpush2.msra.mxu0 0.0
      %397 = vmatprep.subr.mxu0 0.0
      %398 = vmatpush2.msra.mxu0 0.0
      %399 = vmatprep.subr.mxu0 0.0
      %400 = vmatpush2.msra.mxu0 0.0
      %401 = vmatprep.subr.mxu0 0.0
      %402 = vmatpush2.msra.mxu0 0.0
      %403 = vmatprep.subr.mxu0 0.0
      %404 = vmatpush2.msra.mxu0 0.0
      %405 = vmatprep.subr.mxu0 0.0
      %406 = vmatpush2.msra.mxu0 0.0
      %407 = vmatprep.subr.mxu0 0.0
      %408 = vmatpush2.msra.mxu0 0.0
      %409 = vmatprep.subr.mxu0 0.0
      %410 = vmatpush2.msra.mxu0 0.0
      %411 = vmatprep.subr.mxu0 0.0
      %412 = vmatpush2.msra.mxu0 0.0
      %413 = vmatprep.mubr.f32.mxu0 0.0
      %414 = vmatmul.mubr.f32.gmra.mxu0 %v338
      %v415 = vpop.f32.mrf.mxu0
      %v416 = vadd.f32 0.0, %v415
      %v417 = vpop.f32.mrf.mxu0
      %418 = vmatprep.mubr.f32.mxu0 0.0
      %419 = vmatmul.mubr.f32.gmra.mxu0 %v341
      %v420 = vpop.f32.mrf.mxu0
      %v421 = vadd.f32 0.0, %v420
      %v422 = vpop.f32.mrf.mxu0
      %423 = vmatprep.mubr.f32.mxu0 0.0
      %424 = vmatmul.mubr.f32.gmra.mxu0 %v344
      %v425 = vpop.f32.mrf.mxu0
      %v426 = vadd.f32 0.0, %v425
      %v427 = vpop.f32.mrf.mxu0
      %428 = vmatprep.mubr.f32.mxu0 0.0
      %429 = vmatmul.mubr.f32.gmra.mxu0 %v347
      %v430 = vpop.f32.mrf.mxu0
      %v431 = vadd.f32 0.0, %v430
      %v432 = vpop.f32.mrf.mxu0
      %433 = vdwg.mxu0
      %v434 = vadd.f32 %v333, %v416
      %v435 = vadd.f32 %v334, %v421
      %v436 = vadd.f32 %v335, %v426
      %v437 = vadd.f32 %v336, %v431
      %v438 = vxor.u32 %v434, 2147483648
      %v439 = vxor.u32 %v435, 2147483648
      %v440 = vxor.u32 %v436, 2147483648
      %v441 = vxor.u32 %v437, 2147483648
      %v442 = vmul.f32 %v438, 1.442695
      %v443 = vpow.pop %v442
      %v444 = vmul.f32 %v439, 1.442695
      %v445 = vpow.pop %v444
      %v446 = vmul.f32 %v440, 1.442695
      %v447 = vpow.pop %v446
      %v448 = vmul.f32 %v441, 1.442695
      %v449 = vpow.pop %v448
      %v450 = vadd.f32 %v443, 1.0
      %v451 = vadd.f32 %v445, 1.0
      %v452 = vadd.f32 %v447, 1.0
      %v453 = vadd.f32 %v449, 1.0
      %v454 = vrcp.pop %v450
      %v455 = vmul.f32 1.0, %v454
      %v456 = vrcp.pop %v451
      %v457 = vmul.f32 1.0, %v456
      %v458 = vrcp.pop %v452
      %v459 = vmul.f32 1.0, %v458
      %v460 = vrcp.pop %v453
      %v461 = vmul.f32 1.0, %v460
      %v462 = vtanh.pop %v434
      %v463 = vtanh.pop %v435
      %v464 = vtanh.pop %v436
      %v465 = vtanh.pop %v437
      %470 = vrot.lane.b32.xlu0 %v327, 32
      %v471 = vpop.permute.xlu0 %470
      %472 = vrot.lane.b32.xlu0 %v328, 32
      %v473 = vpop.permute.xlu0 %472
      %474 = vrot.lane.b32.xlu0 %v329, 32
      %v475 = vpop.permute.xlu0 %474
      %476 = vrot.lane.b32.xlu0 %v330, 32
      %v477 = vpop.permute.xlu0 %476
      %v482 = vmul.f32 %v455, %v471
      %v483 = vmul.f32 %v457, %v473
      %v484 = vmul.f32 %v459, %v475
      %v485 = vmul.f32 %v461, %v477
      %490 = vrot.lane.b32.xlu0 %v462, 32
      %v491 = vpop.permute.xlu0 %490
      %492 = vrot.lane.b32.xlu0 %v463, 32
      %v493 = vpop.permute.xlu0 %492
      %494 = vrot.lane.b32.xlu0 %v464, 32
      %v495 = vpop.permute.xlu0 %494
      %496 = vrot.lane.b32.xlu0 %v465, 32
      %v497 = vpop.permute.xlu0 %496
      %v502 = vmul.f32 %v455, %v491
      %v503 = vmul.f32 %v457, %v493
      %v504 = vmul.f32 %v459, %v495
      %v505 = vmul.f32 %v461, %v497
      %510 = vrot.lane.b32.xlu0 %v502, 32
      %v511 = vpop.permute.xlu0 %510
      %512 = vrot.lane.b32.xlu0 %v503, 32
      %v513 = vpop.permute.xlu0 %512
      %514 = vrot.lane.b32.xlu0 %v504, 32
      %v515 = vpop.permute.xlu0 %514
      %516 = vrot.lane.b32.xlu0 %v505, 32
      %v517 = vpop.permute.xlu0 %516
      %v522 = vadd.f32 %v482, %v511
      %v523 = vadd.f32 %v483, %v513
      %v524 = vadd.f32 %v484, %v515
      %v525 = vadd.f32 %v485, %v517
      %v526 = vtanh.pop %v522
      %v527 = vtanh.pop %v523
      %v528 = vtanh.pop %v524
      %v529 = vtanh.pop %v525
      %534 = vrot.lane.b32.xlu0 %v526, 32
      %v535 = vpop.permute.xlu0 %534
      %536 = vrot.lane.b32.xlu0 %v527, 32
      %v537 = vpop.permute.xlu0 %536
      %538 = vrot.lane.b32.xlu0 %v528, 32
      %v539 = vpop.permute.xlu0 %538
      %540 = vrot.lane.b32.xlu0 %v529, 32
      %v541 = vpop.permute.xlu0 %540
      %v546 = vmul.f32 %v455, %v535
      %v547 = vmul.f32 %v457, %v537
      %v548 = vmul.f32 %v459, %v539
      %v549 = vmul.f32 %v461, %v541
      %554 = vrot.lane.b32.xlu0 %v546, 64
      %v555 = vpop.permute.xlu0 %554
      %556 = vrot.lane.b32.xlu0 %v547, 64
      %v557 = vpop.permute.xlu0 %556
      %558 = vrot.lane.b32.xlu0 %v548, 64
      %v559 = vpop.permute.xlu0 %558
      %560 = vrot.lane.b32.xlu0 %v549, 64
      %v561 = vpop.permute.xlu0 %560
      %566 = vst.msk [vmem:[#allocation2] sm:$0xff] %vm26, %v555
      %567 = vst.msk [vmem:[#allocation2 + $0x8] sm:$0xff] %vm26, %v557
      %568 = vst.msk [vmem:[#allocation2 + $0x10] sm:$0xff] %vm26, %v559
      %569 = vst.msk [vmem:[#allocation2 + $0x18] sm:$0xff] %vm26, %v561
      %574 = vrot.lane.b32.xlu0 %v522, 96
      %v575 = vpop.permute.xlu0 %574
      %576 = vrot.lane.b32.xlu0 %v523, 96
      %v577 = vpop.permute.xlu0 %576
      %578 = vrot.lane.b32.xlu0 %v524, 96
      %v579 = vpop.permute.xlu0 %578
      %580 = vrot.lane.b32.xlu0 %v525, 96
      %v581 = vpop.permute.xlu0 %580
      %586 = vst.msk [vmem:[#allocation3] sm:$0xff] %vm26, %v575
      %587 = vst.msk [vmem:[#allocation3 + $0x8] sm:$0xff] %vm26, %v577
      %588 = vst.msk [vmem:[#allocation3 + $0x10] sm:$0xff] %vm26, %v579
      %589 = vst.msk [vmem:[#allocation3 + $0x18] sm:$0xff] %vm26, %v581
      %s590 = scalar_lea.vmem %s4, %s331
      %591 = vst.msk [vmem:[%s590] sm:$0xff] %vm26, %v555
      %592 = vst.msk [vmem:[%s590 + $0x8] sm:$0xff] %vm26, %v557
      %593 = vst.msk [vmem:[%s590 + $0x10] sm:$0xff] %vm26, %v559
      %594 = vst.msk [vmem:[%s590 + $0x18] sm:$0xff] %vm26, %v561
    $region22: #{gridnet_block_forward_pallas.8} parent=1 // loop_footer
      %s48 = sadd.s32 1, %s44
    $region23: #{gridnet_block_forward_pallas.8} parent=1 // loop_footer_branch
      %43 = sbr.rel target = $region19
    $region24: #{gridnet_block_forward_pallas.8} parent=1 // loop_exit
      _
    %v595 = vld [vmem:[#allocation2] sm:$0xff]
    %v596 = vld [vmem:[#allocation2 + $0x8] sm:$0xff]
    %v597 = vld [vmem:[#allocation2 + $0x10] sm:$0xff]
    %v598 = vld [vmem:[#allocation2 + $0x18] sm:$0xff]
    %599 = vst.msk [vmem:[#allocation4] sm:$0xff] %vm26, %v595
    %600 = vst.msk [vmem:[#allocation4 + $0x8] sm:$0xff] %vm26, %v596
    %601 = vst.msk [vmem:[#allocation4 + $0x10] sm:$0xff] %vm26, %v597
    %602 = vst.msk [vmem:[#allocation4 + $0x18] sm:$0xff] %vm26, %v598
    %v603 = vld [vmem:[#allocation3] sm:$0xff]
    %v604 = vld [vmem:[#allocation3 + $0x8] sm:$0xff]
    %v605 = vld [vmem:[#allocation3 + $0x10] sm:$0xff]
    %v606 = vld [vmem:[#allocation3 + $0x18] sm:$0xff]
    %607 = vst.msk [vmem:[#allocation6] sm:$0xff] %vm26, %v603
    %608 = vst.msk [vmem:[#allocation6 + $0x8] sm:$0xff] %vm26, %v604
    %609 = vst.msk [vmem:[#allocation6 + $0x10] sm:$0xff] %vm26, %v605
    %610 = vst.msk [vmem:[#allocation6 + $0x18] sm:$0xff] %vm26, %v606
    // Predicated region
    $region25: #{gridnet_block_forward_pallas.8} parent=1 // pred_check
      _
    $region26: #{gridnet_block_forward_pallas.8} parent=1 // pred_check_branch
      %612 = sbr.rel (0) target = $region28
    $region27: #{gridnet_block_forward_pallas.8} parent=1 // pred_region
      _
    $region28: #{gridnet_block_forward_pallas.8} parent=1 // pred_fallthru
      _
    // Predicated region
    $region29: #{gridnet_block_forward_pallas.8} parent=1 // pred_check
      _
    $region30: #{gridnet_block_forward_pallas.8} parent=1 // pred_check_branch
      %614 = sbr.rel (0) target = $region32
    $region31: #{gridnet_block_forward_pallas.8} parent=1 // pred_region
      %s616 = ssub.s32 512, 512
      %617 = vsyncadd [#allocation5], %s616
      %s618 = sshll.u32 [#allocation4], 4
      %s619 = int_to_ptr.vmem [resolvable:$true] %s618
      %624 = dma.vmem_to_hbm [thread:$0]  %s619, 512, %s5, [#allocation5], 128, 128, 8
    $region32: #{gridnet_block_forward_pallas.8} parent=1 // pred_fallthru
      _
    // Predicated region
    $region33: #{gridnet_block_forward_pallas.8} parent=1 // pred_check
      _
    $region34: #{gridnet_block_forward_pallas.8} parent=1 // pred_check_branch
      %626 = sbr.rel (0) target = $region36
    $region35: #{gridnet_block_forward_pallas.8} parent=1 // pred_region
      %s628 = ssub.s32 512, 512
      %629 = vsyncadd [#allocation7], %s628
      %s630 = sshll.u32 [#allocation6], 4
      %s631 = int_to_ptr.vmem [resolvable:$true] %s630
      %636 = dma.vmem_to_hbm [thread:$0]  %s631, 512, %s6, [#allocation7], 128, 128, 8
    $region36: #{gridnet_block_forward_pallas.8} parent=1 // pred_fallthru
      _
    // Predicated region
    $region37: #{gridnet_block_forward_pallas.8} parent=1 // pred_check
      _
    $region38: #{gridnet_block_forward_pallas.8} parent=1 // pred_check_branch
      %638 = sbr.rel (0) target = $region40
    $region39: #{gridnet_block_forward_pallas.8} parent=1 // pred_region
      _
    $region40: #{gridnet_block_forward_pallas.8} parent=1 // pred_fallthru
      _
    // Predicated region
    $region41: #{gridnet_block_forward_pallas.8} parent=1 // pred_check
      _
    $region42: #{gridnet_block_forward_pallas.8} parent=1 // pred_check_branch
      %640 = sbr.rel (0) target = $region44
    $region43: #{gridnet_block_forward_pallas.8} parent=1 // pred_region
      %641 = dma.done [#allocation5], 512
    $region44: #{gridnet_block_forward_pallas.8} parent=1 // pred_fallthru
      _
    // Predicated region
    $region45: #{gridnet_block_forward_pallas.8} parent=1 // pred_check
      _
    $region46: #{gridnet_block_forward_pallas.8} parent=1 // pred_check_branch
      %643 = sbr.rel (0) target = $region48
    $region47: #{gridnet_block_forward_pallas.8} parent=1 // pred_region
      %644 = dma.done [#allocation7], 512
    $region48: #{gridnet_block_forward_pallas.8} parent=1 // pred_fallthru
      _
    %645 = vsyncpa [#allocation5], 1
    %646 = vsyncpa [#allocation7], 1

// kernel: gridnet_block_forward_pallas.7
$region0: #{gridnet_block_forward_pallas.7}
  #allocation0 [shape = 'u32[]', space=smem, size = 0x4, offset = 0x4, fixed_abs, tag = 'smem constant byte address 0x4 - core index']
  #allocation1 [shape = 'u32[144,128]{1,0:T(1,128)}', space=vmem, size = 0x12000, scoped, tag = 'internal scratch']
  %s0 = inlined_call_operand.vmem [shape: f32[64,32], index: 0, kind: input, shape index: {}]
  %s1 = inlined_call_operand.vmem [shape: f32[64,32], index: 1, kind: input, shape index: {}]
  %s2 = inlined_call_operand.vmem [shape: f32[64,64], index: 2, kind: input, shape index: {}]
  %s3 = inlined_call_operand.vmem [shape: f32[32,64], index: 3, kind: input, shape index: {}]
  %s4 = inlined_call_operand.vmem [shape: f32[32,64], index: 4, kind: input, shape index: {}]
  %s5 = inlined_call_operand.vmem [shape: f32[1,64], index: 5, kind: input, shape index: {}]
  %s6 = inlined_call_operand.vmem [shape: f32[1,16], index: 6, kind: input, shape index: {}]
  %s7 = inlined_call_operand.vmem [shape: f32[1,16], index: 7, kind: input, shape index: {}]
  %s8 = inlined_call_operand.vmem [shape: f32[16,128], index: 8, kind: input, shape index: {}]
  %s9 = inlined_call_operand.vmem [shape: f32[1,128], index: 9, kind: input, shape index: {}]
  %s10 = inlined_call_operand.vmem [shape: f32[64,64], index: 10, kind: output, shape index: {0}]
  %s11 = inlined_call_operand.vmem [shape: f32[64,512], index: 11, kind: output, shape index: {1}]
  %12 = xla_tuple %s10, %s11
  %s13 = sld [smem:[#allocation0]]
  $region58: #{gridnet_block_forward_pallas.7} parent=0
    _
  %s15 = ssub.s32 1, %s13
  %s16 = scalar_select 0, %s15, %s13
  // Predicated region
  $region2: #{gridnet_block_forward_pallas.7} parent=0 // pred_check
    _
  $region3: #{gridnet_block_forward_pallas.7} parent=0 // pred_check_branch
    %18 = sbr.rel (0) target = $region5
  $region4: #{gridnet_block_forward_pallas.7} parent=0 // pred_region
    _
  $region5: #{gridnet_block_forward_pallas.7} parent=0 // pred_fallthru
    _
  // Predicated region
  $region6: #{gridnet_block_forward_pallas.7} parent=0 // pred_check
    _
  $region7: #{gridnet_block_forward_pallas.7} parent=0 // pred_check_branch
    %20 = sbr.rel (0) target = $region9
  $region8: #{gridnet_block_forward_pallas.7} parent=0 // pred_region
    _
  $region9: #{gridnet_block_forward_pallas.7} parent=0 // pred_fallthru
    _
  // Predicated region
  $region10: #{gridnet_block_forward_pallas.7} parent=0 // pred_check
    _
  $region11: #{gridnet_block_forward_pallas.7} parent=0 // pred_check_branch
    %22 = sbr.rel (0) target = $region13
  $region12: #{gridnet_block_forward_pallas.7} parent=0 // pred_region
    _
  $region13: #{gridnet_block_forward_pallas.7} parent=0 // pred_fallthru
    _
  // Predicated region
  $region14: #{gridnet_block_forward_pallas.7} parent=0 // pred_check
    _
  $region15: #{gridnet_block_forward_pallas.7} parent=0 // pred_check_branch
    %24 = sbr.rel (0) target = $region17
  $region16: #{gridnet_block_forward_pallas.7} parent=0 // pred_region
    _
  $region17: #{gridnet_block_forward_pallas.7} parent=0 // pred_fallthru
    _
  // Predicated region
  $region18: #{gridnet_block_forward_pallas.7} parent=0 // pred_check
    _
  $region19: #{gridnet_block_forward_pallas.7} parent=0 // pred_check_branch
    %26 = sbr.rel (0) target = $region21
  $region20: #{gridnet_block_forward_pallas.7} parent=0 // pred_region
    _
  $region21: #{gridnet_block_forward_pallas.7} parent=0 // pred_fallthru
    _
  // Predicated region
  $region22: #{gridnet_block_forward_pallas.7} parent=0 // pred_check
    _
  $region23: #{gridnet_block_forward_pallas.7} parent=0 // pred_check_branch
    %28 = sbr.rel (0) target = $region25
  $region24: #{gridnet_block_forward_pallas.7} parent=0 // pred_region
    _
  $region25: #{gridnet_block_forward_pallas.7} parent=0 // pred_fallthru
    _
  // Predicated region
  $region26: #{gridnet_block_forward_pallas.7} parent=0 // pred_check
    _
  $region27: #{gridnet_block_forward_pallas.7} parent=0 // pred_check_branch
    %30 = sbr.rel (0) target = $region29
  $region28: #{gridnet_block_forward_pallas.7} parent=0 // pred_region
    _
  $region29: #{gridnet_block_forward_pallas.7} parent=0 // pred_fallthru
    _
  // Predicated region
  $region30: #{gridnet_block_forward_pallas.7} parent=0 // pred_check
    _
  $region31: #{gridnet_block_forward_pallas.7} parent=0 // pred_check_branch
    %32 = sbr.rel (0) target = $region33
  $region32: #{gridnet_block_forward_pallas.7} parent=0 // pred_region
    _
  $region33: #{gridnet_block_forward_pallas.7} parent=0 // pred_fallthru
    _
  // Predicated region
  $region34: #{gridnet_block_forward_pallas.7} parent=0 // pred_check
    _
  $region35: #{gridnet_block_forward_pallas.7} parent=0 // pred_check_branch
    %34 = sbr.rel (0) target = $region37
  $region36: #{gridnet_block_forward_pallas.7} parent=0 // pred_region
    _
  $region37: #{gridnet_block_forward_pallas.7} parent=0 // pred_fallthru
    _
  // Predicated region
  $region38: #{gridnet_block_forward_pallas.7} parent=0 // pred_check
    _
  $region39: #{gridnet_block_forward_pallas.7} parent=0 // pred_check_branch
    %36 = sbr.rel (0) target = $region41
  $region40: #{gridnet_block_forward_pallas.7} parent=0 // pred_region
    _
  $region41: #{gridnet_block_forward_pallas.7} parent=0 // pred_fallthru
    _
  %v37 = vld [vmem:[%s0] sm:$0xff]
  %v38 = vld [vmem:[%s0 + $0x8] sm:$0xff]
  %v39 = vld [vmem:[%s0 + $0x10] sm:$0xff]
  %v40 = vld [vmem:[%s0 + $0x18] sm:$0xff]
  %v41 = vld [vmem:[%s0 + $0x20] sm:$0xff]
  %v42 = vld [vmem:[%s0 + $0x28] sm:$0xff]
  %v43 = vld [vmem:[%s0 + $0x30] sm:$0xff]
  %v44 = vld [vmem:[%s0 + $0x38] sm:$0xff]
  %v45 = vld [vmem:[%s3] sm:$0xff]
  %v46 = vld [vmem:[%s3 + $0x8] sm:$0xff]
  %v47 = vld [vmem:[%s3 + $0x10] sm:$0xff]
  %v48 = vld [vmem:[%s3 + $0x18] sm:$0xff]
  %v49 = vld [vmem:[%s1] sm:$0xff]
  %v50 = vld [vmem:[%s1 + $0x8] sm:$0xff]
  %v51 = vld [vmem:[%s1 + $0x10] sm:$0xff]
  %v52 = vld [vmem:[%s1 + $0x18] sm:$0xff]
  %v53 = vld [vmem:[%s1 + $0x20] sm:$0xff]
  %v54 = vld [vmem:[%s1 + $0x28] sm:$0xff]
  %v55 = vld [vmem:[%s1 + $0x30] sm:$0xff]
  %v56 = vld [vmem:[%s1 + $0x38] sm:$0xff]
  %v57 = vld [vmem:[%s4] sm:$0xff]
  %v58 = vld [vmem:[%s4 + $0x8] sm:$0xff]
  %v59 = vld [vmem:[%s4 + $0x10] sm:$0xff]
  %v60 = vld [vmem:[%s4 + $0x18] sm:$0xff]
  %vm61 = vcmask 261120
  %v63 = vsel %vm61, %v49, 0
  %v66 = vsel %vm61, %v50, 0
  %v69 = vsel %vm61, %v51, 0
  %v72 = vsel %vm61, %v52, 0
  %v75 = vsel %vm61, %v53, 0
  %v78 = vsel %vm61, %v54, 0
  %v81 = vsel %vm61, %v55, 0
  %v84 = vsel %vm61, %v56, 0
  %86 = vmatprep.subr.mxu0 0.0
  %87 = vmatpush1.msra.mxu0 0.0
  %88 = vmatprep.subr.mxu0 0.0
  %89 = vmatpush1.msra.mxu0 0.0
  %90 = vmatprep.subr.mxu0 0.0
  %91 = vmatpush1.msra.mxu0 0.0
  %92 = vmatprep.subr.mxu0 0.0
  %93 = vmatpush1.msra.mxu0 0.0
  %94 = vmatprep.subr.mxu0 0.0
  %95 = vmatpush1.msra.mxu0 0.0
  %96 = vmatprep.subr.mxu0 0.0
  %97 = vmatpush1.msra.mxu0 0.0
  %98 = vmatprep.subr.mxu0 0.0
  %99 = vmatpush1.msra.mxu0 0.0
  %100 = vmatprep.subr.mxu0 0.0
  %101 = vmatpush1.msra.mxu0 0.0
  %102 = vmatprep.subr.mxu0 0.0
  %103 = vmatpush1.msra.mxu0 0.0
  %104 = vmatprep.subr.mxu0 0.0
  %105 = vmatpush1.msra.mxu0 0.0
  %106 = vmatprep.subr.mxu0 0.0
  %107 = vmatpush1.msra.mxu0 0.0
  %108 = vmatprep.subr.mxu0 0.0
  %109 = vmatpush1.msra.mxu0 0.0
  %110 = vmatprep.subr.mxu0 0.0
  %111 = vmatpush1.msra.mxu0 %v60
  %112 = vmatprep.subr.mxu0 0.0
  %113 = vmatpush1.msra.mxu0 %v59
  %114 = vmatprep.subr.mxu0 0.0
  %115 = vmatpush1.msra.mxu0 %v58
  %116 = vmatprep.subr.mxu0 0.0
  %117 = vmatpush1.msra.mxu0 %v57
  %118 = vmatprep.subr.mxu0 0.0
  %119 = vmatpush2.msra.mxu0 0.0
  %120 = vmatprep.subr.mxu0 0.0
  %121 = vmatpush2.msra.mxu0 0.0
  %122 = vmatprep.subr.mxu0 0.0
  %123 = vmatpush2.msra.mxu0 0.0
  %124 = vmatprep.subr.mxu0 0.0
  %125 = vmatpush2.msra.mxu0 0.0
  %126 = vmatprep.subr.mxu0 0.0
  %127 = vmatpush2.msra.mxu0 0.0
  %128 = vmatprep.subr.mxu0 0.0
  %129 = vmatpush2.msra.mxu0 0.0
  %130 = vmatprep.subr.mxu0 0.0
  %131 = vmatpush2.msra.mxu0 0.0
  %132 = vmatprep.subr.mxu0 0.0
  %133 = vmatpush2.msra.mxu0 0.0
  %134 = vmatprep.subr.mxu0 0.0
  %135 = vmatpush2.msra.mxu0 0.0
  %136 = vmatprep.subr.mxu0 0.0
  %137 = vmatpush2.msra.mxu0 0.0
  %138 = vmatprep.subr.mxu0 0.0
  %139 = vmatpush2.msra.mxu0 0.0
  %140 = vmatprep.subr.mxu0 0.0
  %141 = vmatpush2.msra.mxu0 0.0
  %142 = vmatprep.subr.mxu0 0.0
  %143 = vmatpush2.msra.mxu0 0.0
  %144 = vmatprep.subr.mxu0 0.0
  %145 = vmatpush2.msra.mxu0 0.0
  %146 = vmatprep.subr.mxu0 0.0
  %147 = vmatpush2.msra.mxu0 0.0
  %148 = vmatprep.subr.mxu0 0.0
  %149 = vmatpush2.msra.mxu0 0.0
  %150 = vmatprep.mubr.f32.mxu0 0.0
  %151 = vmatmul.mubr.f32.gmra.mxu0 %v63
  %v152 = vpop.f32.mrf.mxu0
  %v153 = vadd.f32 0.0, %v152
  %v154 = vpop.f32.mrf.mxu0
  %155 = vmatprep.mubr.f32.mxu0 0.0
  %156 = vmatmul.mubr.f32.gmra.mxu0 %v66
  %v157 = vpop.f32.mrf.mxu0
  %v158 = vadd.f32 0.0, %v157
  %v159 = vpop.f32.mrf.mxu0
  %160 = vmatprep.mubr.f32.mxu0 0.0
  %161 = vmatmul.mubr.f32.gmra.mxu0 %v69
  %v162 = vpop.f32.mrf.mxu0
  %v163 = vadd.f32 0.0, %v162
  %v164 = vpop.f32.mrf.mxu0
  %165 = vmatprep.mubr.f32.mxu0 0.0
  %166 = vmatmul.mubr.f32.gmra.mxu0 %v72
  %v167 = vpop.f32.mrf.mxu0
  %v168 = vadd.f32 0.0, %v167
  %v169 = vpop.f32.mrf.mxu0
  %170 = vmatprep.mubr.f32.mxu0 0.0
  %171 = vmatmul.mubr.f32.gmra.mxu0 %v75
  %v172 = vpop.f32.mrf.mxu0
  %v173 = vadd.f32 0.0, %v172
  %v174 = vpop.f32.mrf.mxu0
  %175 = vmatprep.mubr.f32.mxu0 0.0
  %176 = vmatmul.mubr.f32.gmra.mxu0 %v78
  %v177 = vpop.f32.mrf.mxu0
  %v178 = vadd.f32 0.0, %v177
  %v179 = vpop.f32.mrf.mxu0
  %180 = vmatprep.mubr.f32.mxu0 0.0
  %181 = vmatmul.mubr.f32.gmra.mxu0 %v81
  %v182 = vpop.f32.mrf.mxu0
  %v183 = vadd.f32 0.0, %v182
  %v184 = vpop.f32.mrf.mxu0
  %185 = vmatprep.mubr.f32.mxu0 0.0
  %186 = vmatmul.mubr.f32.gmra.mxu0 %v84
  %v187 = vpop.f32.mrf.mxu0
  %v188 = vadd.f32 0.0, %v187
  %v189 = vpop.f32.mrf.mxu0
  %190 = vdwg.mxu0
  %v192 = vsel %vm61, %v37, 0
  %v195 = vsel %vm61, %v38, 0
  %v198 = vsel %vm61, %v39, 0
  %v201 = vsel %vm61, %v40, 0
  %v204 = vsel %vm61, %v41, 0
  %v207 = vsel %vm61, %v42, 0
  %v210 = vsel %vm61, %v43, 0
  %v213 = vsel %vm61, %v44, 0
  %215 = vmatprep.subr.mxu0 0.0
  %216 = vmatpush1.msra.mxu0 0.0
  %217 = vmatprep.subr.mxu0 0.0
  %218 = vmatpush1.msra.mxu0 0.0
  %219 = vmatprep.subr.mxu0 0.0
  %220 = vmatpush1.msra.mxu0 0.0
  %221 = vmatprep.subr.mxu0 0.0
  %222 = vmatpush1.msra.mxu0 0.0
  %223 = vmatprep.subr.mxu0 0.0
  %224 = vmatpush1.msra.mxu0 0.0
  %225 = vmatprep.subr.mxu0 0.0
  %226 = vmatpush1.msra.mxu0 0.0
  %227 = vmatprep.subr.mxu0 0.0
  %228 = vmatpush1.msra.mxu0 0.0
  %229 = vmatprep.subr.mxu0 0.0
  %230 = vmatpush1.msra.mxu0 0.0
  %231 = vmatprep.subr.mxu0 0.0
  %232 = vmatpush1.msra.mxu0 0.0
  %233 = vmatprep.subr.mxu0 0.0
  %234 = vmatpush1.msra.mxu0 0.0
  %235 = vmatprep.subr.mxu0 0.0
  %236 = vmatpush1.msra.mxu0 0.0
  %237 = vmatprep.subr.mxu0 0.0
  %238 = vmatpush1.msra.mxu0 0.0
  %239 = vmatprep.subr.mxu0 0.0
  %240 = vmatpush1.msra.mxu0 %v48
  %241 = vmatprep.subr.mxu0 0.0
  %242 = vmatpush1.msra.mxu0 %v47
  %243 = vmatprep.subr.mxu0 0.0
  %244 = vmatpush1.msra.mxu0 %v46
  %245 = vmatprep.subr.mxu0 0.0
  %246 = vmatpush1.msra.mxu0 %v45
  %247 = vmatprep.subr.mxu0 0.0
  %248 = vmatpush2.msra.mxu0 0.0
  %249 = vmatprep.subr.mxu0 0.0
  %250 = vmatpush2.msra.mxu0 0.0
  %251 = vmatprep.subr.mxu0 0.0
  %252 = vmatpush2.msra.mxu0 0.0
  %253 = vmatprep.subr.mxu0 0.0
  %254 = vmatpush2.msra.mxu0 0.0
  %255 = vmatprep.subr.mxu0 0.0
  %256 = vmatpush2.msra.mxu0 0.0
  %257 = vmatprep.subr.mxu0 0.0
  %258 = vmatpush2.msra.mxu0 0.0
  %259 = vmatprep.subr.mxu0 0.0
  %260 = vmatpush2.msra.mxu0 0.0
  %261 = vmatprep.subr.mxu0 0.0
  %262 = vmatpush2.msra.mxu0 0.0
  %263 = vmatprep.subr.mxu0 0.0
  %264 = vmatpush2.msra.mxu0 0.0
  %265 = vmatprep.subr.mxu0 0.0
  %266 = vmatpush2.msra.mxu0 0.0
  %267 = vmatprep.subr.mxu0 0.0
  %268 = vmatpush2.msra.mxu0 0.0
  %269 = vmatprep.subr.mxu0 0.0
  %270 = vmatpush2.msra.mxu0 0.0
  %271 = vmatprep.subr.mxu0 0.0
  %272 = vmatpush2.msra.mxu0 0.0
  %273 = vmatprep.subr.mxu0 0.0
  %274 = vmatpush2.msra.mxu0 0.0
  %275 = vmatprep.subr.mxu0 0.0
  %276 = vmatpush2.msra.mxu0 0.0
  %277 = vmatprep.subr.mxu0 0.0
  %278 = vmatpush2.msra.mxu0 0.0
  %279 = vmatprep.mubr.f32.mxu0 0.0
  %280 = vmatmul.mubr.f32.gmra.mxu0 %v192
  %v281 = vpop.f32.mrf.mxu0
  %v282 = vadd.f32 %v153, %v281
  %v283 = vpop.f32.mrf.mxu0
  %284 = vmatprep.mubr.f32.mxu0 0.0
  %285 = vmatmul.mubr.f32.gmra.mxu0 %v195
  %v286 = vpop.f32.mrf.mxu0
  %v287 = vadd.f32 %v158, %v286
  %v288 = vpop.f32.mrf.mxu0
  %289 = vmatprep.mubr.f32.mxu0 0.0
  %290 = vmatmul.mubr.f32.gmra.mxu0 %v198
  %v291 = vpop.f32.mrf.mxu0
  %v292 = vadd.f32 %v163, %v291
  %v293 = vpop.f32.mrf.mxu0
  %294 = vmatprep.mubr.f32.mxu0 0.0
  %295 = vmatmul.mubr.f32.gmra.mxu0 %v201
  %v296 = vpop.f32.mrf.mxu0
  %v297 = vadd.f32 %v168, %v296
  %v298 = vpop.f32.mrf.mxu0
  %299 = vmatprep.mubr.f32.mxu0 0.0
  %300 = vmatmul.mubr.f32.gmra.mxu0 %v204
  %v301 = vpop.f32.mrf.mxu0
  %v302 = vadd.f32 %v173, %v301
  %v303 = vpop.f32.mrf.mxu0
  %304 = vmatprep.mubr.f32.mxu0 0.0
  %305 = vmatmul.mubr.f32.gmra.mxu0 %v207
  %v306 = vpop.f32.mrf.mxu0
  %v307 = vadd.f32 %v178, %v306
  %v308 = vpop.f32.mrf.mxu0
  %309 = vmatprep.mubr.f32.mxu0 0.0
  %310 = vmatmul.mubr.f32.gmra.mxu0 %v210
  %v311 = vpop.f32.mrf.mxu0
  %v312 = vadd.f32 %v183, %v311
  %v313 = vpop.f32.mrf.mxu0
  %314 = vmatprep.mubr.f32.mxu0 0.0
  %315 = vmatmul.mubr.f32.gmra.mxu0 %v213
  %v316 = vpop.f32.mrf.mxu0
  %v317 = vadd.f32 %v188, %v316
  %v318 = vpop.f32.mrf.mxu0
  %319 = vdwg.mxu0
  %v320 = vld [vmem:[%s5] sm:$0x1]
  %v322 = vlaneseq
  %v323 = vshrl.u32 %v322, 7
  %v324 = vsub.s32 0, %v323
  %v325 = vrot.slane %v320, %v324
  %v327 = vadd.f32 %v282, %v325
  %v328 = vadd.f32 %v287, %v325
  %v329 = vadd.f32 %v292, %v325
  %v330 = vadd.f32 %v297, %v325
  %v331 = vadd.f32 %v302, %v325
  %v332 = vadd.f32 %v307, %v325
  %v333 = vadd.f32 %v312, %v325
  %v334 = vadd.f32 %v317, %v325
  %v335 = vld [vmem:[%s2] sm:$0xff]
  %v336 = vld [vmem:[%s2 + $0x8] sm:$0xff]
  %v337 = vld [vmem:[%s2 + $0x10] sm:$0xff]
  %v338 = vld [vmem:[%s2 + $0x18] sm:$0xff]
  %v339 = vld [vmem:[%s2 + $0x20] sm:$0xff]
  %v340 = vld [vmem:[%s2 + $0x28] sm:$0xff]
  %v341 = vld [vmem:[%s2 + $0x30] sm:$0xff]
  %v342 = vld [vmem:[%s2 + $0x38] sm:$0xff]
  %v343 = vadd.f32 %v327, %v335
  %v344 = vadd.f32 %v328, %v336
  %v345 = vadd.f32 %v329, %v337
  %v346 = vadd.f32 %v330, %v338
  %v347 = vadd.f32 %v331, %v339
  %v348 = vadd.f32 %v332, %v340
  %v349 = vadd.f32 %v333, %v341
  %v350 = vadd.f32 %v334, %v342
  %vm351 = vcmask 523264
  %352 = vst.msk [vmem:[%s10] sm:$0xff] %vm351, %v343
  %353 = vst.msk [vmem:[%s10 + $0x8] sm:$0xff] %vm351, %v344
  %354 = vst.msk [vmem:[%s10 + $0x10] sm:$0xff] %vm351, %v345
  %355 = vst.msk [vmem:[%s10 + $0x18] sm:$0xff] %vm351, %v346
  %356 = vst.msk [vmem:[%s10 + $0x20] sm:$0xff] %vm351, %v347
  %357 = vst.msk [vmem:[%s10 + $0x28] sm:$0xff] %vm351, %v348
  %358 = vst.msk [vmem:[%s10 + $0x30] sm:$0xff] %vm351, %v349
  %359 = vst.msk [vmem:[%s10 + $0x38] sm:$0xff] %vm351, %v350
  %v360 = vld [vmem:[%s6] sm:$0x1]
  %v361 = vld [vmem:[%s7] sm:$0x1]
  %v362 = vld [vmem:[%s8] sm:$0xff]
  %v363 = vld [vmem:[%s8 + $0x8] sm:$0xff]
  %v364 = vld [vmem:[%s9] sm:$0x1]
  %vm365 = vcmask 130048
  %v366 = vsel %vm365, %v343, 0.0
  %367 = vadd.xlane.f32.xlu0 %v366
  %v368 = vpop.xlane.xlu0 %367
  %v369 = vsel %vm365, %v344, 0.0
  %370 = vadd.xlane.f32.xlu0 %v369
  %v371 = vpop.xlane.xlu0 %370
  %v372 = vsel %vm365, %v345, 0.0
  %373 = vadd.xlane.f32.xlu0 %v372
  %v374 = vpop.xlane.xlu0 %373
  %v375 = vsel %vm365, %v346, 0.0
  %376 = vadd.xlane.f32.xlu0 %v375
  %v377 = vpop.xlane.xlu0 %376
  %v378 = vsel %vm365, %v347, 0.0
  %379 = vadd.xlane.f32.xlu0 %v378
  %v380 = vpop.xlane.xlu0 %379
  %v381 = vsel %vm365, %v348, 0.0
  %382 = vadd.xlane.f32.xlu0 %v381
  %v383 = vpop.xlane.xlu0 %382
  %v384 = vsel %vm365, %v349, 0.0
  %385 = vadd.xlane.f32.xlu0 %v384
  %v386 = vpop.xlane.xlu0 %385
  %v387 = vsel %vm365, %v350, 0.0
  %388 = vadd.xlane.f32.xlu0 %v387
  %v389 = vpop.xlane.xlu0 %388
  %v390 = vrcp.pop 16.0
  %v391 = vmul.f32 %v368, %v390
  %v392 = vmul.f32 %v371, %v390
  %v393 = vmul.f32 %v374, %v390
  %v394 = vmul.f32 %v377, %v390
  %v395 = vmul.f32 %v380, %v390
  %v396 = vmul.f32 %v383, %v390
  %v397 = vmul.f32 %v386, %v390
  %v398 = vmul.f32 %v389, %v390
  %v399 = vsub.f32 %v343, %v391
  %v400 = vsub.f32 %v344, %v392
  %v401 = vsub.f32 %v345, %v393
  %v402 = vsub.f32 %v346, %v394
  %v403 = vsub.f32 %v347, %v395
  %v404 = vsub.f32 %v348, %v396
  %v405 = vsub.f32 %v349, %v397
  %v406 = vsub.f32 %v350, %v398
  %v407 = vmul.f32 %v399, %v399
  %v408 = vmul.f32 %v400, %v400
  %v409 = vmul.f32 %v401, %v401
  %v410 = vmul.f32 %v402, %v402
  %v411 = vmul.f32 %v403, %v403
  %v412 = vmul.f32 %v404, %v404
  %v413 = vmul.f32 %v405, %v405
  %v414 = vmul.f32 %v406, %v406
  %v415 = vsel %vm365, %v407, 0.0
  %416 = vadd.xlane.f32.xlu0 %v415
  %v417 = vpop.xlane.xlu0 %416
  %v418 = vsel %vm365, %v408, 0.0
  %419 = vadd.xlane.f32.xlu0 %v418
  %v420 = vpop.xlane.xlu0 %419
  %v421 = vsel %vm365, %v409, 0.0
  %422 = vadd.xlane.f32.xlu0 %v421
  %v423 = vpop.xlane.xlu0 %422
  %v424 = vsel %vm365, %v410, 0.0
  %425 = vadd.xlane.f32.xlu0 %v424
  %v426 = vpop.xlane.xlu0 %425
  %v427 = vsel %vm365, %v411, 0.0
  %428 = vadd.xlane.f32.xlu0 %v427
  %v429 = vpop.xlane.xlu0 %428
  %v430 = vsel %vm365, %v412, 0.0
  %431 = vadd.xlane.f32.xlu0 %v430
  %v432 = vpop.xlane.xlu0 %431
  %v433 = vsel %vm365, %v413, 0.0
  %434 = vadd.xlane.f32.xlu0 %v433
  %v435 = vpop.xlane.xlu0 %434
  %v436 = vsel %vm365, %v414, 0.0
  %437 = vadd.xlane.f32.xlu0 %v436
  %v438 = vpop.xlane.xlu0 %437
  %v439 = vmul.f32 %v417, %v390
  %v440 = vmul.f32 %v420, %v390
  %v441 = vmul.f32 %v423, %v390
  %v442 = vmul.f32 %v426, %v390
  %v443 = vmul.f32 %v429, %v390
  %v444 = vmul.f32 %v432, %v390
  %v445 = vmul.f32 %v435, %v390
  %v446 = vmul.f32 %v438, %v390
  %v447 = vadd.f32 %v439, 1e-05
  %v448 = vadd.f32 %v440, 1e-05
  %v449 = vadd.f32 %v441, 1e-05
  %v450 = vadd.f32 %v442, 1e-05
  %v451 = vadd.f32 %v443, 1e-05
  %v452 = vadd.f32 %v444, 1e-05
  %v453 = vadd.f32 %v445, 1e-05
  %v454 = vadd.f32 %v446, 1e-05
  %v455 = vrsqrt.pop %v447
  %v456 = vrsqrt.pop %v448
  %v457 = vrsqrt.pop %v449
  %v458 = vrsqrt.pop %v450
  %v459 = vrsqrt.pop %v451
  %v460 = vrsqrt.pop %v452
  %v461 = vrsqrt.pop %v453
  %v462 = vrsqrt.pop %v454
  %v463 = vmul.f32 %v399, %v455
  %v464 = vmul.f32 %v400, %v456
  %v465 = vmul.f32 %v401, %v457
  %v466 = vmul.f32 %v402, %v458
  %v467 = vmul.f32 %v403, %v459
  %v468 = vmul.f32 %v404, %v460
  %v469 = vmul.f32 %v405, %v461
  %v470 = vmul.f32 %v406, %v462
  %v472 = vlaneseq
  %v473 = vshrl.u32 %v472, 7
  %v474 = vsub.s32 0, %v473
  %v475 = vrot.slane %v360, %v474
  %v477 = vmul.f32 %v463, %v475
  %v478 = vmul.f32 %v464, %v475
  %v479 = vmul.f32 %v465, %v475
  %v480 = vmul.f32 %v466, %v475
  %v481 = vmul.f32 %v467, %v475
  %v482 = vmul.f32 %v468, %v475
  %v483 = vmul.f32 %v469, %v475
  %v484 = vmul.f32 %v470, %v475
  %v486 = vlaneseq
  %v487 = vshrl.u32 %v486, 7
  %v488 = vsub.s32 0, %v487
  %v489 = vrot.slane %v361, %v488
  %v491 = vadd.f32 %v477, %v489
  %v492 = vadd.f32 %v478, %v489
  %v493 = vadd.f32 %v479, %v489
  %v494 = vadd.f32 %v480, %v489
  %v495 = vadd.f32 %v481, %v489
  %v496 = vadd.f32 %v482, %v489
  %v497 = vadd.f32 %v483, %v489
  %v498 = vadd.f32 %v484, %v489
  %v500 = vlaneseq
  %v501 = vshrl.u32 %v500, 7
  %v502 = vsub.s32 0, %v501
  %v503 = vrot.slane %v364, %v502
  %v506 = vsel %vm365, %v491, 0
  %v509 = vsel %vm365, %v492, 0
  %v512 = vsel %vm365, %v493, 0
  %v515 = vsel %vm365, %v494, 0
  %v518 = vsel %vm365, %v495, 0
  %v521 = vsel %vm365, %v496, 0
  %v524 = vsel %vm365, %v497, 0
  %v527 = vsel %vm365, %v498, 0
  %529 = vmatprep.subr.mxu0 0.0
  %530 = vmatpush1.msra.mxu0 0.0
  %531 = vmatprep.subr.mxu0 0.0
  %532 = vmatpush1.msra.mxu0 0.0
  %533 = vmatprep.subr.mxu0 0.0
  %534 = vmatpush1.msra.mxu0 0.0
  %535 = vmatprep.subr.mxu0 0.0
  %536 = vmatpush1.msra.mxu0 0.0
  %537 = vmatprep.subr.mxu0 0.0
  %538 = vmatpush1.msra.mxu0 0.0
  %539 = vmatprep.subr.mxu0 0.0
  %540 = vmatpush1.msra.mxu0 0.0
  %541 = vmatprep.subr.mxu0 0.0
  %542 = vmatpush1.msra.mxu0 0.0
  %543 = vmatprep.subr.mxu0 0.0
  %544 = vmatpush1.msra.mxu0 0.0
  %545 = vmatprep.subr.mxu0 0.0
  %546 = vmatpush1.msra.mxu0 0.0
  %547 = vmatprep.subr.mxu0 0.0
  %548 = vmatpush1.msra.mxu0 0.0
  %549 = vmatprep.subr.mxu0 0.0
  %550 = vmatpush1.msra.mxu0 0.0
  %551 = vmatprep.subr.mxu0 0.0
  %552 = vmatpush1.msra.mxu0 0.0
  %553 = vmatprep.subr.mxu0 0.0
  %554 = vmatpush1.msra.mxu0 0.0
  %555 = vmatprep.subr.mxu0 0.0
  %556 = vmatpush1.msra.mxu0 0.0
  %557 = vmatprep.subr.mxu0 0.0
  %558 = vmatpush1.msra.mxu0 %v363
  %559 = vmatprep.subr.mxu0 0.0
  %560 = vmatpush1.msra.mxu0 %v362
  %561 = vmatprep.subr.mxu0 0.0
  %562 = vmatpush2.msra.mxu0 0.0
  %563 = vmatprep.subr.mxu0 0.0
  %564 = vmatpush2.msra.mxu0 0.0
  %565 = vmatprep.subr.mxu0 0.0
  %566 = vmatpush2.msra.mxu0 0.0
  %567 = vmatprep.subr.mxu0 0.0
  %568 = vmatpush2.msra.mxu0 0.0
  %569 = vmatprep.subr.mxu0 0.0
  %570 = vmatpush2.msra.mxu0 0.0
  %571 = vmatprep.subr.mxu0 0.0
  %572 = vmatpush2.msra.mxu0 0.0
  %573 = vmatprep.subr.mxu0 0.0
  %574 = vmatpush2.msra.mxu0 0.0
  %575 = vmatprep.subr.mxu0 0.0
  %576 = vmatpush2.msra.mxu0 0.0
  %577 = vmatprep.subr.mxu0 0.0
  %578 = vmatpush2.msra.mxu0 0.0
  %579 = vmatprep.subr.mxu0 0.0
  %580 = vmatpush2.msra.mxu0 0.0
  %581 = vmatprep.subr.mxu0 0.0
  %582 = vmatpush2.msra.mxu0 0.0
  %583 = vmatprep.subr.mxu0 0.0
  %584 = vmatpush2.msra.mxu0 0.0
  %585 = vmatprep.subr.mxu0 0.0
  %586 = vmatpush2.msra.mxu0 0.0
  %587 = vmatprep.subr.mxu0 0.0
  %588 = vmatpush2.msra.mxu0 0.0
  %589 = vmatprep.subr.mxu0 0.0
  %590 = vmatpush2.msra.mxu0 0.0
  %591 = vmatprep.subr.mxu0 0.0
  %592 = vmatpush2.msra.mxu0 0.0
  %593 = vmatprep.mubr.f32.mxu0 0.0
  %594 = vmatmul.mubr.f32.gmra.mxu0 %v506
  %v595 = vpop.f32.mrf.mxu0
  %v596 = vadd.f32 %v503, %v595
  %v597 = vpop.f32.mrf.mxu0
  %598 = vmatprep.mubr.f32.mxu0 0.0
  %599 = vmatmul.mubr.f32.gmra.mxu0 %v509
  %v600 = vpop.f32.mrf.mxu0
  %v601 = vadd.f32 %v503, %v600
  %v602 = vpop.f32.mrf.mxu0
  %603 = vmatprep.mubr.f32.mxu0 0.0
  %604 = vmatmul.mubr.f32.gmra.mxu0 %v512
  %v605 = vpop.f32.mrf.mxu0
  %v606 = vadd.f32 %v503, %v605
  %v607 = vpop.f32.mrf.mxu0
  %608 = vmatprep.mubr.f32.mxu0 0.0
  %609 = vmatmul.mubr.f32.gmra.mxu0 %v515
  %v610 = vpop.f32.mrf.mxu0
  %v611 = vadd.f32 %v503, %v610
  %v612 = vpop.f32.mrf.mxu0
  %613 = vmatprep.mubr.f32.mxu0 0.0
  %614 = vmatmul.mubr.f32.gmra.mxu0 %v518
  %v615 = vpop.f32.mrf.mxu0
  %v616 = vadd.f32 %v503, %v615
  %v617 = vpop.f32.mrf.mxu0
  %618 = vmatprep.mubr.f32.mxu0 0.0
  %619 = vmatmul.mubr.f32.gmra.mxu0 %v521
  %v620 = vpop.f32.mrf.mxu0
  %v621 = vadd.f32 %v503, %v620
  %v622 = vpop.f32.mrf.mxu0
  %623 = vmatprep.mubr.f32.mxu0 0.0
  %624 = vmatmul.mubr.f32.gmra.mxu0 %v524
  %v625 = vpop.f32.mrf.mxu0
  %v626 = vadd.f32 %v503, %v625
  %v627 = vpop.f32.mrf.mxu0
  %628 = vmatprep.mubr.f32.mxu0 0.0
  %629 = vmatmul.mubr.f32.gmra.mxu0 %v527
  %v630 = vpop.f32.mrf.mxu0
  %v631 = vadd.f32 %v503, %v630
  %v632 = vpop.f32.mrf.mxu0
  %633 = vdwg.mxu0
  %634 = vst [vmem:[%s11] sm:$0xff] %v596
  %635 = vst [vmem:[%s11 + $0x20] sm:$0xff] %v601
  %636 = vst [vmem:[%s11 + $0x40] sm:$0xff] %v606
  %637 = vst [vmem:[%s11 + $0x60] sm:$0xff] %v611
  %638 = vst [vmem:[%s11 + $0x80] sm:$0xff] %v616
  %639 = vst [vmem:[%s11 + $0xa0] sm:$0xff] %v621
  %640 = vst [vmem:[%s11 + $0xc0] sm:$0xff] %v626
  %641 = vst [vmem:[%s11 + $0xe0] sm:$0xff] %v631
  %650 = vrot.lane.b32.xlu0 %v343, 112
  %v651 = vpop.permute.xlu0 %650
  %652 = vrot.lane.b32.xlu0 %v344, 112
  %v653 = vpop.permute.xlu0 %652
  %654 = vrot.lane.b32.xlu0 %v345, 112
  %v655 = vpop.permute.xlu0 %654
  %656 = vrot.lane.b32.xlu0 %v346, 112
  %v657 = vpop.permute.xlu0 %656
  %658 = vrot.lane.b32.xlu0 %v347, 112
  %v659 = vpop.permute.xlu0 %658
  %660 = vrot.lane.b32.xlu0 %v348, 112
  %v661 = vpop.permute.xlu0 %660
  %662 = vrot.lane.b32.xlu0 %v349, 112
  %v663 = vpop.permute.xlu0 %662
  %664 = vrot.lane.b32.xlu0 %v350, 112
  %v665 = vpop.permute.xlu0 %664
  %v674 = vsel %vm365, %v651, 0.0
  %675 = vadd.xlane.f32.xlu0 %v674
  %v676 = vpop.xlane.xlu0 %675
  %v677 = vsel %vm365, %v653, 0.0
  %678 = vadd.xlane.f32.xlu0 %v677
  %v679 = vpop.xlane.xlu0 %678
  %v680 = vsel %vm365, %v655, 0.0
  %681 = vadd.xlane.f32.xlu0 %v680
  %v682 = vpop.xlane.xlu0 %681
  %v683 = vsel %vm365, %v657, 0.0
  %684 = vadd.xlane.f32.xlu0 %v683
  %v685 = vpop.xlane.xlu0 %684
  %v686 = vsel %vm365, %v659, 0.0
  %687 = vadd.xlane.f32.xlu0 %v686
  %v688 = vpop.xlane.xlu0 %687
  %v689 = vsel %vm365, %v661, 0.0
  %690 = vadd.xlane.f32.xlu0 %v689
  %v691 = vpop.xlane.xlu0 %690
  %v692 = vsel %vm365, %v663, 0.0
  %693 = vadd.xlane.f32.xlu0 %v692
  %v694 = vpop.xlane.xlu0 %693
  %v695 = vsel %vm365, %v665, 0.0
  %696 = vadd.xlane.f32.xlu0 %v695
  %v697 = vpop.xlane.xlu0 %696
  %v698 = vmul.f32 %v676, %v390
  %v699 = vmul.f32 %v679, %v390
  %v700 = vmul.f32 %v682, %v390
  %v701 = vmul.f32 %v685, %v390
  %v702 = vmul.f32 %v688, %v390
  %v703 = vmul.f32 %v691, %v390
  %v704 = vmul.f32 %v694, %v390
  %v705 = vmul.f32 %v697, %v390
  %v706 = vsub.f32 %v343, %v698
  %v707 = vsub.f32 %v344, %v699
  %v708 = vsub.f32 %v345, %v700
  %v709 = vsub.f32 %v346, %v701
  %v710 = vsub.f32 %v347, %v702
  %v711 = vsub.f32 %v348, %v703
  %v712 = vsub.f32 %v349, %v704
  %v713 = vsub.f32 %v350, %v705
  %v714 = vmul.f32 %v706, %v706
  %v715 = vmul.f32 %v707, %v707
  %v716 = vmul.f32 %v708, %v708
  %v717 = vmul.f32 %v709, %v709
  %v718 = vmul.f32 %v710, %v710
  %v719 = vmul.f32 %v711, %v711
  %v720 = vmul.f32 %v712, %v712
  %v721 = vmul.f32 %v713, %v713
  %730 = vrot.lane.b32.xlu0 %v714, 112
  %v731 = vpop.permute.xlu0 %730
  %732 = vrot.lane.b32.xlu0 %v715, 112
  %v733 = vpop.permute.xlu0 %732
  %734 = vrot.lane.b32.xlu0 %v716, 112
  %v735 = vpop.permute.xlu0 %734
  %736 = vrot.lane.b32.xlu0 %v717, 112
  %v737 = vpop.permute.xlu0 %736
  %738 = vrot.lane.b32.xlu0 %v718, 112
  %v739 = vpop.permute.xlu0 %738
  %740 = vrot.lane.b32.xlu0 %v719, 112
  %v741 = vpop.permute.xlu0 %740
  %742 = vrot.lane.b32.xlu0 %v720, 112
  %v743 = vpop.permute.xlu0 %742
  %744 = vrot.lane.b32.xlu0 %v721, 112
  %v745 = vpop.permute.xlu0 %744
  %v754 = vsel %vm365, %v731, 0.0
  %755 = vadd.xlane.f32.xlu0 %v754
  %v756 = vpop.xlane.xlu0 %755
  %v757 = vsel %vm365, %v733, 0.0
  %758 = vadd.xlane.f32.xlu0 %v757
  %v759 = vpop.xlane.xlu0 %758
  %v760 = vsel %vm365, %v735, 0.0
  %761 = vadd.xlane.f32.xlu0 %v760
  %v762 = vpop.xlane.xlu0 %761
  %v763 = vsel %vm365, %v737, 0.0
  %764 = vadd.xlane.f32.xlu0 %v763
  %v765 = vpop.xlane.xlu0 %764
  %v766 = vsel %vm365, %v739, 0.0
  %767 = vadd.xlane.f32.xlu0 %v766
  %v768 = vpop.xlane.xlu0 %767
  %v769 = vsel %vm365, %v741, 0.0
  %770 = vadd.xlane.f32.xlu0 %v769
  %v771 = vpop.xlane.xlu0 %770
  %v772 = vsel %vm365, %v743, 0.0
  %773 = vadd.xlane.f32.xlu0 %v772
  %v774 = vpop.xlane.xlu0 %773
  %v775 = vsel %vm365, %v745, 0.0
  %776 = vadd.xlane.f32.xlu0 %v775
  %v777 = vpop.xlane.xlu0 %776
  %v778 = vmul.f32 %v756, %v390
  %v779 = vmul.f32 %v759, %v390
  %v780 = vmul.f32 %v762, %v390
  %v781 = vmul.f32 %v765, %v390
  %v782 = vmul.f32 %v768, %v390
  %v783 = vmul.f32 %v771, %v390
  %v784 = vmul.f32 %v774, %v390
  %v785 = vmul.f32 %v777, %v390
  %v786 = vadd.f32 %v778, 1e-05
  %v787 = vadd.f32 %v779, 1e-05
  %v788 = vadd.f32 %v780, 1e-05
  %v789 = vadd.f32 %v781, 1e-05
  %v790 = vadd.f32 %v782, 1e-05
  %v791 = vadd.f32 %v783, 1e-05
  %v792 = vadd.f32 %v784, 1e-05
  %v793 = vadd.f32 %v785, 1e-05
  %v794 = vrsqrt.pop %v786
  %v795 = vrsqrt.pop %v787
  %v796 = vrsqrt.pop %v788
  %v797 = vrsqrt.pop %v789
  %v798 = vrsqrt.pop %v790
  %v799 = vrsqrt.pop %v791
  %v800 = vrsqrt.pop %v792
  %v801 = vrsqrt.pop %v793
  %v802 = vmul.f32 %v706, %v794
  %v803 = vmul.f32 %v707, %v795
  %v804 = vmul.f32 %v708, %v796
  %v805 = vmul.f32 %v709, %v797
  %v806 = vmul.f32 %v710, %v798
  %v807 = vmul.f32 %v711, %v799
  %v808 = vmul.f32 %v712, %v800
  %v809 = vmul.f32 %v713, %v801
  %810 = vrot.lane.b32.xlu0 %v475, 16
  %v811 = vpop.permute.xlu0 %810
  %v813 = vmul.f32 %v802, %v811
  %v814 = vmul.f32 %v803, %v811
  %v815 = vmul.f32 %v804, %v811
  %v816 = vmul.f32 %v805, %v811
  %v817 = vmul.f32 %v806, %v811
  %v818 = vmul.f32 %v807, %v811
  %v819 = vmul.f32 %v808, %v811
  %v820 = vmul.f32 %v809, %v811
  %821 = vrot.lane.b32.xlu0 %v489, 16
  %v822 = vpop.permute.xlu0 %821
  %v824 = vadd.f32 %v813, %v822
  %v825 = vadd.f32 %v814, %v822
  %v826 = vadd.f32 %v815, %v822
  %v827 = vadd.f32 %v816, %v822
  %v828 = vadd.f32 %v817, %v822
  %v829 = vadd.f32 %v818, %v822
  %v830 = vadd.f32 %v819, %v822
  %v831 = vadd.f32 %v820, %v822
  %840 = vrot.lane.b32.xlu0 %v824, 112
  %v841 = vpop.permute.xlu0 %840
  %842 = vrot.lane.b32.xlu0 %v825, 112
  %v843 = vpop.permute.xlu0 %842
  %844 = vrot.lane.b32.xlu0 %v826, 112
  %v845 = vpop.permute.xlu0 %844
  %846 = vrot.lane.b32.xlu0 %v827, 112
  %v847 = vpop.permute.xlu0 %846
  %848 = vrot.lane.b32.xlu0 %v828, 112
  %v849 = vpop.permute.xlu0 %848
  %850 = vrot.lane.b32.xlu0 %v829, 112
  %v851 = vpop.permute.xlu0 %850
  %852 = vrot.lane.b32.xlu0 %v830, 112
  %v853 = vpop.permute.xlu0 %852
  %854 = vrot.lane.b32.xlu0 %v831, 112
  %v855 = vpop.permute.xlu0 %854
  %v856 = vsel %vm365, %v841, 0
  %v858 = vsel %vm365, %v843, 0
  %v860 = vsel %vm365, %v845, 0
  %v862 = vsel %vm365, %v847, 0
  %v864 = vsel %vm365, %v849, 0
  %v866 = vsel %vm365, %v851, 0
  %v868 = vsel %vm365, %v853, 0
  %v870 = vsel %vm365, %v855, 0
  %872 = vmatprep.subr.mxu0 0.0
  %873 = vmatpush1.msra.mxu0 0.0
  %874 = vmatprep.subr.mxu0 0.0
  %875 = vmatpush1.msra.mxu0 0.0
  %876 = vmatprep.subr.mxu0 0.0
  %877 = vmatpush1.msra.mxu0 0.0
  %878 = vmatprep.subr.mxu0 0.0
  %879 = vmatpush1.msra.mxu0 0.0
  %880 = vmatprep.subr.mxu0 0.0
  %881 = vmatpush1.msra.mxu0 0.0
  %882 = vmatprep.subr.mxu0 0.0
  %883 = vmatpush1.msra.mxu0 0.0
  %884 = vmatprep.subr.mxu0 0.0
  %885 = vmatpush1.msra.mxu0 0.0
  %886 = vmatprep.subr.mxu0 0.0
  %887 = vmatpush1.msra.mxu0 0.0
  %888 = vmatprep.subr.mxu0 0.0
  %889 = vmatpush1.msra.mxu0 0.0
  %890 = vmatprep.subr.mxu0 0.0
  %891 = vmatpush1.msra.mxu0 0.0
  %892 = vmatprep.subr.mxu0 0.0
  %893 = vmatpush1.msra.mxu0 0.0
  %894 = vmatprep.subr.mxu0 0.0
  %895 = vmatpush1.msra.mxu0 0.0
  %896 = vmatprep.subr.mxu0 0.0
  %897 = vmatpush1.msra.mxu0 0.0
  %898 = vmatprep.subr.mxu0 0.0
  %899 = vmatpush1.msra.mxu0 0.0
  %900 = vmatprep.subr.mxu0 0.0
  %901 = vmatpush1.msra.mxu0 %v363
  %902 = vmatprep.subr.mxu0 0.0
  %903 = vmatpush1.msra.mxu0 %v362
  %904 = vmatprep.subr.mxu0 0.0
  %905 = vmatpush2.msra.mxu0 0.0
  %906 = vmatprep.subr.mxu0 0.0
  %907 = vmatpush2.msra.mxu0 0.0
  %908 = vmatprep.subr.mxu0 0.0
  %909 = vmatpush2.msra.mxu0 0.0
  %910 = vmatprep.subr.mxu0 0.0
  %911 = vmatpush2.msra.mxu0 0.0
  %912 = vmatprep.subr.mxu0 0.0
  %913 = vmatpush2.msra.mxu0 0.0
  %914 = vmatprep.subr.mxu0 0.0
  %915 = vmatpush2.msra.mxu0 0.0
  %916 = vmatprep.subr.mxu0 0.0
  %917 = vmatpush2.msra.mxu0 0.0
  %918 = vmatprep.subr.mxu0 0.0
  %919 = vmatpush2.msra.mxu0 0.0
  %920 = vmatprep.subr.mxu0 0.0
  %921 = vmatpush2.msra.mxu0 0.0
  %922 = vmatprep.subr.mxu0 0.0
  %923 = vmatpush2.msra.mxu0 0.0
  %924 = vmatprep.subr.mxu0 0.0
  %925 = vmatpush2.msra.mxu0 0.0
  %926 = vmatprep.subr.mxu0 0.0
  %927 = vmatpush2.msra.mxu0 0.0
  %928 = vmatprep.subr.mxu0 0.0
  %929 = vmatpush2.msra.mxu0 0.0
  %930 = vmatprep.subr.mxu0 0.0
  %931 = vmatpush2.msra.mxu0 0.0
  %932 = vmatprep.subr.mxu0 0.0
  %933 = vmatpush2.msra.mxu0 0.0
  %934 = vmatprep.subr.mxu0 0.0
  %935 = vmatpush2.msra.mxu0 0.0
  %936 = vmatprep.mubr.f32.mxu0 0.0
  %937 = vmatmul.mubr.f32.gmra.mxu0 %v856
  %v938 = vpop.f32.mrf.mxu0
  %v939 = vadd.f32 %v503, %v938
  %v940 = vpop.f32.mrf.mxu0
  %941 = vmatprep.mubr.f32.mxu0 0.0
  %942 = vmatmul.mubr.f32.gmra.mxu0 %v858
  %v943 = vpop.f32.mrf.mxu0
  %v944 = vadd.f32 %v503, %v943
  %v945 = vpop.f32.mrf.mxu0
  %946 = vmatprep.mubr.f32.mxu0 0.0
  %947 = vmatmul.mubr.f32.gmra.mxu0 %v860
  %v948 = vpop.f32.mrf.mxu0
  %v949 = vadd.f32 %v503, %v948
  %v950 = vpop.f32.mrf.mxu0
  %951 = vmatprep.mubr.f32.mxu0 0.0
  %952 = vmatmul.mubr.f32.gmra.mxu0 %v862
  %v953 = vpop.f32.mrf.mxu0
  %v954 = vadd.f32 %v503, %v953
  %v955 = vpop.f32.mrf.mxu0
  %956 = vmatprep.mubr.f32.mxu0 0.0
  %957 = vmatmul.mubr.f32.gmra.mxu0 %v864
  %v958 = vpop.f32.mrf.mxu0
  %v959 = vadd.f32 %v503, %v958
  %v960 = vpop.f32.mrf.mxu0
  %961 = vmatprep.mubr.f32.mxu0 0.0
  %962 = vmatmul.mubr.f32.gmra.mxu0 %v866
  %v963 = vpop.f32.mrf.mxu0
  %v964 = vadd.f32 %v503, %v963
  %v965 = vpop.f32.mrf.mxu0
  %966 = vmatprep.mubr.f32.mxu0 0.0
  %967 = vmatmul.mubr.f32.gmra.mxu0 %v868
  %v968 = vpop.f32.mrf.mxu0
  %v969 = vadd.f32 %v503, %v968
  %v970 = vpop.f32.mrf.mxu0
  %971 = vmatprep.mubr.f32.mxu0 0.0
  %972 = vmatmul.mubr.f32.gmra.mxu0 %v870
  %v973 = vpop.f32.mrf.mxu0
  %v974 = vadd.f32 %v503, %v973
  %v975 = vpop.f32.mrf.mxu0
  %976 = vdwg.mxu0
  %977 = vst [vmem:[%s11 + $0x8] sm:$0xff] %v939
  %978 = vst [vmem:[%s11 + $0x28] sm:$0xff] %v944
  %979 = vst [vmem:[%s11 + $0x48] sm:$0xff] %v949
  %980 = vst [vmem:[%s11 + $0x68] sm:$0xff] %v954
  %981 = vst [vmem:[%s11 + $0x88] sm:$0xff] %v959
  %982 = vst [vmem:[%s11 + $0xa8] sm:$0xff] %v964
  %983 = vst [vmem:[%s11 + $0xc8] sm:$0xff] %v969
  %984 = vst [vmem:[%s11 + $0xe8] sm:$0xff] %v974
  %985 = vrot.lane.b32.xlu0 %v343, 96
  %v986 = vpop.permute.xlu0 %985
  %987 = vrot.lane.b32.xlu0 %v344, 96
  %v988 = vpop.permute.xlu0 %987
  %989 = vrot.lane.b32.xlu0 %v345, 96
  %v990 = vpop.permute.xlu0 %989
  %991 = vrot.lane.b32.xlu0 %v346, 96
  %v992 = vpop.permute.xlu0 %991
  %993 = vrot.lane.b32.xlu0 %v347, 96
  %v994 = vpop.permute.xlu0 %993
  %995 = vrot.lane.b32.xlu0 %v348, 96
  %v996 = vpop.permute.xlu0 %995
  %997 = vrot.lane.b32.xlu0 %v349, 96
  %v998 = vpop.permute.xlu0 %997
  %999 = vrot.lane.b32.xlu0 %v350, 96
  %v1000 = vpop.permute.xlu0 %999
  %v1009 = vsel %vm365, %v986, 0.0
  %1010 = vadd.xlane.f32.xlu0 %v1009
  %v1011 = vpop.xlane.xlu0 %1010
  %v1012 = vsel %vm365, %v988, 0.0
  %1013 = vadd.xlane.f32.xlu0 %v1012
  %v1014 = vpop.xlane.xlu0 %1013
  %v1015 = vsel %vm365, %v990, 0.0
  %1016 = vadd.xlane.f32.xlu0 %v1015
  %v1017 = vpop.xlane.xlu0 %1016
  %v1018 = vsel %vm365, %v992, 0.0
  %1019 = vadd.xlane.f32.xlu0 %v1018
  %v1020 = vpop.xlane.xlu0 %1019
  %v1021 = vsel %vm365, %v994, 0.0
  %1022 = vadd.xlane.f32.xlu0 %v1021
  %v1023 = vpop.xlane.xlu0 %1022
  %v1024 = vsel %vm365, %v996, 0.0
  %1025 = vadd.xlane.f32.xlu0 %v1024
  %v1026 = vpop.xlane.xlu0 %1025
  %v1027 = vsel %vm365, %v998, 0.0
  %1028 = vadd.xlane.f32.xlu0 %v1027
  %v1029 = vpop.xlane.xlu0 %1028
  %v1030 = vsel %vm365, %v1000, 0.0
  %1031 = vadd.xlane.f32.xlu0 %v1030
  %v1032 = vpop.xlane.xlu0 %1031
  %v1033 = vmul.f32 %v1011, %v390
  %v1034 = vmul.f32 %v1014, %v390
  %v1035 = vmul.f32 %v1017, %v390
  %v1036 = vmul.f32 %v1020, %v390
  %v1037 = vmul.f32 %v1023, %v390
  %v1038 = vmul.f32 %v1026, %v390
  %v1039 = vmul.f32 %v1029, %v390
  %v1040 = vmul.f32 %v1032, %v390
  %v1041 = vsub.f32 %v343, %v1033
  %v1042 = vsub.f32 %v344, %v1034
  %v1043 = vsub.f32 %v345, %v1035
  %v1044 = vsub.f32 %v346, %v1036
  %v1045 = vsub.f32 %v347, %v1037
  %v1046 = vsub.f32 %v348, %v1038
  %v1047 = vsub.f32 %v349, %v1039
  %v1048 = vsub.f32 %v350, %v1040
  %v1049 = vmul.f32 %v1041, %v1041
  %v1050 = vmul.f32 %v1042, %v1042
  %v1051 = vmul.f32 %v1043, %v1043
  %v1052 = vmul.f32 %v1044, %v1044
  %v1053 = vmul.f32 %v1045, %v1045
  %v1054 = vmul.f32 %v1046, %v1046
  %v1055 = vmul.f32 %v1047, %v1047
  %v1056 = vmul.f32 %v1048, %v1048
  %1065 = vrot.lane.b32.xlu0 %v1049, 96
  %v1066 = vpop.permute.xlu0 %1065
  %1067 = vrot.lane.b32.xlu0 %v1050, 96
  %v1068 = vpop.permute.xlu0 %1067
  %1069 = vrot.lane.b32.xlu0 %v1051, 96
  %v1070 = vpop.permute.xlu0 %1069
  %1071 = vrot.lane.b32.xlu0 %v1052, 96
  %v1072 = vpop.permute.xlu0 %1071
  %1073 = vrot.lane.b32.xlu0 %v1053, 96
  %v1074 = vpop.permute.xlu0 %1073
  %1075 = vrot.lane.b32.xlu0 %v1054, 96
  %v1076 = vpop.permute.xlu0 %1075
  %1077 = vrot.lane.b32.xlu0 %v1055, 96
  %v1078 = vpop.permute.xlu0 %1077
  %1079 = vrot.lane.b32.xlu0 %v1056, 96
  %v1080 = vpop.permute.xlu0 %1079
  %v1089 = vsel %vm365, %v1066, 0.0
  %1090 = vadd.xlane.f32.xlu0 %v1089
  %v1091 = vpop.xlane.xlu0 %1090
  %v1092 = vsel %vm365, %v1068, 0.0
  %1093 = vadd.xlane.f32.xlu0 %v1092
  %v1094 = vpop.xlane.xlu0 %1093
  %v1095 = vsel %vm365, %v1070, 0.0
  %1096 = vadd.xlane.f32.xlu0 %v1095
  %v1097 = vpop.xlane.xlu0 %1096
  %v1098 = vsel %vm365, %v1072, 0.0
  %1099 = vadd.xlane.f32.xlu0 %v1098
  %v1100 = vpop.xlane.xlu0 %1099
  %v1101 = vsel %vm365, %v1074, 0.0
  %1102 = vadd.xlane.f32.xlu0 %v1101
  %v1103 = vpop.xlane.xlu0 %1102
  %v1104 = vsel %vm365, %v1076, 0.0
  %1105 = vadd.xlane.f32.xlu0 %v1104
  %v1106 = vpop.xlane.xlu0 %1105
  %v1107 = vsel %vm365, %v1078, 0.0
  %1108 = vadd.xlane.f32.xlu0 %v1107
  %v1109 = vpop.xlane.xlu0 %1108
  %v1110 = vsel %vm365, %v1080, 0.0
  %1111 = vadd.xlane.f32.xlu0 %v1110
  %v1112 = vpop.xlane.xlu0 %1111
  %v1113 = vmul.f32 %v1091, %v390
  %v1114 = vmul.f32 %v1094, %v390
  %v1115 = vmul.f32 %v1097, %v390
  %v1116 = vmul.f32 %v1100, %v390
  %v1117 = vmul.f32 %v1103, %v390
  %v1118 = vmul.f32 %v1106, %v390
  %v1119 = vmul.f32 %v1109, %v390
  %v1120 = vmul.f32 %v1112, %v390
  %v1121 = vadd.f32 %v1113, 1e-05
  %v1122 = vadd.f32 %v1114, 1e-05
  %v1123 = vadd.f32 %v1115, 1e-05
  %v1124 = vadd.f32 %v1116, 1e-05
  %v1125 = vadd.f32 %v1117, 1e-05
  %v1126 = vadd.f32 %v1118, 1e-05
  %v1127 = vadd.f32 %v1119, 1e-05
  %v1128 = vadd.f32 %v1120, 1e-05
  %v1129 = vrsqrt.pop %v1121
  %v1130 = vrsqrt.pop %v1122
  %v1131 = vrsqrt.pop %v1123
  %v1132 = vrsqrt.pop %v1124
  %v1133 = vrsqrt.pop %v1125
  %v1134 = vrsqrt.pop %v1126
  %v1135 = vrsqrt.pop %v1127
  %v1136 = vrsqrt.pop %v1128
  %v1137 = vmul.f32 %v1041, %v1129
  %v1138 = vmul.f32 %v1042, %v1130
  %v1139 = vmul.f32 %v1043, %v1131
  %v1140 = vmul.f32 %v1044, %v1132
  %v1141 = vmul.f32 %v1045, %v1133
  %v1142 = vmul.f32 %v1046, %v1134
  %v1143 = vmul.f32 %v1047, %v1135
  %v1144 = vmul.f32 %v1048, %v1136
  %1145 = vrot.lane.b32.xlu0 %v475, 32
  %v1146 = vpop.permute.xlu0 %1145
  %v1148 = vmul.f32 %v1137, %v1146
  %v1149 = vmul.f32 %v1138, %v1146
  %v1150 = vmul.f32 %v1139, %v1146
  %v1151 = vmul.f32 %v1140, %v1146
  %v1152 = vmul.f32 %v1141, %v1146
  %v1153 = vmul.f32 %v1142, %v1146
  %v1154 = vmul.f32 %v1143, %v1146
  %v1155 = vmul.f32 %v1144, %v1146
  %1156 = vrot.lane.b32.xlu0 %v489, 32
  %v1157 = vpop.permute.xlu0 %1156
  %v1159 = vadd.f32 %v1148, %v1157
  %v1160 = vadd.f32 %v1149, %v1157
  %v1161 = vadd.f32 %v1150, %v1157
  %v1162 = vadd.f32 %v1151, %v1157
  %v1163 = vadd.f32 %v1152, %v1157
  %v1164 = vadd.f32 %v1153, %v1157
  %v1165 = vadd.f32 %v1154, %v1157
  %v1166 = vadd.f32 %v1155, %v1157
  %1175 = vrot.lane.b32.xlu0 %v1159, 96
  %v1176 = vpop.permute.xlu0 %1175
  %1177 = vrot.lane.b32.xlu0 %v1160, 96
  %v1178 = vpop.permute.xlu0 %1177
  %1179 = vrot.lane.b32.xlu0 %v1161, 96
  %v1180 = vpop.permute.xlu0 %1179
  %1181 = vrot.lane.b32.xlu0 %v1162, 96
  %v1182 = vpop.permute.xlu0 %1181
  %1183 = vrot.lane.b32.xlu0 %v1163, 96
  %v1184 = vpop.permute.xlu0 %1183
  %1185 = vrot.lane.b32.xlu0 %v1164, 96
  %v1186 = vpop.permute.xlu0 %1185
  %1187 = vrot.lane.b32.xlu0 %v1165, 96
  %v1188 = vpop.permute.xlu0 %1187
  %1189 = vrot.lane.b32.xlu0 %v1166, 96
  %v1190 = vpop.permute.xlu0 %1189
  %v1191 = vsel %vm365, %v1176, 0
  %v1193 = vsel %vm365, %v1178, 0
  %v1195 = vsel %vm365, %v1180, 0
  %v1197 = vsel %vm365, %v1182, 0
  %v1199 = vsel %vm365, %v1184, 0
  %v1201 = vsel %vm365, %v1186, 0
  %v1203 = vsel %vm365, %v1188, 0
  %v1205 = vsel %vm365, %v1190, 0
  %1207 = vmatprep.subr.mxu0 0.0
  %1208 = vmatpush1.msra.mxu0 0.0
  %1209 = vmatprep.subr.mxu0 0.0
  %1210 = vmatpush1.msra.mxu0 0.0
  %1211 = vmatprep.subr.mxu0 0.0
  %1212 = vmatpush1.msra.mxu0 0.0
  %1213 = vmatprep.subr.mxu0 0.0
  %1214 = vmatpush1.msra.mxu0 0.0
  %1215 = vmatprep.subr.mxu0 0.0
  %1216 = vmatpush1.msra.mxu0 0.0
  %1217 = vmatprep.subr.mxu0 0.0
  %1218 = vmatpush1.msra.mxu0 0.0
  %1219 = vmatprep.subr.mxu0 0.0
  %1220 = vmatpush1.msra.mxu0 0.0
  %1221 = vmatprep.subr.mxu0 0.0
  %1222 = vmatpush1.msra.mxu0 0.0
  %1223 = vmatprep.subr.mxu0 0.0
  %1224 = vmatpush1.msra.mxu0 0.0
  %1225 = vmatprep.subr.mxu0 0.0
  %1226 = vmatpush1.msra.mxu0 0.0
  %1227 = vmatprep.subr.mxu0 0.0
  %1228 = vmatpush1.msra.mxu0 0.0
  %1229 = vmatprep.subr.mxu0 0.0
  %1230 = vmatpush1.msra.mxu0 0.0
  %1231 = vmatprep.subr.mxu0 0.0
  %1232 = vmatpush1.msra.mxu0 0.0
  %1233 = vmatprep.subr.mxu0 0.0
  %1234 = vmatpush1.msra.mxu0 0.0
  %1235 = vmatprep.subr.mxu0 0.0
  %1236 = vmatpush1.msra.mxu0 %v363
  %1237 = vmatprep.subr.mxu0 0.0
  %1238 = vmatpush1.msra.mxu0 %v362
  %1239 = vmatprep.subr.mxu0 0.0
  %1240 = vmatpush2.msra.mxu0 0.0
  %1241 = vmatprep.subr.mxu0 0.0
  %1242 = vmatpush2.msra.mxu0 0.0
  %1243 = vmatprep.subr.mxu0 0.0
  %1244 = vmatpush2.msra.mxu0 0.0
  %1245 = vmatprep.subr.mxu0 0.0
  %1246 = vmatpush2.msra.mxu0 0.0
  %1247 = vmatprep.subr.mxu0 0.0
  %1248 = vmatpush2.msra.mxu0 0.0
  %1249 = vmatprep.subr.mxu0 0.0
  %1250 = vmatpush2.msra.mxu0 0.0
  %1251 = vmatprep.subr.mxu0 0.0
  %1252 = vmatpush2.msra.mxu0 0.0
  %1253 = vmatprep.subr.mxu0 0.0
  %1254 = vmatpush2.msra.mxu0 0.0
  %1255 = vmatprep.subr.mxu0 0.0
  %1256 = vmatpush2.msra.mxu0 0.0
  %1257 = vmatprep.subr.mxu0 0.0
  %1258 = vmatpush2.msra.mxu0 0.0
  %1259 = vmatprep.subr.mxu0 0.0
  %1260 = vmatpush2.msra.mxu0 0.0
  %1261 = vmatprep.subr.mxu0 0.0
  %1262 = vmatpush2.msra.mxu0 0.0
  %1263 = vmatprep.subr.mxu0 0.0
  %1264 = vmatpush2.msra.mxu0 0.0
  %1265 = vmatprep.subr.mxu0 0.0
  %1266 = vmatpush2.msra.mxu0 0.0
  %1267 = vmatprep.subr.mxu0 0.0
  %1268 = vmatpush2.msra.mxu0 0.0
  %1269 = vmatprep.subr.mxu0 0.0
  %1270 = vmatpush2.msra.mxu0 0.0
  %1271 = vmatprep.mubr.f32.mxu0 0.0
  %1272 = vmatmul.mubr.f32.gmra.mxu0 %v1191
  %v1273 = vpop.f32.mrf.mxu0
  %v1274 = vadd.f32 %v503, %v1273
  %v1275 = vpop.f32.mrf.mxu0
  %1276 = vmatprep.mubr.f32.mxu0 0.0
  %1277 = vmatmul.mubr.f32.gmra.mxu0 %v1193
  %v1278 = vpop.f32.mrf.mxu0
  %v1279 = vadd.f32 %v503, %v1278
  %v1280 = vpop.f32.mrf.mxu0
  %1281 = vmatprep.mubr.f32.mxu0 0.0
  %1282 = vmatmul.mubr.f32.gmra.mxu0 %v1195
  %v1283 = vpop.f32.mrf.mxu0
  %v1284 = vadd.f32 %v503, %v1283
  %v1285 = vpop.f32.mrf.mxu0
  %1286 = vmatprep.mubr.f32.mxu0 0.0
  %1287 = vmatmul.mubr.f32.gmra.mxu0 %v1197
  %v1288 = vpop.f32.mrf.mxu0
  %v1289 = vadd.f32 %v503, %v1288
  %v1290 = vpop.f32.mrf.mxu0
  %1291 = vmatprep.mubr.f32.mxu0 0.0
  %1292 = vmatmul.mubr.f32.gmra.mxu0 %v1199
  %v1293 = vpop.f32.mrf.mxu0
  %v1294 = vadd.f32 %v503, %v1293
  %v1295 = vpop.f32.mrf.mxu0
  %1296 = vmatprep.mubr.f32.mxu0 0.0
  %1297 = vmatmul.mubr.f32.gmra.mxu0 %v1201
  %v1298 = vpop.f32.mrf.mxu0
  %v1299 = vadd.f32 %v503, %v1298
  %v1300 = vpop.f32.mrf.mxu0
  %1301 = vmatprep.mubr.f32.mxu0 0.0
  %1302 = vmatmul.mubr.f32.gmra.mxu0 %v1203
  %v1303 = vpop.f32.mrf.mxu0
  %v1304 = vadd.f32 %v503, %v1303
  %v1305 = vpop.f32.mrf.mxu0
  %1306 = vmatprep.mubr.f32.mxu0 0.0
  %1307 = vmatmul.mubr.f32.gmra.mxu0 %v1205
  %v1308 = vpop.f32.mrf.mxu0
  %v1309 = vadd.f32 %v503, %v1308
  %v1310 = vpop.f32.mrf.mxu0
  %1311 = vdwg.mxu0
  %1312 = vst [vmem:[%s11 + $0x10] sm:$0xff] %v1274
  %1313 = vst [vmem:[%s11 + $0x30] sm:$0xff] %v1279
  %1314 = vst [vmem:[%s11 + $0x50] sm:$0xff] %v1284
  %1315 = vst [vmem:[%s11 + $0x70] sm:$0xff] %v1289
  %1316 = vst [vmem:[%s11 + $0x90] sm:$0xff] %v1294
  %1317 = vst [vmem:[%s11 + $0xb0] sm:$0xff] %v1299
  %1318 = vst [vmem:[%s11 + $0xd0] sm:$0xff] %v1304
  %1319 = vst [vmem:[%s11 + $0xf0] sm:$0xff] %v1309
  %1320 = vrot.lane.b32.xlu0 %v343, 80
  %v1321 = vpop.permute.xlu0 %1320
  %1322 = vrot.lane.b32.xlu0 %v344, 80
  %v1323 = vpop.permute.xlu0 %1322
  %1324 = vrot.lane.b32.xlu0 %v345, 80
  %v1325 = vpop.permute.xlu0 %1324
  %1326 = vrot.lane.b32.xlu0 %v346, 80
  %v1327 = vpop.permute.xlu0 %1326
  %1328 = vrot.lane.b32.xlu0 %v347, 80
  %v1329 = vpop.permute.xlu0 %1328
  %1330 = vrot.lane.b32.xlu0 %v348, 80
  %v1331 = vpop.permute.xlu0 %1330
  %1332 = vrot.lane.b32.xlu0 %v349, 80
  %v1333 = vpop.permute.xlu0 %1332
  %1334 = vrot.lane.b32.xlu0 %v350, 80
  %v1335 = vpop.permute.xlu0 %1334
  %v1344 = vsel %vm365, %v1321, 0.0
  %1345 = vadd.xlane.f32.xlu0 %v1344
  %v1346 = vpop.xlane.xlu0 %1345
  %v1347 = vsel %vm365, %v1323, 0.0
  %1348 = vadd.xlane.f32.xlu0 %v1347
  %v1349 = vpop.xlane.xlu0 %1348
  %v1350 = vsel %vm365, %v1325, 0.0
  %1351 = vadd.xlane.f32.xlu0 %v1350
  %v1352 = vpop.xlane.xlu0 %1351
  %v1353 = vsel %vm365, %v1327, 0.0
  %1354 = vadd.xlane.f32.xlu0 %v1353
  %v1355 = vpop.xlane.xlu0 %1354
  %v1356 = vsel %vm365, %v1329, 0.0
  %1357 = vadd.xlane.f32.xlu0 %v1356
  %v1358 = vpop.xlane.xlu0 %1357
  %v1359 = vsel %vm365, %v1331, 0.0
  %1360 = vadd.xlane.f32.xlu0 %v1359
  %v1361 = vpop.xlane.xlu0 %1360
  %v1362 = vsel %vm365, %v1333, 0.0
  %1363 = vadd.xlane.f32.xlu0 %v1362
  %v1364 = vpop.xlane.xlu0 %1363
  %v1365 = vsel %vm365, %v1335, 0.0
  %1366 = vadd.xlane.f32.xlu0 %v1365
  %v1367 = vpop.xlane.xlu0 %1366
  %v1368 = vmul.f32 %v1346, %v390
  %v1369 = vmul.f32 %v1349, %v390
  %v1370 = vmul.f32 %v1352, %v390
  %v1371 = vmul.f32 %v1355, %v390
  %v1372 = vmul.f32 %v1358, %v390
  %v1373 = vmul.f32 %v1361, %v390
  %v1374 = vmul.f32 %v1364, %v390
  %v1375 = vmul.f32 %v1367, %v390
  %v1376 = vsub.f32 %v343, %v1368
  %v1377 = vsub.f32 %v344, %v1369
  %v1378 = vsub.f32 %v345, %v1370
  %v1379 = vsub.f32 %v346, %v1371
  %v1380 = vsub.f32 %v347, %v1372
  %v1381 = vsub.f32 %v348, %v1373
  %v1382 = vsub.f32 %v349, %v1374
  %v1383 = vsub.f32 %v350, %v1375
  %v1384 = vmul.f32 %v1376, %v1376
  %v1385 = vmul.f32 %v1377, %v1377
  %v1386 = vmul.f32 %v1378, %v1378
  %v1387 = vmul.f32 %v1379, %v1379
  %v1388 = vmul.f32 %v1380, %v1380
  %v1389 = vmul.f32 %v1381, %v1381
  %v1390 = vmul.f32 %v1382, %v1382
  %v1391 = vmul.f32 %v1383, %v1383
  %1400 = vrot.lane.b32.xlu0 %v1384, 80
  %v1401 = vpop.permute.xlu0 %1400
  %1402 = vrot.lane.b32.xlu0 %v1385, 80
  %v1403 = vpop.permute.xlu0 %1402
  %1404 = vrot.lane.b32.xlu0 %v1386, 80
  %v1405 = vpop.permute.xlu0 %1404
  %1406 = vrot.lane.b32.xlu0 %v1387, 80
  %v1407 = vpop.permute.xlu0 %1406
  %1408 = vrot.lane.b32.xlu0 %v1388, 80
  %v1409 = vpop.permute.xlu0 %1408
  %1410 = vrot.lane.b32.xlu0 %v1389, 80
  %v1411 = vpop.permute.xlu0 %1410
  %1412 = vrot.lane.b32.xlu0 %v1390, 80
  %v1413 = vpop.permute.xlu0 %1412
  %1414 = vrot.lane.b32.xlu0 %v1391, 80
  %v1415 = vpop.permute.xlu0 %1414
  %v1424 = vsel %vm365, %v1401, 0.0
  %1425 = vadd.xlane.f32.xlu0 %v1424
  %v1426 = vpop.xlane.xlu0 %1425
  %v1427 = vsel %vm365, %v1403, 0.0
  %1428 = vadd.xlane.f32.xlu0 %v1427
  %v1429 = vpop.xlane.xlu0 %1428
  %v1430 = vsel %vm365, %v1405, 0.0
  %1431 = vadd.xlane.f32.xlu0 %v1430
  %v1432 = vpop.xlane.xlu0 %1431
  %v1433 = vsel %vm365, %v1407, 0.0
  %1434 = vadd.xlane.f32.xlu0 %v1433
  %v1435 = vpop.xlane.xlu0 %1434
  %v1436 = vsel %vm365, %v1409, 0.0
  %1437 = vadd.xlane.f32.xlu0 %v1436
  %v1438 = vpop.xlane.xlu0 %1437
  %v1439 = vsel %vm365, %v1411, 0.0
  %1440 = vadd.xlane.f32.xlu0 %v1439
  %v1441 = vpop.xlane.xlu0 %1440
  %v1442 = vsel %vm365, %v1413, 0.0
  %1443 = vadd.xlane.f32.xlu0 %v1442
  %v1444 = vpop.xlane.xlu0 %1443
  %v1445 = vsel %vm365, %v1415, 0.0
  %1446 = vadd.xlane.f32.xlu0 %v1445
  %v1447 = vpop.xlane.xlu0 %1446
  %v1448 = vmul.f32 %v1426, %v390
  %v1449 = vmul.f32 %v1429, %v390
  %v1450 = vmul.f32 %v1432, %v390
  %v1451 = vmul.f32 %v1435, %v390
  %v1452 = vmul.f32 %v1438, %v390
  %v1453 = vmul.f32 %v1441, %v390
  %v1454 = vmul.f32 %v1444, %v390
  %v1455 = vmul.f32 %v1447, %v390
  %v1456 = vadd.f32 %v1448, 1e-05
  %v1457 = vadd.f32 %v1449, 1e-05
  %v1458 = vadd.f32 %v1450, 1e-05
  %v1459 = vadd.f32 %v1451, 1e-05
  %v1460 = vadd.f32 %v1452, 1e-05
  %v1461 = vadd.f32 %v1453, 1e-05
  %v1462 = vadd.f32 %v1454, 1e-05
  %v1463 = vadd.f32 %v1455, 1e-05
  %v1464 = vrsqrt.pop %v1456
  %v1465 = vrsqrt.pop %v1457
  %v1466 = vrsqrt.pop %v1458
  %v1467 = vrsqrt.pop %v1459
  %v1468 = vrsqrt.pop %v1460
  %v1469 = vrsqrt.pop %v1461
  %v1470 = vrsqrt.pop %v1462
  %v1471 = vrsqrt.pop %v1463
  %v1472 = vmul.f32 %v1376, %v1464
  %v1473 = vmul.f32 %v1377, %v1465
  %v1474 = vmul.f32 %v1378, %v1466
  %v1475 = vmul.f32 %v1379, %v1467
  %v1476 = vmul.f32 %v1380, %v1468
  %v1477 = vmul.f32 %v1381, %v1469
  %v1478 = vmul.f32 %v1382, %v1470
  %v1479 = vmul.f32 %v1383, %v1471
  %1480 = vrot.lane.b32.xlu0 %v475, 48
  %v1481 = vpop.permute.xlu0 %1480
  %v1483 = vmul.f32 %v1472, %v1481
  %v1484 = vmul.f32 %v1473, %v1481
  %v1485 = vmul.f32 %v1474, %v1481
  %v1486 = vmul.f32 %v1475, %v1481
  %v1487 = vmul.f32 %v1476, %v1481
  %v1488 = vmul.f32 %v1477, %v1481
  %v1489 = vmul.f32 %v1478, %v1481
  %v1490 = vmul.f32 %v1479, %v1481
  %1491 = vrot.lane.b32.xlu0 %v489, 48
  %v1492 = vpop.permute.xlu0 %1491
  %v1494 = vadd.f32 %v1483, %v1492
  %v1495 = vadd.f32 %v1484, %v1492
  %v1496 = vadd.f32 %v1485, %v1492
  %v1497 = vadd.f32 %v1486, %v1492
  %v1498 = vadd.f32 %v1487, %v1492
  %v1499 = vadd.f32 %v1488, %v1492
  %v1500 = vadd.f32 %v1489, %v1492
  %v1501 = vadd.f32 %v1490, %v1492
  %1510 = vrot.lane.b32.xlu0 %v1494, 80
  %v1511 = vpop.permute.xlu0 %1510
  %1512 = vrot.lane.b32.xlu0 %v1495, 80
  %v1513 = vpop.permute.xlu0 %1512
  %1514 = vrot.lane.b32.xlu0 %v1496, 80
  %v1515 = vpop.permute.xlu0 %1514
  %1516 = vrot.lane.b32.xlu0 %v1497, 80
  %v1517 = vpop.permute.xlu0 %1516
  %1518 = vrot.lane.b32.xlu0 %v1498, 80
  %v1519 = vpop.permute.xlu0 %1518
  %1520 = vrot.lane.b32.xlu0 %v1499, 80
  %v1521 = vpop.permute.xlu0 %1520
  %1522 = vrot.lane.b32.xlu0 %v1500, 80
  %v1523 = vpop.permute.xlu0 %1522
  %1524 = vrot.lane.b32.xlu0 %v1501, 80
  %v1525 = vpop.permute.xlu0 %1524
  %v1526 = vsel %vm365, %v1511, 0
  %v1528 = vsel %vm365, %v1513, 0
  %v1530 = vsel %vm365, %v1515, 0
  %v1532 = vsel %vm365, %v1517, 0
  %v1534 = vsel %vm365, %v1519, 0
  %v1536 = vsel %vm365, %v1521, 0
  %v1538 = vsel %vm365, %v1523, 0
  %v1540 = vsel %vm365, %v1525, 0
  %1542 = vmatprep.subr.mxu0 0.0
  %1543 = vmatpush1.msra.mxu0 0.0
  %1544 = vmatprep.subr.mxu0 0.0
  %1545 = vmatpush1.msra.mxu0 0.0
  %1546 = vmatprep.subr.mxu0 0.0
  %1547 = vmatpush1.msra.mxu0 0.0
  %1548 = vmatprep.subr.mxu0 0.0
  %1549 = vmatpush1.msra.mxu0 0.0
  %1550 = vmatprep.subr.mxu0 0.0
  %1551 = vmatpush1.msra.mxu0 0.0
  %1552 = vmatprep.subr.mxu0 0.0
  %1553 = vmatpush1.msra.mxu0 0.0
  %1554 = vmatprep.subr.mxu0 0.0
  %1555 = vmatpush1.msra.mxu0 0.0
  %1556 = vmatprep.subr.mxu0 0.0
  %1557 = vmatpush1.msra.mxu0 0.0
  %1558 = vmatprep.subr.mxu0 0.0
  %1559 = vmatpush1.msra.mxu0 0.0
  %1560 = vmatprep.subr.mxu0 0.0
  %1561 = vmatpush1.msra.mxu0 0.0
  %1562 = vmatprep.subr.mxu0 0.0
  %1563 = vmatpush1.msra.mxu0 0.0
  %1564 = vmatprep.subr.mxu0 0.0
  %1565 = vmatpush1.msra.mxu0 0.0
  %1566 = vmatprep.subr.mxu0 0.0
  %1567 = vmatpush1.msra.mxu0 0.0
  %1568 = vmatprep.subr.mxu0 0.0
  %1569 = vmatpush1.msra.mxu0 0.0
  %1570 = vmatprep.subr.mxu0 0.0
  %1571 = vmatpush1.msra.mxu0 %v363
  %1572 = vmatprep.subr.mxu0 0.0
  %1573 = vmatpush1.msra.mxu0 %v362
  %1574 = vmatprep.subr.mxu0 0.0
  %1575 = vmatpush2.msra.mxu0 0.0
  %1576 = vmatprep.subr.mxu0 0.0
  %1577 = vmatpush2.msra.mxu0 0.0
  %1578 = vmatprep.subr.mxu0 0.0
  %1579 = vmatpush2.msra.mxu0 0.0
  %1580 = vmatprep.subr.mxu0 0.0
  %1581 = vmatpush2.msra.mxu0 0.0
  %1582 = vmatprep.subr.mxu0 0.0
  %1583 = vmatpush2.msra.mxu0 0.0
  %1584 = vmatprep.subr.mxu0 0.0
  %1585 = vmatpush2.msra.mxu0 0.0
  %1586 = vmatprep.subr.mxu0 0.0
  %1587 = vmatpush2.msra.mxu0 0.0
  %1588 = vmatprep.subr.mxu0 0.0
  %1589 = vmatpush2.msra.mxu0 0.0
  %1590 = vmatprep.subr.mxu0 0.0
  %1591 = vmatpush2.msra.mxu0 0.0
  %1592 = vmatprep.subr.mxu0 0.0
  %1593 = vmatpush2.msra.mxu0 0.0
  %1594 = vmatprep.subr.mxu0 0.0
  %1595 = vmatpush2.msra.mxu0 0.0
  %1596 = vmatprep.subr.mxu0 0.0
  %1597 = vmatpush2.msra.mxu0 0.0
  %1598 = vmatprep.subr.mxu0 0.0
  %1599 = vmatpush2.msra.mxu0 0.0
  %1600 = vmatprep.subr.mxu0 0.0
  %1601 = vmatpush2.msra.mxu0 0.0
  %1602 = vmatprep.subr.mxu0 0.0
  %1603 = vmatpush2.msra.mxu0 0.0
  %1604 = vmatprep.subr.mxu0 0.0
  %1605 = vmatpush2.msra.mxu0 0.0
  %1606 = vmatprep.mubr.f32.mxu0 0.0
  %1607 = vmatmul.mubr.f32.gmra.mxu0 %v1526
  %v1608 = vpop.f32.mrf.mxu0
  %v1609 = vadd.f32 %v503, %v1608
  %v1610 = vpop.f32.mrf.mxu0
  %1611 = vmatprep.mubr.f32.mxu0 0.0
  %1612 = vmatmul.mubr.f32.gmra.mxu0 %v1528
  %v1613 = vpop.f32.mrf.mxu0
  %v1614 = vadd.f32 %v503, %v1613
  %v1615 = vpop.f32.mrf.mxu0
  %1616 = vmatprep.mubr.f32.mxu0 0.0
  %1617 = vmatmul.mubr.f32.gmra.mxu0 %v1530
  %v1618 = vpop.f32.mrf.mxu0
  %v1619 = vadd.f32 %v503, %v1618
  %v1620 = vpop.f32.mrf.mxu0
  %1621 = vmatprep.mubr.f32.mxu0 0.0
  %1622 = vmatmul.mubr.f32.gmra.mxu0 %v1532
  %v1623 = vpop.f32.mrf.mxu0
  %v1624 = vadd.f32 %v503, %v1623
  %v1625 = vpop.f32.mrf.mxu0
  %1626 = vmatprep.mubr.f32.mxu0 0.0
  %1627 = vmatmul.mubr.f32.gmra.mxu0 %v1534
  %v1628 = vpop.f32.mrf.mxu0
  %v1629 = vadd.f32 %v503, %v1628
  %v1630 = vpop.f32.mrf.mxu0
  %1631 = vmatprep.mubr.f32.mxu0 0.0
  %1632 = vmatmul.mubr.f32.gmra.mxu0 %v1536
  %v1633 = vpop.f32.mrf.mxu0
  %v1634 = vadd.f32 %v503, %v1633
  %v1635 = vpop.f32.mrf.mxu0
  %1636 = vmatprep.mubr.f32.mxu0 0.0
  %1637 = vmatmul.mubr.f32.gmra.mxu0 %v1538
  %v1638 = vpop.f32.mrf.mxu0
  %v1639 = vadd.f32 %v503, %v1638
  %v1640 = vpop.f32.mrf.mxu0
  %1641 = vmatprep.mubr.f32.mxu0 0.0
  %1642 = vmatmul.mubr.f32.gmra.mxu0 %v1540
  %v1643 = vpop.f32.mrf.mxu0
  %v1644 = vadd.f32 %v503, %v1643
  %v1645 = vpop.f32.mrf.mxu0
  %1646 = vdwg.mxu0
  %1647 = vst [vmem:[%s11 + $0x18] sm:$0xff] %v1609
  %1648 = vst [vmem:[%s11 + $0x38] sm:$0xff] %v1614
  %1649 = vst [vmem:[%s11 + $0x58] sm:$0xff] %v1619
  %1650 = vst [vmem:[%s11 + $0x78] sm:$0xff] %v1624
  %1651 = vst [vmem:[%s11 + $0x98] sm:$0xff] %v1629
  %1652 = vst [vmem:[%s11 + $0xb8] sm:$0xff] %v1634
  %1653 = vst [vmem:[%s11 + $0xd8] sm:$0xff] %v1639
  %1654 = vst [vmem:[%s11 + $0xf8] sm:$0xff] %v1644
  // Predicated region
  $region42: #{gridnet_block_forward_pallas.7} parent=0 // pred_check
    _
  $region43: #{gridnet_block_forward_pallas.7} parent=0 // pred_check_branch
    %1656 = sbr.rel (0) target = $region45
  $region44: #{gridnet_block_forward_pallas.7} parent=0 // pred_region
    _
  $region45: #{gridnet_block_forward_pallas.7} parent=0 // pred_fallthru
    _
  // Predicated region
  $region46: #{gridnet_block_forward_pallas.7} parent=0 // pred_check
    _
  $region47: #{gridnet_block_forward_pallas.7} parent=0 // pred_check_branch
    %1658 = sbr.rel (0) target = $region49
  $region48: #{gridnet_block_forward_pallas.7} parent=0 // pred_region
    _
  $region49: #{gridnet_block_forward_pallas.7} parent=0 // pred_fallthru
    _
  // Predicated region
  $region50: #{gridnet_block_forward_pallas.7} parent=0 // pred_check
    _
  $region51: #{gridnet_block_forward_pallas.7} parent=0 // pred_check_branch
    %1660 = sbr.rel (0) target = $region53
  $region52: #{gridnet_block_forward_pallas.7} parent=0 // pred_region
    _
  $region53: #{gridnet_block_forward_pallas.7} parent=0 // pred_fallthru
    _
  // Predicated region
  $region54: #{gridnet_block_forward_pallas.7} parent=0 // pred_check
    _
  $region55: #{gridnet_block_forward_pallas.7} parent=0 // pred_check_branch
    %1662 = sbr.rel (0) target = $region57
  $region56: #{gridnet_block_forward_pallas.7} parent=0 // pred_region
    _
  $region57: #{gridnet_block_forward_pallas.7} parent=0 // pred_fallthru
    _

// kernel: gridnet_block_forward_pallas.9
$region0: #{gridnet_block_forward_pallas.9}
  #allocation0 [shape = 'u32[]', space=smem, size = 0x4, offset = 0x4, fixed_abs, tag = 'smem constant byte address 0x4 - core index']
  #allocation1 [shape = 'u32[144,128]{1,0:T(1,128)}', space=vmem, size = 0x12000, scoped, tag = 'internal scratch']
  %s0 = inlined_call_operand.vmem [shape: f32[8,2,16,32], index: 0, kind: input, shape index: {}]
  %s1 = inlined_call_operand.vmem [shape: f32[2,8,16,16], index: 1, kind: input, shape index: {}]
  %s2 = inlined_call_operand.vmem [shape: f32[32,16], index: 2, kind: input, shape index: {}]
  %s3 = inlined_call_operand.vmem [shape: f32[1,16], index: 3, kind: input, shape index: {}]
  %s4 = inlined_call_operand.hbm [shape: f32[2,8,16,16], index: 4, kind: output, shape index: {}]
  %s5 = sld [smem:[#allocation0]]
  $region87: #{gridnet_block_forward_pallas.9} parent=0
    _
  %s7 = ssub.s32 1, %s5
  %s8 = scalar_select 0, %s7, %s5
  $region1: #{gridnet_block_forward_pallas.9} parent=0
    #allocation2 [shape = 'u8[131072]{0}', space=vmem, size = 0x20000, scoped, tag = 'input window, operand 0']
    #allocation3 [shape = 'u8[131072]{0}', space=vmem, size = 0x20000, scoped, tag = 'output window, operand 0']
    #allocation4 [shape = 's32[2]{0}', space=sflag, size = 0x8, scoped, tag = 'scoped memory for gridnet_block_forward_pallas.9']
    %9 = vsyncpa [#allocation4], 0
    %s10 = scalar_lea.sflag [#allocation4], 1
    %11 = vsyncpa %s10, 0
    loop: start=0, step=1, limit=4
    $region2: #{gridnet_block_forward_pallas.9} parent=1 // loop_pre_header
      _
    $region3: #{gridnet_block_forward_pallas.9} parent=1 // loop_header
      %s13 = sphi 0, %s17
      %p14 = scmp.ge.s32.totalorder %s13, 4
      %s23 = sphi 0, %s25
      %s26 = sphi 0, %s23
      %s27 = sphi 0, %s26
      %s43 = sphi 0, %s27
      %s49 = sphi 0, %s51
      %s52 = sphi 0, %s49
      %s53 = sphi 0, %s52
      %s69 = sphi 0, %s53
      %s73 = sphi 0, %s73
      %s75 = sphi 0, %s73
      %s76 = sphi 0, %s75
      %s90 = sphi 0, %s76
      %s94 = sphi 0, %s94
      %s96 = sphi 0, %s94
      %s97 = sphi 0, %s96
      %s111 = sphi 0, %s97
      %s117 = sphi 0, %s119
      %s120 = sphi 0, %s117
      %s121 = sphi 0, %s120
      %s137 = sphi 0, %s121
    $region4: #{gridnet_block_forward_pallas.9} parent=1 // loop_header_branch
      %16 = sbr.rel (%p14) target = $region8
    $region5: #{gridnet_block_forward_pallas.9} parent=1 // loop_body
      %s18 = ssub.s32 %s13, 1
      %s19 = ssub.s32 %s13, 2
      %s20 = sadd.s32 %s13, 1
      %s21 = ssub.s32 %s13, %s20
      %p22 = scmp.eq.s32.totalorder %s21, 0
      %s24 = sadd.s32 %s23, 1
      %s25 = scalar_select %p22, %s23, %s24
      %p28 = pneg %p22
      %p29 = scmp.eq.s32.totalorder %s13, 1
      %p30 = por %p28, %p29
      %p31 = scmp.ne.s32.totalorder %s23, %s26
      %p32 = scmp.eq.s32.totalorder %s13, 0
      %p33 = por %p31, %p32
      %p34 = scmp.ne.s32.totalorder %s23, %s26
      %p35 = scmp.eq.s32.totalorder %s18, 1
      %p36 = por %p34, %p35
      %p37 = scmp.ne.s32.totalorder %s26, %s27
      %p38 = scmp.eq.s32.totalorder %s18, 0
      %p39 = por %p37, %p38
      %p40 = scmp.ne.s32.totalorder %s26, %s27
      %p41 = scmp.eq.s32.totalorder %s19, 1
      %p42 = por %p40, %p41
      %p44 = scmp.ne.s32.totalorder %s27, %s43
      %p45 = scmp.eq.s32.totalorder %s19, 0
      %p46 = por %p44, %p45
      %s47 = ssub.s32 %s13, %s20
      %p48 = scmp.eq.s32.totalorder %s47, 0
      %s50 = sadd.s32 %s49, 1
      %s51 = scalar_select %p48, %s49, %s50
      %p54 = pneg %p48
      %p55 = scmp.eq.s32.totalorder %s13, 1
      %p56 = por %p54, %p55
      %p57 = scmp.ne.s32.totalorder %s49, %s52
      %p58 = scmp.eq.s32.totalorder %s13, 0
      %p59 = por %p57, %p58
      %p60 = scmp.ne.s32.totalorder %s49, %s52
      %p61 = scmp.eq.s32.totalorder %s18, 1
      %p62 = por %p60, %p61
      %p63 = scmp.ne.s32.totalorder %s52, %s53
      %p64 = scmp.eq.s32.totalorder %s18, 0
      %p65 = por %p63, %p64
      %p66 = scmp.ne.s32.totalorder %s52, %s53
      %p67 = scmp.eq.s32.totalorder %s19, 1
      %p68 = por %p66, %p67
      %p70 = scmp.ne.s32.totalorder %s53, %s69
      %p71 = scmp.eq.s32.totalorder %s19, 0
      %p72 = por %p70, %p71
      %s74 = sadd.s32 %s73, 1
      %p77 = scmp.eq.s32.totalorder %s13, 1
      %p78 = scmp.ne.s32.totalorder %s73, %s75
      %p79 = scmp.eq.s32.totalorder %s13, 0
      %p80 = por %p78, %p79
      %p81 = scmp.ne.s32.totalorder %s73, %s75
      %p82 = scmp.eq.s32.totalorder %s18, 1
      %p83 = por %p81, %p82
      %p84 = scmp.ne.s32.totalorder %s75, %s76
      %p85 = scmp.eq.s32.totalorder %s18, 0
      %p86 = por %p84, %p85
      %p87 = scmp.ne.s32.totalorder %s75, %s76
      %p88 = scmp.eq.s32.totalorder %s19, 1
      %p89 = por %p87, %p88
      %p91 = scmp.ne.s32.totalorder %s76, %s90
      %p92 = scmp.eq.s32.totalorder %s19, 0
      %p93 = por %p91, %p92
      %s95 = sadd.s32 %s94, 1
      %p98 = scmp.eq.s32.totalorder %s13, 1
      %p99 = scmp.ne.s32.totalorder %s94, %s96
      %p100 = scmp.eq.s32.totalorder %s13, 0
      %p101 = por %p99, %p100
      %p102 = scmp.ne.s32.totalorder %s94, %s96
      %p103 = scmp.eq.s32.totalorder %s18, 1
      %p104 = por %p102, %p103
      %p105 = scmp.ne.s32.totalorder %s96, %s97
      %p106 = scmp.eq.s32.totalorder %s18, 0
      %p107 = por %p105, %p106
      %p108 = scmp.ne.s32.totalorder %s96, %s97
      %p109 = scmp.eq.s32.totalorder %s19, 1
      %p110 = por %p108, %p109
      %p112 = scmp.ne.s32.totalorder %s97, %s111
      %p113 = scmp.eq.s32.totalorder %s19, 0
      %p114 = por %p112, %p113
      %s115 = ssub.s32 %s13, %s20
      %p116 = scmp.eq.s32.totalorder %s115, 0
      %s118 = sadd.s32 %s117, 1
      %s119 = scalar_select %p116, %s117, %s118
      %p122 = pneg %p116
      %p123 = scmp.eq.s32.totalorder %s13, 1
      %p124 = por %p122, %p123
      %p125 = scmp.ne.s32.totalorder %s117, %s120
      %p126 = scmp.eq.s32.totalorder %s13, 0
      %p127 = por %p125, %p126
      %p128 = scmp.ne.s32.totalorder %s117, %s120
      %p129 = scmp.eq.s32.totalorder %s18, 1
      %p130 = por %p128, %p129
      %p131 = scmp.ne.s32.totalorder %s120, %s121
      %p132 = scmp.eq.s32.totalorder %s18, 0
      %p133 = por %p131, %p132
      %p134 = scmp.ne.s32.totalorder %s120, %s121
      %p135 = scmp.eq.s32.totalorder %s19, 1
      %p136 = por %p134, %p135
      %p138 = scmp.ne.s32.totalorder %s121, %s137
      %p139 = scmp.eq.s32.totalorder %s19, 0
      %p140 = por %p138, %p139
      %p141 = scmp.le.s32.totalorder 1, %s13
      %p142 = scmp.lt.s32.totalorder %s13, 3
      %p143 = pnand %p141, %p142
      %p144 = pneg %p143
      // Predicated region
      $region9: #{gridnet_block_forward_pallas.9} parent=5 // pred_check
        _
      $region10: #{gridnet_block_forward_pallas.9} parent=5 // pred_check_branch
        %146 = sbr.rel (%p143) target = $region12
      $region11: #{gridnet_block_forward_pallas.9} parent=5 // pred_region
        %s147 = ssub.s32 %s13, 1
        // Predicated region
        $region13: #{gridnet_block_forward_pallas.9} parent=11 // pred_check
          %p148 = pneg %p86
        $region14: #{gridnet_block_forward_pallas.9} parent=11 // pred_check_branch
          %150 = sbr.rel (%p148) target = $region16
        $region15: #{gridnet_block_forward_pallas.9} parent=11 // pred_region
          _
        $region16: #{gridnet_block_forward_pallas.9} parent=11 // pred_fallthru
          _
        // Predicated region
        $region17: #{gridnet_block_forward_pallas.9} parent=11 // pred_check
          %p151 = pneg %p107
        $region18: #{gridnet_block_forward_pallas.9} parent=11 // pred_check_branch
          %153 = sbr.rel (%p151) target = $region20
        $region19: #{gridnet_block_forward_pallas.9} parent=11 // pred_region
          _
        $region20: #{gridnet_block_forward_pallas.9} parent=11 // pred_fallthru
          _
      $region12: #{gridnet_block_forward_pallas.9} parent=5 // pred_fallthru
        _
      %p154 = scmp.lt.s32.totalorder %s13, 2
      // Predicated region
      $region21: #{gridnet_block_forward_pallas.9} parent=5 // pred_check
        %p155 = pneg %p154
      $region22: #{gridnet_block_forward_pallas.9} parent=5 // pred_check_branch
        %157 = sbr.rel (%p155) target = $region24
      $region23: #{gridnet_block_forward_pallas.9} parent=5 // pred_region
        // Predicated region
        $region25: #{gridnet_block_forward_pallas.9} parent=23 // pred_check
          %p158 = pneg %p33
        $region26: #{gridnet_block_forward_pallas.9} parent=23 // pred_check_branch
          %160 = sbr.rel (%p158) target = $region28
        $region27: #{gridnet_block_forward_pallas.9} parent=23 // pred_region
          %s161 = sand.u32 %s23, 1
          %s162 = sand.u32 %s23, 1
          %s163 = smul.addr %s162, 128
          %s164 = scalar_lea.vmem [#allocation2], %s163
          %s165 = smul.addr %s13, 2
          %s166 = smul.addr %s165, 8
          %s167 = scalar_lea.vmem %s0, %s166
          // Predicated region
          $region29: #{gridnet_block_forward_pallas.9} parent=27 // pred_check
            _
          $region30: #{gridnet_block_forward_pallas.9} parent=27 // pred_check_branch
            %169 = sbr.rel (0) target = $region32
          $region31: #{gridnet_block_forward_pallas.9} parent=27 // pred_region
            // Predicated region
            $region33: #{gridnet_block_forward_pallas.9} parent=31 // pred_check
              _
            $region34: #{gridnet_block_forward_pallas.9} parent=31 // pred_check_branch
              %171 = sbr.rel (0) target = $region36
            $region35: #{gridnet_block_forward_pallas.9} parent=31 // pred_region
              // Predicated region
              $region48: #{gridnet_block_forward_pallas.9} parent=35 // pred_check
                _
              $region49: #{gridnet_block_forward_pallas.9} parent=35 // pred_check_branch
                %217 = sbr.rel (0) target = $region51
              $region50: #{gridnet_block_forward_pallas.9} parent=35 // pred_region
                loop: start=0, step=1, limit=1
                $region52: #{gridnet_block_forward_pallas.9} parent=50 // loop_pre_header
                  _
                $region53: #{gridnet_block_forward_pallas.9} parent=50 // loop_header
                  %s219 = sphi 0, %s223
                  %p220 = scmp.ge.s32.totalorder %s219, 1
                  %s224 = sphi %s167, %s167
                  %s225 = sphi %s164, %s164
                $region54: #{gridnet_block_forward_pallas.9} parent=50 // loop_header_branch
                  %222 = sbr.rel (%p220) target = $region58
                $region55: #{gridnet_block_forward_pallas.9} parent=50 // loop_body
                  %v226 = vld [vmem:[%s224] sm:$0xff]
                  %227 = vst [vmem:[%s225] sm:$0xff] %v226
                  %v228 = vld [vmem:[%s224 + $0x8] sm:$0xff]
                  %229 = vst [vmem:[%s225 + $0x8] sm:$0xff] %v228
                  %v230 = vld [vmem:[%s224 + $0x20] sm:$0xff]
                  %231 = vst [vmem:[%s225 + $0x10] sm:$0xff] %v230
                  %v232 = vld [vmem:[%s224 + $0x28] sm:$0xff]
                  %233 = vst [vmem:[%s225 + $0x18] sm:$0xff] %v232
                  %v234 = vld [vmem:[%s224 + $0x40] sm:$0xff]
                  %235 = vst [vmem:[%s225 + $0x20] sm:$0xff] %v234
                  %v236 = vld [vmem:[%s224 + $0x48] sm:$0xff]
                  %237 = vst [vmem:[%s225 + $0x28] sm:$0xff] %v236
                  %v238 = vld [vmem:[%s224 + $0x60] sm:$0xff]
                  %239 = vst [vmem:[%s225 + $0x30] sm:$0xff] %v238
                  %v240 = vld [vmem:[%s224 + $0x68] sm:$0xff]
                  %241 = vst [vmem:[%s225 + $0x38] sm:$0xff] %v240
                  %v242 = vld [vmem:[%s224 + $0x80] sm:$0xff]
                  %243 = vst [vmem:[%s225 + $0x40] sm:$0xff] %v242
                  %v244 = vld [vmem:[%s224 + $0x88] sm:$0xff]
                  %245 = vst [vmem:[%s225 + $0x48] sm:$0xff] %v244
                  %v246 = vld [vmem:[%s224 + $0xa0] sm:$0xff]
                  %247 = vst [vmem:[%s225 + $0x50] sm:$0xff] %v246
                  %v248 = vld [vmem:[%s224 + $0xa8] sm:$0xff]
                  %249 = vst [vmem:[%s225 + $0x58] sm:$0xff] %v248
                  %v250 = vld [vmem:[%s224 + $0xc0] sm:$0xff]
                  %251 = vst [vmem:[%s225 + $0x60] sm:$0xff] %v250
                  %v252 = vld [vmem:[%s224 + $0xc8] sm:$0xff]
                  %253 = vst [vmem:[%s225 + $0x68] sm:$0xff] %v252
                  %v254 = vld [vmem:[%s224 + $0xe0] sm:$0xff]
                  %255 = vst [vmem:[%s225 + $0x70] sm:$0xff] %v254
                  %v256 = vld [vmem:[%s224 + $0xe8] sm:$0xff]
                  %257 = vst [vmem:[%s225 + $0x78] sm:$0xff] %v256
                $region56: #{gridnet_block_forward_pallas.9} parent=50 // loop_footer
                  %s223 = sadd.s32 1, %s219
                $region57: #{gridnet_block_forward_pallas.9} parent=50 // loop_footer_branch
                  %218 = sbr.rel target = $region53
                $region58: #{gridnet_block_forward_pallas.9} parent=50 // loop_exit
                  _
              $region51: #{gridnet_block_forward_pallas.9} parent=35 // pred_fallthru
                _
              // Predicated region
              $region59: #{gridnet_block_forward_pallas.9} parent=35 // pred_check
                _
              $region60: #{gridnet_block_forward_pallas.9} parent=35 // pred_check_branch
                %259 = sbr.rel target = $region62
              $region61: #{gridnet_block_forward_pallas.9} parent=35 // pred_region
                _
              $region62: #{gridnet_block_forward_pallas.9} parent=35 // pred_fallthru
                _
            $region36: #{gridnet_block_forward_pallas.9} parent=31 // pred_fallthru
              _
            // Predicated region
            $region37: #{gridnet_block_forward_pallas.9} parent=31 // pred_check
              _
            $region38: #{gridnet_block_forward_pallas.9} parent=31 // pred_check_branch
              %173 = sbr.rel target = $region40
            $region39: #{gridnet_block_forward_pallas.9} parent=31 // pred_region
              %s175 = ssub.s32 256, 1
              loop: start=0, step=1, limit=1
              $region41: #{gridnet_block_forward_pallas.9} parent=39 // loop_pre_header
                _
              $region42: #{gridnet_block_forward_pallas.9} parent=39 // loop_header
                %s177 = sphi 0, %s181
                %p178 = scmp.ge.s32.totalorder %s177, 1
                %s182 = sphi %s167, %s167
                %s183 = sphi %s164, %s164
              $region43: #{gridnet_block_forward_pallas.9} parent=39 // loop_header_branch
                %180 = sbr.rel (%p178) target = $region47
              $region44: #{gridnet_block_forward_pallas.9} parent=39 // loop_body
                %v184 = vld [vmem:[%s182] sm:%s175]
                %185 = vst [vmem:[%s183] sm:%s175] %v184
                %v186 = vld [vmem:[%s182 + $0x8] sm:%s175]
                %187 = vst [vmem:[%s183 + $0x8] sm:%s175] %v186
                %v188 = vld [vmem:[%s182 + $0x20] sm:%s175]
                %189 = vst [vmem:[%s183 + $0x10] sm:%s175] %v188
                %v190 = vld [vmem:[%s182 + $0x28] sm:%s175]
                %191 = vst [vmem:[%s183 + $0x18] sm:%s175] %v190
                %v192 = vld [vmem:[%s182 + $0x40] sm:%s175]
                %193 = vst [vmem:[%s183 + $0x20] sm:%s175] %v192
                %v194 = vld [vmem:[%s182 + $0x48] sm:%s175]
                %195 = vst [vmem:[%s183 + $0x28] sm:%s175] %v194
                %v196 = vld [vmem:[%s182 + $0x60] sm:%s175]
                %197 = vst [vmem:[%s183 + $0x30] sm:%s175] %v196
                %v198 = vld [vmem:[%s182 + $0x68] sm:%s175]
                %199 = vst [vmem:[%s183 + $0x38] sm:%s175] %v198
                %v200 = vld [vmem:[%s182 + $0x80] sm:%s175]
                %201 = vst [vmem:[%s183 + $0x40] sm:%s175] %v200
                %v202 = vld [vmem:[%s182 + $0x88] sm:%s175]
                %203 = vst [vmem:[%s183 + $0x48] sm:%s175] %v202
                %v204 = vld [vmem:[%s182 + $0xa0] sm:%s175]
                %205 = vst [vmem:[%s183 + $0x50] sm:%s175] %v204
                %v206 = vld [vmem:[%s182 + $0xa8] sm:%s175]
                %207 = vst [vmem:[%s183 + $0x58] sm:%s175] %v206
                %v208 = vld [vmem:[%s182 + $0xc0] sm:%s175]
                %209 = vst [vmem:[%s183 + $0x60] sm:%s175] %v208
                %v210 = vld [vmem:[%s182 + $0xc8] sm:%s175]
                %211 = vst [vmem:[%s183 + $0x68] sm:%s175] %v210
                %v212 = vld [vmem:[%s182 + $0xe0] sm:%s175]
                %213 = vst [vmem:[%s183 + $0x70] sm:%s175] %v212
                %v214 = vld [vmem:[%s182 + $0xe8] sm:%s175]
                %215 = vst [vmem:[%s183 + $0x78] sm:%s175] %v214
              $region45: #{gridnet_block_forward_pallas.9} parent=39 // loop_footer
                %s181 = sadd.s32 1, %s177
              $region46: #{gridnet_block_forward_pallas.9} parent=39 // loop_footer_branch
                %176 = sbr.rel target = $region42
              $region47: #{gridnet_block_forward_pallas.9} parent=39 // loop_exit
                _
            $region40: #{gridnet_block_forward_pallas.9} parent=31 // pred_fallthru
              _
          $region32: #{gridnet_block_forward_pallas.9} parent=27 // pred_fallthru
            _
          %260 = vnop
        $region28: #{gridnet_block_forward_pallas.9} parent=23 // pred_fallthru
          _
        // Predicated region
        $region63: #{gridnet_block_forward_pallas.9} parent=23 // pred_check
          %p261 = pneg %p59
        $region64: #{gridnet_block_forward_pallas.9} parent=23 // pred_check_branch
          %263 = sbr.rel (%p261) target = $region66
        $region65: #{gridnet_block_forward_pallas.9} parent=23 // pred_region
          %p264 = scmp.lt.s32.totalorder %s13, 1
          %s265 = scalar_select %p264, %s13, 1
          %s266 = smul.addr %s265, 16
          %s267 = smul.addr %s266, 8
          %s268 = scalar_lea.vmem %s1, %s267
        $region66: #{gridnet_block_forward_pallas.9} parent=23 // pred_fallthru
          _
      $region24: #{gridnet_block_forward_pallas.9} parent=5 // pred_fallthru
        _
      %p269 = scmp.le.s32.totalorder 1, %s13
      %p270 = scmp.lt.s32.totalorder %s13, 3
      %p271 = pnand %p269, %p270
      %p272 = pneg %p271
      // Predicated region
      $region67: #{gridnet_block_forward_pallas.9} parent=5 // pred_check
        _
      $region68: #{gridnet_block_forward_pallas.9} parent=5 // pred_check_branch
        %274 = sbr.rel (%p271) target = $region70
      $region69: #{gridnet_block_forward_pallas.9} parent=5 // pred_region
        %s275 = ssub.s32 %s13, 1
        %s276 = sand.u32 %s26, 1
        %s277 = sand.u32 %s26, 1
        %s278 = smul.addr %s277, 128
        %s279 = scalar_lea.vmem [#allocation2], %s278
        // Predicated region
        $region71: #{gridnet_block_forward_pallas.9} parent=69 // pred_check
          %p280 = pneg %p39
        $region72: #{gridnet_block_forward_pallas.9} parent=69 // pred_check_branch
          %282 = sbr.rel (%p280) target = $region74
        $region73: #{gridnet_block_forward_pallas.9} parent=69 // pred_region
          _
        $region74: #{gridnet_block_forward_pallas.9} parent=69 // pred_fallthru
          _
        %s283 = sand.u32 %s26, 1
        %s284 = sand.u32 %s26, 1
        %s285 = smul.addr %s284, 128
        %s286 = scalar_lea.vmem [#allocation2], %s285
        %p287 = pneg %p39
        %p288 = pneg %p36
        %p289 = scmp.lt.s32.totalorder %s18, 1
        %s290 = scalar_select %p289, %s18, 1
        %s291 = smul.addr %s290, 16
        %s292 = smul.addr %s291, 8
        %s293 = scalar_lea.vmem %s1, %s292
        %p294 = pneg %p65
        %p295 = pneg %p62
        %p296 = pneg %p86
        %p297 = pneg %p83
        %p298 = pneg %p107
        %p299 = pneg %p104
        %p300 = pneg %p133
        %p301 = pneg %p130
        %s302 = sand.u32 %s120, 1
        %s303 = scalar_lea.sflag [#allocation4], %s302
        %s304 = sand.u32 %s120, 1
        %s305 = smul.addr %s304, 128
        %s306 = scalar_lea.vmem [#allocation3], %s305
        %p307 = scmp.lt.s32.totalorder %s18, 1
        %s308 = scalar_select %p307, %s18, 1
        %s309 = smul.addr %s308, 16
        %s310 = smul.addr %s309, 8
        %s311 = scalar_lea.vmem %s1, %s310
        %v312 = vld [vmem:[%s2] sm:$0xff]
        %v313 = vld [vmem:[%s2 + $0x8] sm:$0xff]
        %v314 = vld [vmem:[%s2 + $0x10] sm:$0xff]
        %v315 = vld [vmem:[%s2 + $0x18] sm:$0xff]
        %v316 = vld [vmem:[%s3] sm:$0x1]
        %v317 = vld [vmem:[%s279] sm:$0xff]
        %v318 = vld [vmem:[%s279 + $0x8] sm:$0xff]
        %v320 = vlaneseq
        %v321 = vshrl.u32 %v320, 7
        %v322 = vsub.s32 0, %v321
        %v323 = vrot.slane %v316, %v322
        %vm325 = vcmask 261120
        %v327 = vsel %vm325, %v317, 0
        %v330 = vsel %vm325, %v318, 0
        %332 = vmatprep.subr.mxu0 0.0
        %333 = vmatpush1.msra.mxu0 0.0
        %334 = vmatprep.subr.mxu0 0.0
        %335 = vmatpush1.msra.mxu0 0.0
        %336 = vmatprep.subr.mxu0 0.0
        %337 = vmatpush1.msra.mxu0 0.0
        %338 = vmatprep.subr.mxu0 0.0
        %339 = vmatpush1.msra.mxu0 0.0
        %340 = vmatprep.subr.mxu0 0.0
        %341 = vmatpush1.msra.mxu0 0.0
        %342 = vmatprep.subr.mxu0 0.0
        %343 = vmatpush1.msra.mxu0 0.0
        %344 = vmatprep.subr.mxu0 0.0
        %345 = vmatpush1.msra.mxu0 0.0
        %346 = vmatprep.subr.mxu0 0.0
        %347 = vmatpush1.msra.mxu0 0.0
        %348 = vmatprep.subr.mxu0 0.0
        %349 = vmatpush1.msra.mxu0 0.0
        %350 = vmatprep.subr.mxu0 0.0
        %351 = vmatpush1.msra.mxu0 0.0
        %352 = vmatprep.subr.mxu0 0.0
        %353 = vmatpush1.msra.mxu0 0.0
        %354 = vmatprep.subr.mxu0 0.0
        %355 = vmatpush1.msra.mxu0 0.0
        %356 = vmatprep.subr.mxu0 0.0
        %357 = vmatpush1.msra.mxu0 %v315
        %358 = vmatprep.subr.mxu0 0.0
        %359 = vmatpush1.msra.mxu0 %v314
        %360 = vmatprep.subr.mxu0 0.0
        %361 = vmatpush1.msra.mxu0 %v313
        %362 = vmatprep.subr.mxu0 0.0
        %363 = vmatpush1.msra.mxu0 %v312
        %364 = vmatprep.subr.mxu0 0.0
        %365 = vmatpush2.msra.mxu0 0.0
        %366 = vmatprep.subr.mxu0 0.0
        %367 = vmatpush2.msra.mxu0 0.0
        %368 = vmatprep.subr.mxu0 0.0
        %369 = vmatpush2.msra.mxu0 0.0
        %370 = vmatprep.subr.mxu0 0.0
        %371 = vmatpush2.msra.mxu0 0.0
        %372 = vmatprep.subr.mxu0 0.0
        %373 = vmatpush2.msra.mxu0 0.0
        %374 = vmatprep.subr.mxu0 0.0
        %375 = vmatpush2.msra.mxu0 0.0
        %376 = vmatprep.subr.mxu0 0.0
        %377 = vmatpush2.msra.mxu0 0.0
        %378 = vmatprep.subr.mxu0 0.0
        %379 = vmatpush2.msra.mxu0 0.0
        %380 = vmatprep.subr.mxu0 0.0
        %381 = vmatpush2.msra.mxu0 0.0
        %382 = vmatprep.subr.mxu0 0.0
        %383 = vmatpush2.msra.mxu0 0.0
        %384 = vmatprep.subr.mxu0 0.0
        %385 = vmatpush2.msra.mxu0 0.0
        %386 = vmatprep.subr.mxu0 0.0
        %387 = vmatpush2.msra.mxu0 0.0
        %388 = vmatprep.subr.mxu0 0.0
        %389 = vmatpush2.msra.mxu0 0.0
        %390 = vmatprep.subr.mxu0 0.0
        %391 = vmatpush2.msra.mxu0 0.0
        %392 = vmatprep.subr.mxu0 0.0
        %393 = vmatpush2.msra.mxu0 0.0
        %394 = vmatprep.subr.mxu0 0.0
        %395 = vmatpush2.msra.mxu0 0.0
        %396 = vmatprep.mubr.f32.mxu0 0.0
        %397 = vmatmul.mubr.f32.gmra.mxu0 %v327
        %v398 = vpop.f32.mrf.mxu0
        %v399 = vadd.f32 %v323, %v398
        %v400 = vpop.f32.mrf.mxu0
        %401 = vmatprep.mubr.f32.mxu0 0.0
        %402 = vmatmul.mubr.f32.gmra.mxu0 %v330
        %v403 = vpop.f32.mrf.mxu0
        %v404 = vadd.f32 %v323, %v403
        %v405 = vpop.f32.mrf.mxu0
        %406 = vdwg.mxu0
        %v407 = vld [vmem:[%s311] sm:$0xff]
        %v408 = vld [vmem:[%s311 + $0x8] sm:$0xff]
        %v409 = vadd.f32 %v399, %v407
        %v410 = vadd.f32 %v404, %v408
        %vm411 = vcmask 130048
        %412 = vst.msk [vmem:[%s306] sm:$0xff] %vm411, %v409
        %413 = vst.msk [vmem:[%s306 + $0x8] sm:$0xff] %vm411, %v410
        %s414 = scalar_lea.vmem %s279, 16 [#allocation2]
        %v415 = vld [vmem:[%s414] sm:$0xff]
        %v416 = vld [vmem:[%s414 + $0x8] sm:$0xff]
        %v418 = vsel %vm325, %v415, 0
        %v421 = vsel %vm325, %v416, 0
        %423 = vmatprep.subr.mxu0 0.0
        %424 = vmatpush1.msra.mxu0 0.0
        %425 = vmatprep.subr.mxu0 0.0
        %426 = vmatpush1.msra.mxu0 0.0
        %427 = vmatprep.subr.mxu0 0.0
        %428 = vmatpush1.msra.mxu0 0.0
        %429 = vmatprep.subr.mxu0 0.0
        %430 = vmatpush1.msra.mxu0 0.0
        %431 = vmatprep.subr.mxu0 0.0
        %432 = vmatpush1.msra.mxu0 0.0
        %433 = vmatprep.subr.mxu0 0.0
        %434 = vmatpush1.msra.mxu0 0.0
        %435 = vmatprep.subr.mxu0 0.0
        %436 = vmatpush1.msra.mxu0 0.0
        %437 = vmatprep.subr.mxu0 0.0
        %438 = vmatpush1.msra.mxu0 0.0
        %439 = vmatprep.subr.mxu0 0.0
        %440 = vmatpush1.msra.mxu0 0.0
        %441 = vmatprep.subr.mxu0 0.0
        %442 = vmatpush1.msra.mxu0 0.0
        %443 = vmatprep.subr.mxu0 0.0
        %444 = vmatpush1.msra.mxu0 0.0
        %445 = vmatprep.subr.mxu0 0.0
        %446 = vmatpush1.msra.mxu0 0.0
        %447 = vmatprep.subr.mxu0 0.0
        %448 = vmatpush1.msra.mxu0 %v315
        %449 = vmatprep.subr.mxu0 0.0
        %450 = vmatpush1.msra.mxu0 %v314
        %451 = vmatprep.subr.mxu0 0.0
        %452 = vmatpush1.msra.mxu0 %v313
        %453 = vmatprep.subr.mxu0 0.0
        %454 = vmatpush1.msra.mxu0 %v312
        %455 = vmatprep.subr.mxu0 0.0
        %456 = vmatpush2.msra.mxu0 0.0
        %457 = vmatprep.subr.mxu0 0.0
        %458 = vmatpush2.msra.mxu0 0.0
        %459 = vmatprep.subr.mxu0 0.0
        %460 = vmatpush2.msra.mxu0 0.0
        %461 = vmatprep.subr.mxu0 0.0
        %462 = vmatpush2.msra.mxu0 0.0
        %463 = vmatprep.subr.mxu0 0.0
        %464 = vmatpush2.msra.mxu0 0.0
        %465 = vmatprep.subr.mxu0 0.0
        %466 = vmatpush2.msra.mxu0 0.0
        %467 = vmatprep.subr.mxu0 0.0
        %468 = vmatpush2.msra.mxu0 0.0
        %469 = vmatprep.subr.mxu0 0.0
        %470 = vmatpush2.msra.mxu0 0.0
        %471 = vmatprep.subr.mxu0 0.0
        %472 = vmatpush2.msra.mxu0 0.0
        %473 = vmatprep.subr.mxu0 0.0
        %474 = vmatpush2.msra.mxu0 0.0
        %475 = vmatprep.subr.mxu0 0.0
        %476 = vmatpush2.msra.mxu0 0.0
        %477 = vmatprep.subr.mxu0 0.0
        %478 = vmatpush2.msra.mxu0 0.0
        %479 = vmatprep.subr.mxu0 0.0
        %480 = vmatpush2.msra.mxu0 0.0
        %481 = vmatprep.subr.mxu0 0.0
        %482 = vmatpush2.msra.mxu0 0.0
        %483 = vmatprep.subr.mxu0 0.0
        %484 = vmatpush2.msra.mxu0 0.0
        %485 = vmatprep.subr.mxu0 0.0
        %486 = vmatpush2.msra.mxu0 0.0
        %487 = vmatprep.mubr.f32.mxu0 0.0
        %488 = vmatmul.mubr.f32.gmra.mxu0 %v418
        %v489 = vpop.f32.mrf.mxu0
        %v490 = vadd.f32 %v323, %v489
        %v491 = vpop.f32.mrf.mxu0
        %492 = vmatprep.mubr.f32.mxu0 0.0
        %493 = vmatmul.mubr.f32.gmra.mxu0 %v421
        %v494 = vpop.f32.mrf.mxu0
        %v495 = vadd.f32 %v323, %v494
        %v496 = vpop.f32.mrf.mxu0
        %497 = vdwg.mxu0
        %s498 = scalar_lea.vmem %s311, 16
        %v499 = vld [vmem:[%s498] sm:$0xff]
        %v500 = vld [vmem:[%s498 + $0x8] sm:$0xff]
        %v501 = vadd.f32 %v490, %v499
        %v502 = vadd.f32 %v495, %v500
        %s503 = scalar_lea.vmem %s306, 16 [#allocation3]
        %504 = vst.msk [vmem:[%s503] sm:$0xff] %vm411, %v501
        %505 = vst.msk [vmem:[%s503 + $0x8] sm:$0xff] %vm411, %v502
        %s506 = scalar_lea.vmem %s279, 32 [#allocation2]
        %v507 = vld [vmem:[%s506] sm:$0xff]
        %v508 = vld [vmem:[%s506 + $0x8] sm:$0xff]
        %v510 = vsel %vm325, %v507, 0
        %v513 = vsel %vm325, %v508, 0
        %515 = vmatprep.subr.mxu0 0.0
        %516 = vmatpush1.msra.mxu0 0.0
        %517 = vmatprep.subr.mxu0 0.0
        %518 = vmatpush1.msra.mxu0 0.0
        %519 = vmatprep.subr.mxu0 0.0
        %520 = vmatpush1.msra.mxu0 0.0
        %521 = vmatprep.subr.mxu0 0.0
        %522 = vmatpush1.msra.mxu0 0.0
        %523 = vmatprep.subr.mxu0 0.0
        %524 = vmatpush1.msra.mxu0 0.0
        %525 = vmatprep.subr.mxu0 0.0
        %526 = vmatpush1.msra.mxu0 0.0
        %527 = vmatprep.subr.mxu0 0.0
        %528 = vmatpush1.msra.mxu0 0.0
        %529 = vmatprep.subr.mxu0 0.0
        %530 = vmatpush1.msra.mxu0 0.0
        %531 = vmatprep.subr.mxu0 0.0
        %532 = vmatpush1.msra.mxu0 0.0
        %533 = vmatprep.subr.mxu0 0.0
        %534 = vmatpush1.msra.mxu0 0.0
        %535 = vmatprep.subr.mxu0 0.0
        %536 = vmatpush1.msra.mxu0 0.0
        %537 = vmatprep.subr.mxu0 0.0
        %538 = vmatpush1.msra.mxu0 0.0
        %539 = vmatprep.subr.mxu0 0.0
        %540 = vmatpush1.msra.mxu0 %v315
        %541 = vmatprep.subr.mxu0 0.0
        %542 = vmatpush1.msra.mxu0 %v314
        %543 = vmatprep.subr.mxu0 0.0
        %544 = vmatpush1.msra.mxu0 %v313
        %545 = vmatprep.subr.mxu0 0.0
        %546 = vmatpush1.msra.mxu0 %v312
        %547 = vmatprep.subr.mxu0 0.0
        %548 = vmatpush2.msra.mxu0 0.0
        %549 = vmatprep.subr.mxu0 0.0
        %550 = vmatpush2.msra.mxu0 0.0
        %551 = vmatprep.subr.mxu0 0.0
        %552 = vmatpush2.msra.mxu0 0.0
        %553 = vmatprep.subr.mxu0 0.0
        %554 = vmatpush2.msra.mxu0 0.0
        %555 = vmatprep.subr.mxu0 0.0
        %556 = vmatpush2.msra.mxu0 0.0
        %557 = vmatprep.subr.mxu0 0.0
        %558 = vmatpush2.msra.mxu0 0.0
        %559 = vmatprep.subr.mxu0 0.0
        %560 = vmatpush2.msra.mxu0 0.0
        %561 = vmatprep.subr.mxu0 0.0
        %562 = vmatpush2.msra.mxu0 0.0
        %563 = vmatprep.subr.mxu0 0.0
        %564 = vmatpush2.msra.mxu0 0.0
        %565 = vmatprep.subr.mxu0 0.0
        %566 = vmatpush2.msra.mxu0 0.0
        %567 = vmatprep.subr.mxu0 0.0
        %568 = vmatpush2.msra.mxu0 0.0
        %569 = vmatprep.subr.mxu0 0.0
        %570 = vmatpush2.msra.mxu0 0.0
        %571 = vmatprep.subr.mxu0 0.0
        %572 = vmatpush2.msra.mxu0 0.0
        %573 = vmatprep.subr.mxu0 0.0
        %574 = vmatpush2.msra.mxu0 0.0
        %575 = vmatprep.subr.mxu0 0.0
        %576 = vmatpush2.msra.mxu0 0.0
        %577 = vmatprep.subr.mxu0 0.0
        %578 = vmatpush2.msra.mxu0 0.0
        %579 = vmatprep.mubr.f32.mxu0 0.0
        %580 = vmatmul.mubr.f32.gmra.mxu0 %v510
        %v581 = vpop.f32.mrf.mxu0
        %v582 = vadd.f32 %v323, %v581
        %v583 = vpop.f32.mrf.mxu0
        %584 = vmatprep.mubr.f32.mxu0 0.0
        %585 = vmatmul.mubr.f32.gmra.mxu0 %v513
        %v586 = vpop.f32.mrf.mxu0
        %v587 = vadd.f32 %v323, %v586
        %v588 = vpop.f32.mrf.mxu0
        %589 = vdwg.mxu0
        %s590 = scalar_lea.vmem %s311, 32
        %v591 = vld [vmem:[%s590] sm:$0xff]
        %v592 = vld [vmem:[%s590 + $0x8] sm:$0xff]
        %v593 = vadd.f32 %v582, %v591
        %v594 = vadd.f32 %v587, %v592
        %s595 = scalar_lea.vmem %s306, 32 [#allocation3]
        %596 = vst.msk [vmem:[%s595] sm:$0xff] %vm411, %v593
        %597 = vst.msk [vmem:[%s595 + $0x8] sm:$0xff] %vm411, %v594
        %s598 = scalar_lea.vmem %s279, 48 [#allocation2]
        %v599 = vld [vmem:[%s598] sm:$0xff]
        %v600 = vld [vmem:[%s598 + $0x8] sm:$0xff]
        %v602 = vsel %vm325, %v599, 0
        %v605 = vsel %vm325, %v600, 0
        %607 = vmatprep.subr.mxu0 0.0
        %608 = vmatpush1.msra.mxu0 0.0
        %609 = vmatprep.subr.mxu0 0.0
        %610 = vmatpush1.msra.mxu0 0.0
        %611 = vmatprep.subr.mxu0 0.0
        %612 = vmatpush1.msra.mxu0 0.0
        %613 = vmatprep.subr.mxu0 0.0
        %614 = vmatpush1.msra.mxu0 0.0
        %615 = vmatprep.subr.mxu0 0.0
        %616 = vmatpush1.msra.mxu0 0.0
        %617 = vmatprep.subr.mxu0 0.0
        %618 = vmatpush1.msra.mxu0 0.0
        %619 = vmatprep.subr.mxu0 0.0
        %620 = vmatpush1.msra.mxu0 0.0
        %621 = vmatprep.subr.mxu0 0.0
        %622 = vmatpush1.msra.mxu0 0.0
        %623 = vmatprep.subr.mxu0 0.0
        %624 = vmatpush1.msra.mxu0 0.0
        %625 = vmatprep.subr.mxu0 0.0
        %626 = vmatpush1.msra.mxu0 0.0
        %627 = vmatprep.subr.mxu0 0.0
        %628 = vmatpush1.msra.mxu0 0.0
        %629 = vmatprep.subr.mxu0 0.0
        %630 = vmatpush1.msra.mxu0 0.0
        %631 = vmatprep.subr.mxu0 0.0
        %632 = vmatpush1.msra.mxu0 %v315
        %633 = vmatprep.subr.mxu0 0.0
        %634 = vmatpush1.msra.mxu0 %v314
        %635 = vmatprep.subr.mxu0 0.0
        %636 = vmatpush1.msra.mxu0 %v313
        %637 = vmatprep.subr.mxu0 0.0
        %638 = vmatpush1.msra.mxu0 %v312
        %639 = vmatprep.subr.mxu0 0.0
        %640 = vmatpush2.msra.mxu0 0.0
        %641 = vmatprep.subr.mxu0 0.0
        %642 = vmatpush2.msra.mxu0 0.0
        %643 = vmatprep.subr.mxu0 0.0
        %644 = vmatpush2.msra.mxu0 0.0
        %645 = vmatprep.subr.mxu0 0.0
        %646 = vmatpush2.msra.mxu0 0.0
        %647 = vmatprep.subr.mxu0 0.0
        %648 = vmatpush2.msra.mxu0 0.0
        %649 = vmatprep.subr.mxu0 0.0
        %650 = vmatpush2.msra.mxu0 0.0
        %651 = vmatprep.subr.mxu0 0.0
        %652 = vmatpush2.msra.mxu0 0.0
        %653 = vmatprep.subr.mxu0 0.0
        %654 = vmatpush2.msra.mxu0 0.0
        %655 = vmatprep.subr.mxu0 0.0
        %656 = vmatpush2.msra.mxu0 0.0
        %657 = vmatprep.subr.mxu0 0.0
        %658 = vmatpush2.msra.mxu0 0.0
        %659 = vmatprep.subr.mxu0 0.0
        %660 = vmatpush2.msra.mxu0 0.0
        %661 = vmatprep.subr.mxu0 0.0
        %662 = vmatpush2.msra.mxu0 0.0
        %663 = vmatprep.subr.mxu0 0.0
        %664 = vmatpush2.msra.mxu0 0.0
        %665 = vmatprep.subr.mxu0 0.0
        %666 = vmatpush2.msra.mxu0 0.0
        %667 = vmatprep.subr.mxu0 0.0
        %668 = vmatpush2.msra.mxu0 0.0
        %669 = vmatprep.subr.mxu0 0.0
        %670 = vmatpush2.msra.mxu0 0.0
        %671 = vmatprep.mubr.f32.mxu0 0.0
        %672 = vmatmul.mubr.f32.gmra.mxu0 %v602
        %v673 = vpop.f32.mrf.mxu0
        %v674 = vadd.f32 %v323, %v673
        %v675 = vpop.f32.mrf.mxu0
        %676 = vmatprep.mubr.f32.mxu0 0.0
        %677 = vmatmul.mubr.f32.gmra.mxu0 %v605
        %v678 = vpop.f32.mrf.mxu0
        %v679 = vadd.f32 %v323, %v678
        %v680 = vpop.f32.mrf.mxu0
        %681 = vdwg.mxu0
        %s682 = scalar_lea.vmem %s311, 48
        %v683 = vld [vmem:[%s682] sm:$0xff]
        %v684 = vld [vmem:[%s682 + $0x8] sm:$0xff]
        %v685 = vadd.f32 %v674, %v683
        %v686 = vadd.f32 %v679, %v684
        %s687 = scalar_lea.vmem %s306, 48 [#allocation3]
        %688 = vst.msk [vmem:[%s687] sm:$0xff] %vm411, %v685
        %689 = vst.msk [vmem:[%s687 + $0x8] sm:$0xff] %vm411, %v686
        %s690 = scalar_lea.vmem %s279, 64 [#allocation2]
        %v691 = vld [vmem:[%s690] sm:$0xff]
        %v692 = vld [vmem:[%s690 + $0x8] sm:$0xff]
        %v694 = vsel %vm325, %v691, 0
        %v697 = vsel %vm325, %v692, 0
        %699 = vmatprep.subr.mxu0 0.0
        %700 = vmatpush1.msra.mxu0 0.0
        %701 = vmatprep.subr.mxu0 0.0
        %702 = vmatpush1.msra.mxu0 0.0
        %703 = vmatprep.subr.mxu0 0.0
        %704 = vmatpush1.msra.mxu0 0.0
        %705 = vmatprep.subr.mxu0 0.0
        %706 = vmatpush1.msra.mxu0 0.0
        %707 = vmatprep.subr.mxu0 0.0
        %708 = vmatpush1.msra.mxu0 0.0
        %709 = vmatprep.subr.mxu0 0.0
        %710 = vmatpush1.msra.mxu0 0.0
        %711 = vmatprep.subr.mxu0 0.0
        %712 = vmatpush1.msra.mxu0 0.0
        %713 = vmatprep.subr.mxu0 0.0
        %714 = vmatpush1.msra.mxu0 0.0
        %715 = vmatprep.subr.mxu0 0.0
        %716 = vmatpush1.msra.mxu0 0.0
        %717 = vmatprep.subr.mxu0 0.0
        %718 = vmatpush1.msra.mxu0 0.0
        %719 = vmatprep.subr.mxu0 0.0
        %720 = vmatpush1.msra.mxu0 0.0
        %721 = vmatprep.subr.mxu0 0.0
        %722 = vmatpush1.msra.mxu0 0.0
        %723 = vmatprep.subr.mxu0 0.0
        %724 = vmatpush1.msra.mxu0 %v315
        %725 = vmatprep.subr.mxu0 0.0
        %726 = vmatpush1.msra.mxu0 %v314
        %727 = vmatprep.subr.mxu0 0.0
        %728 = vmatpush1.msra.mxu0 %v313
        %729 = vmatprep.subr.mxu0 0.0
        %730 = vmatpush1.msra.mxu0 %v312
        %731 = vmatprep.subr.mxu0 0.0
        %732 = vmatpush2.msra.mxu0 0.0
        %733 = vmatprep.subr.mxu0 0.0
        %734 = vmatpush2.msra.mxu0 0.0
        %735 = vmatprep.subr.mxu0 0.0
        %736 = vmatpush2.msra.mxu0 0.0
        %737 = vmatprep.subr.mxu0 0.0
        %738 = vmatpush2.msra.mxu0 0.0
        %739 = vmatprep.subr.mxu0 0.0
        %740 = vmatpush2.msra.mxu0 0.0
        %741 = vmatprep.subr.mxu0 0.0
        %742 = vmatpush2.msra.mxu0 0.0
        %743 = vmatprep.subr.mxu0 0.0
        %744 = vmatpush2.msra.mxu0 0.0
        %745 = vmatprep.subr.mxu0 0.0
        %746 = vmatpush2.msra.mxu0 0.0
        %747 = vmatprep.subr.mxu0 0.0
        %748 = vmatpush2.msra.mxu0 0.0
        %749 = vmatprep.subr.mxu0 0.0
        %750 = vmatpush2.msra.mxu0 0.0
        %751 = vmatprep.subr.mxu0 0.0
        %752 = vmatpush2.msra.mxu0 0.0
        %753 = vmatprep.subr.mxu0 0.0
        %754 = vmatpush2.msra.mxu0 0.0
        %755 = vmatprep.subr.mxu0 0.0
        %756 = vmatpush2.msra.mxu0 0.0
        %757 = vmatprep.subr.mxu0 0.0
        %758 = vmatpush2.msra.mxu0 0.0
        %759 = vmatprep.subr.mxu0 0.0
        %760 = vmatpush2.msra.mxu0 0.0
        %761 = vmatprep.subr.mxu0 0.0
        %762 = vmatpush2.msra.mxu0 0.0
        %763 = vmatprep.mubr.f32.mxu0 0.0
        %764 = vmatmul.mubr.f32.gmra.mxu0 %v694
        %v765 = vpop.f32.mrf.mxu0
        %v766 = vadd.f32 %v323, %v765
        %v767 = vpop.f32.mrf.mxu0
        %768 = vmatprep.mubr.f32.mxu0 0.0
        %769 = vmatmul.mubr.f32.gmra.mxu0 %v697
        %v770 = vpop.f32.mrf.mxu0
        %v771 = vadd.f32 %v323, %v770
        %v772 = vpop.f32.mrf.mxu0
        %773 = vdwg.mxu0
        %s774 = scalar_lea.vmem %s311, 64
        %v775 = vld [vmem:[%s774] sm:$0xff]
        %v776 = vld [vmem:[%s774 + $0x8] sm:$0xff]
        %v777 = vadd.f32 %v766, %v775
        %v778 = vadd.f32 %v771, %v776
        %s779 = scalar_lea.vmem %s306, 64 [#allocation3]
        %780 = vst.msk [vmem:[%s779] sm:$0xff] %vm411, %v777
        %781 = vst.msk [vmem:[%s779 + $0x8] sm:$0xff] %vm411, %v778
        %s782 = scalar_lea.vmem %s279, 80 [#allocation2]
        %v783 = vld [vmem:[%s782] sm:$0xff]
        %v784 = vld [vmem:[%s782 + $0x8] sm:$0xff]
        %v786 = vsel %vm325, %v783, 0
        %v789 = vsel %vm325, %v784, 0
        %791 = vmatprep.subr.mxu0 0.0
        %792 = vmatpush1.msra.mxu0 0.0
        %793 = vmatprep.subr.mxu0 0.0
        %794 = vmatpush1.msra.mxu0 0.0
        %795 = vmatprep.subr.mxu0 0.0
        %796 = vmatpush1.msra.mxu0 0.0
        %797 = vmatprep.subr.mxu0 0.0
        %798 = vmatpush1.msra.mxu0 0.0
        %799 = vmatprep.subr.mxu0 0.0
        %800 = vmatpush1.msra.mxu0 0.0
        %801 = vmatprep.subr.mxu0 0.0
        %802 = vmatpush1.msra.mxu0 0.0
        %803 = vmatprep.subr.mxu0 0.0
        %804 = vmatpush1.msra.mxu0 0.0
        %805 = vmatprep.subr.mxu0 0.0
        %806 = vmatpush1.msra.mxu0 0.0
        %807 = vmatprep.subr.mxu0 0.0
        %808 = vmatpush1.msra.mxu0 0.0
        %809 = vmatprep.subr.mxu0 0.0
        %810 = vmatpush1.msra.mxu0 0.0
        %811 = vmatprep.subr.mxu0 0.0
        %812 = vmatpush1.msra.mxu0 0.0
        %813 = vmatprep.subr.mxu0 0.0
        %814 = vmatpush1.msra.mxu0 0.0
        %815 = vmatprep.subr.mxu0 0.0
        %816 = vmatpush1.msra.mxu0 %v315
        %817 = vmatprep.subr.mxu0 0.0
        %818 = vmatpush1.msra.mxu0 %v314
        %819 = vmatprep.subr.mxu0 0.0
        %820 = vmatpush1.msra.mxu0 %v313
        %821 = vmatprep.subr.mxu0 0.0
        %822 = vmatpush1.msra.mxu0 %v312
        %823 = vmatprep.subr.mxu0 0.0
        %824 = vmatpush2.msra.mxu0 0.0
        %825 = vmatprep.subr.mxu0 0.0
        %826 = vmatpush2.msra.mxu0 0.0
        %827 = vmatprep.subr.mxu0 0.0
        %828 = vmatpush2.msra.mxu0 0.0
        %829 = vmatprep.subr.mxu0 0.0
        %830 = vmatpush2.msra.mxu0 0.0
        %831 = vmatprep.subr.mxu0 0.0
        %832 = vmatpush2.msra.mxu0 0.0
        %833 = vmatprep.subr.mxu0 0.0
        %834 = vmatpush2.msra.mxu0 0.0
        %835 = vmatprep.subr.mxu0 0.0
        %836 = vmatpush2.msra.mxu0 0.0
        %837 = vmatprep.subr.mxu0 0.0
        %838 = vmatpush2.msra.mxu0 0.0
        %839 = vmatprep.subr.mxu0 0.0
        %840 = vmatpush2.msra.mxu0 0.0
        %841 = vmatprep.subr.mxu0 0.0
        %842 = vmatpush2.msra.mxu0 0.0
        %843 = vmatprep.subr.mxu0 0.0
        %844 = vmatpush2.msra.mxu0 0.0
        %845 = vmatprep.subr.mxu0 0.0
        %846 = vmatpush2.msra.mxu0 0.0
        %847 = vmatprep.subr.mxu0 0.0
        %848 = vmatpush2.msra.mxu0 0.0
        %849 = vmatprep.subr.mxu0 0.0
        %850 = vmatpush2.msra.mxu0 0.0
        %851 = vmatprep.subr.mxu0 0.0
        %852 = vmatpush2.msra.mxu0 0.0
        %853 = vmatprep.subr.mxu0 0.0
        %854 = vmatpush2.msra.mxu0 0.0
        %855 = vmatprep.mubr.f32.mxu0 0.0
        %856 = vmatmul.mubr.f32.gmra.mxu0 %v786
        %v857 = vpop.f32.mrf.mxu0
        %v858 = vadd.f32 %v323, %v857
        %v859 = vpop.f32.mrf.mxu0
        %860 = vmatprep.mubr.f32.mxu0 0.0
        %861 = vmatmul.mubr.f32.gmra.mxu0 %v789
        %v862 = vpop.f32.mrf.mxu0
        %v863 = vadd.f32 %v323, %v862
        %v864 = vpop.f32.mrf.mxu0
        %865 = vdwg.mxu0
        %s866 = scalar_lea.vmem %s311, 80
        %v867 = vld [vmem:[%s866] sm:$0xff]
        %v868 = vld [vmem:[%s866 + $0x8] sm:$0xff]
        %v869 = vadd.f32 %v858, %v867
        %v870 = vadd.f32 %v863, %v868
        %s871 = scalar_lea.vmem %s306, 80 [#allocation3]
        %872 = vst.msk [vmem:[%s871] sm:$0xff] %vm411, %v869
        %873 = vst.msk [vmem:[%s871 + $0x8] sm:$0xff] %vm411, %v870
        %s874 = scalar_lea.vmem %s279, 96 [#allocation2]
        %v875 = vld [vmem:[%s874] sm:$0xff]
        %v876 = vld [vmem:[%s874 + $0x8] sm:$0xff]
        %v878 = vsel %vm325, %v875, 0
        %v881 = vsel %vm325, %v876, 0
        %883 = vmatprep.subr.mxu0 0.0
        %884 = vmatpush1.msra.mxu0 0.0
        %885 = vmatprep.subr.mxu0 0.0
        %886 = vmatpush1.msra.mxu0 0.0
        %887 = vmatprep.subr.mxu0 0.0
        %888 = vmatpush1.msra.mxu0 0.0
        %889 = vmatprep.subr.mxu0 0.0
        %890 = vmatpush1.msra.mxu0 0.0
        %891 = vmatprep.subr.mxu0 0.0
        %892 = vmatpush1.msra.mxu0 0.0
        %893 = vmatprep.subr.mxu0 0.0
        %894 = vmatpush1.msra.mxu0 0.0
        %895 = vmatprep.subr.mxu0 0.0
        %896 = vmatpush1.msra.mxu0 0.0
        %897 = vmatprep.subr.mxu0 0.0
        %898 = vmatpush1.msra.mxu0 0.0
        %899 = vmatprep.subr.mxu0 0.0
        %900 = vmatpush1.msra.mxu0 0.0
        %901 = vmatprep.subr.mxu0 0.0
        %902 = vmatpush1.msra.mxu0 0.0
        %903 = vmatprep.subr.mxu0 0.0
        %904 = vmatpush1.msra.mxu0 0.0
        %905 = vmatprep.subr.mxu0 0.0
        %906 = vmatpush1.msra.mxu0 0.0
        %907 = vmatprep.subr.mxu0 0.0
        %908 = vmatpush1.msra.mxu0 %v315
        %909 = vmatprep.subr.mxu0 0.0
        %910 = vmatpush1.msra.mxu0 %v314
        %911 = vmatprep.subr.mxu0 0.0
        %912 = vmatpush1.msra.mxu0 %v313
        %913 = vmatprep.subr.mxu0 0.0
        %914 = vmatpush1.msra.mxu0 %v312
        %915 = vmatprep.subr.mxu0 0.0
        %916 = vmatpush2.msra.mxu0 0.0
        %917 = vmatprep.subr.mxu0 0.0
        %918 = vmatpush2.msra.mxu0 0.0
        %919 = vmatprep.subr.mxu0 0.0
        %920 = vmatpush2.msra.mxu0 0.0
        %921 = vmatprep.subr.mxu0 0.0
        %922 = vmatpush2.msra.mxu0 0.0
        %923 = vmatprep.subr.mxu0 0.0
        %924 = vmatpush2.msra.mxu0 0.0
        %925 = vmatprep.subr.mxu0 0.0
        %926 = vmatpush2.msra.mxu0 0.0
        %927 = vmatprep.subr.mxu0 0.0
        %928 = vmatpush2.msra.mxu0 0.0
        %929 = vmatprep.subr.mxu0 0.0
        %930 = vmatpush2.msra.mxu0 0.0
        %931 = vmatprep.subr.mxu0 0.0
        %932 = vmatpush2.msra.mxu0 0.0
        %933 = vmatprep.subr.mxu0 0.0
        %934 = vmatpush2.msra.mxu0 0.0
        %935 = vmatprep.subr.mxu0 0.0
        %936 = vmatpush2.msra.mxu0 0.0
        %937 = vmatprep.subr.mxu0 0.0
        %938 = vmatpush2.msra.mxu0 0.0
        %939 = vmatprep.subr.mxu0 0.0
        %940 = vmatpush2.msra.mxu0 0.0
        %941 = vmatprep.subr.mxu0 0.0
        %942 = vmatpush2.msra.mxu0 0.0
        %943 = vmatprep.subr.mxu0 0.0
        %944 = vmatpush2.msra.mxu0 0.0
        %945 = vmatprep.subr.mxu0 0.0
        %946 = vmatpush2.msra.mxu0 0.0
        %947 = vmatprep.mubr.f32.mxu0 0.0
        %948 = vmatmul.mubr.f32.gmra.mxu0 %v878
        %v949 = vpop.f32.mrf.mxu0
        %v950 = vadd.f32 %v323, %v949
        %v951 = vpop.f32.mrf.mxu0
        %952 = vmatprep.mubr.f32.mxu0 0.0
        %953 = vmatmul.mubr.f32.gmra.mxu0 %v881
        %v954 = vpop.f32.mrf.mxu0
        %v955 = vadd.f32 %v323, %v954
        %v956 = vpop.f32.mrf.mxu0
        %957 = vdwg.mxu0
        %s958 = scalar_lea.vmem %s311, 96
        %v959 = vld [vmem:[%s958] sm:$0xff]
        %v960 = vld [vmem:[%s958 + $0x8] sm:$0xff]
        %v961 = vadd.f32 %v950, %v959
        %v962 = vadd.f32 %v955, %v960
        %s963 = scalar_lea.vmem %s306, 96 [#allocation3]
        %964 = vst.msk [vmem:[%s963] sm:$0xff] %vm411, %v961
        %965 = vst.msk [vmem:[%s963 + $0x8] sm:$0xff] %vm411, %v962
        %s966 = scalar_lea.vmem %s279, 112 [#allocation2]
        %v967 = vld [vmem:[%s966] sm:$0xff]
        %v968 = vld [vmem:[%s966 + $0x8] sm:$0xff]
        %v970 = vsel %vm325, %v967, 0
        %v973 = vsel %vm325, %v968, 0
        %975 = vmatprep.subr.mxu0 0.0
        %976 = vmatpush1.msra.mxu0 0.0
        %977 = vmatprep.subr.mxu0 0.0
        %978 = vmatpush1.msra.mxu0 0.0
        %979 = vmatprep.subr.mxu0 0.0
        %980 = vmatpush1.msra.mxu0 0.0
        %981 = vmatprep.subr.mxu0 0.0
        %982 = vmatpush1.msra.mxu0 0.0
        %983 = vmatprep.subr.mxu0 0.0
        %984 = vmatpush1.msra.mxu0 0.0
        %985 = vmatprep.subr.mxu0 0.0
        %986 = vmatpush1.msra.mxu0 0.0
        %987 = vmatprep.subr.mxu0 0.0
        %988 = vmatpush1.msra.mxu0 0.0
        %989 = vmatprep.subr.mxu0 0.0
        %990 = vmatpush1.msra.mxu0 0.0
        %991 = vmatprep.subr.mxu0 0.0
        %992 = vmatpush1.msra.mxu0 0.0
        %993 = vmatprep.subr.mxu0 0.0
        %994 = vmatpush1.msra.mxu0 0.0
        %995 = vmatprep.subr.mxu0 0.0
        %996 = vmatpush1.msra.mxu0 0.0
        %997 = vmatprep.subr.mxu0 0.0
        %998 = vmatpush1.msra.mxu0 0.0
        %999 = vmatprep.subr.mxu0 0.0
        %1000 = vmatpush1.msra.mxu0 %v315
        %1001 = vmatprep.subr.mxu0 0.0
        %1002 = vmatpush1.msra.mxu0 %v314
        %1003 = vmatprep.subr.mxu0 0.0
        %1004 = vmatpush1.msra.mxu0 %v313
        %1005 = vmatprep.subr.mxu0 0.0
        %1006 = vmatpush1.msra.mxu0 %v312
        %1007 = vmatprep.subr.mxu0 0.0
        %1008 = vmatpush2.msra.mxu0 0.0
        %1009 = vmatprep.subr.mxu0 0.0
        %1010 = vmatpush2.msra.mxu0 0.0
        %1011 = vmatprep.subr.mxu0 0.0
        %1012 = vmatpush2.msra.mxu0 0.0
        %1013 = vmatprep.subr.mxu0 0.0
        %1014 = vmatpush2.msra.mxu0 0.0
        %1015 = vmatprep.subr.mxu0 0.0
        %1016 = vmatpush2.msra.mxu0 0.0
        %1017 = vmatprep.subr.mxu0 0.0
        %1018 = vmatpush2.msra.mxu0 0.0
        %1019 = vmatprep.subr.mxu0 0.0
        %1020 = vmatpush2.msra.mxu0 0.0
        %1021 = vmatprep.subr.mxu0 0.0
        %1022 = vmatpush2.msra.mxu0 0.0
        %1023 = vmatprep.subr.mxu0 0.0
        %1024 = vmatpush2.msra.mxu0 0.0
        %1025 = vmatprep.subr.mxu0 0.0
        %1026 = vmatpush2.msra.mxu0 0.0
        %1027 = vmatprep.subr.mxu0 0.0
        %1028 = vmatpush2.msra.mxu0 0.0
        %1029 = vmatprep.subr.mxu0 0.0
        %1030 = vmatpush2.msra.mxu0 0.0
        %1031 = vmatprep.subr.mxu0 0.0
        %1032 = vmatpush2.msra.mxu0 0.0
        %1033 = vmatprep.subr.mxu0 0.0
        %1034 = vmatpush2.msra.mxu0 0.0
        %1035 = vmatprep.subr.mxu0 0.0
        %1036 = vmatpush2.msra.mxu0 0.0
        %1037 = vmatprep.subr.mxu0 0.0
        %1038 = vmatpush2.msra.mxu0 0.0
        %1039 = vmatprep.mubr.f32.mxu0 0.0
        %1040 = vmatmul.mubr.f32.gmra.mxu0 %v970
        %v1041 = vpop.f32.mrf.mxu0
        %v1042 = vadd.f32 %v323, %v1041
        %v1043 = vpop.f32.mrf.mxu0
        %1044 = vmatprep.mubr.f32.mxu0 0.0
        %1045 = vmatmul.mubr.f32.gmra.mxu0 %v973
        %v1046 = vpop.f32.mrf.mxu0
        %v1047 = vadd.f32 %v323, %v1046
        %v1048 = vpop.f32.mrf.mxu0
        %1049 = vdwg.mxu0
        %s1050 = scalar_lea.vmem %s311, 112
        %v1051 = vld [vmem:[%s1050] sm:$0xff]
        %v1052 = vld [vmem:[%s1050 + $0x8] sm:$0xff]
        %v1053 = vadd.f32 %v1042, %v1051
        %v1054 = vadd.f32 %v1047, %v1052
        %s1055 = scalar_lea.vmem %s306, 112 [#allocation3]
        %1056 = vst.msk [vmem:[%s1055] sm:$0xff] %vm411, %v1053
        %1057 = vst.msk [vmem:[%s1055 + $0x8] sm:$0xff] %vm411, %v1054
        %s1058 = sand.u32 %s120, 1
        %s1059 = scalar_lea.sflag [#allocation4], %s1058
        %s1060 = sand.u32 %s120, 1
        %s1061 = smul.addr %s1060, 128
        %s1062 = scalar_lea.vmem [#allocation3], %s1061
        // Predicated region
        $region75: #{gridnet_block_forward_pallas.9} parent=69 // pred_check
          %p1063 = pneg %p130
        $region76: #{gridnet_block_forward_pallas.9} parent=69 // pred_check_branch
          %1065 = sbr.rel (%p1063) target = $region78
        $region77: #{gridnet_block_forward_pallas.9} parent=69 // pred_region
          %s1067 = ssub.s32 2048, 2048
          %1068 = vsyncadd %s1059, %s1067
          %s1069 = smul.addr %s18, 16
          %s1070 = smul.addr %s1069, 128
          %s1071 = scalar_lea.hbm %s4, %s1070
          %s1072 = sshll.u32 %s1062, 4
          %s1073 = int_to_ptr.vmem [resolvable:$true] %s1072
          %1078 = dma.vmem_to_hbm [thread:$0]  %s1073, 2048, %s1071, %s1059, 128, 128, 8
        $region78: #{gridnet_block_forward_pallas.9} parent=69 // pred_fallthru
          _
      $region70: #{gridnet_block_forward_pallas.9} parent=5 // pred_fallthru
        _
      %p1079 = scmp.le.s32.totalorder 2, %s13
      // Predicated region
      $region79: #{gridnet_block_forward_pallas.9} parent=5 // pred_check
        %p1080 = pneg %p1079
      $region80: #{gridnet_block_forward_pallas.9} parent=5 // pred_check_branch
        %1082 = sbr.rel (%p1080) target = $region82
      $region81: #{gridnet_block_forward_pallas.9} parent=5 // pred_region
        %s1083 = ssub.s32 %s13, 2
        // Predicated region
        $region83: #{gridnet_block_forward_pallas.9} parent=81 // pred_check
          %p1084 = pneg %p136
        $region84: #{gridnet_block_forward_pallas.9} parent=81 // pred_check_branch
          %1086 = sbr.rel (%p1084) target = $region86
        $region85: #{gridnet_block_forward_pallas.9} parent=81 // pred_region
          %s1087 = sand.u32 %s121, 1
          %s1088 = scalar_lea.sflag [#allocation4], %s1087
          %s1089 = sand.u32 %s121, 1
          %s1090 = smul.addr %s1089, 128
          %s1091 = scalar_lea.vmem [#allocation3], %s1090
          %1092 = dma.done %s1088, 2048
        $region86: #{gridnet_block_forward_pallas.9} parent=81 // pred_fallthru
          _
      $region82: #{gridnet_block_forward_pallas.9} parent=5 // pred_fallthru
        _
    $region6: #{gridnet_block_forward_pallas.9} parent=1 // loop_footer
      %s17 = sadd.s32 1, %s13
    $region7: #{gridnet_block_forward_pallas.9} parent=1 // loop_footer_branch
      %12 = sbr.rel target = $region3
    $region8: #{gridnet_block_forward_pallas.9} parent=1 // loop_exit
      _
    %1093 = vsyncpa [#allocation4], 1
    %s1094 = scalar_lea.sflag [#allocation4], 1
    %1095 = vsyncpa %s1094, 1

</llo_original>
